<compile_context>
chip_gen: v6e
topology: v6e:2x2x1
jax: 0.10.0
libtpu: 0.0.40
codegen_flags: <defaults>
</compile_context>

<pallas_src>
import functools

import jax
import jax.numpy as jnp
from jax.experimental import pallas as pl
from jax.experimental.pallas import tpu as pltpu

# ----------------------------- config ---------------------------------------
CFG = dict(
    vocab_size=256,
    context_length=8,
    emb_dim=32,
    n_heads=2,
    head_dim=16,
    mlp_hidd_dim=64,
    n_layers=2,
    drop_rate=0.0,     # identity dropout (eval semantics)
    qkv_bias=False,
    verbose=False,
)


# ----------------------------- kernel ---------------------------------------
def _layernorm(x, g, b, eps=1e-5):
    # x: (N, C); g, b: (1, C). unbiased=False variance, matches torch LayerNorm.
    mean = jnp.mean(x, axis=-1, keepdims=True)
    var = jnp.mean((x - mean) ** 2, axis=-1, keepdims=True)
    return g * ((x - mean) * jax.lax.rsqrt(var + eps)) + b


def gpt_kernel(x_ref,                               # (B*T, C)
               ln1_g_ref, ln1_b_ref,                # (L, 1, C)
               wqkv_ref,                            # (L, C, 3*H*hd)
               wo_ref, bo_ref,                      # (L, H*hd, C), (L, 1, C)
               ln2_g_ref, ln2_b_ref,                # (L, 1, C)
               w1_ref, b1_ref,                      # (L, C, M), (L, 1, M)
               w2_ref, b2_ref,                      # (L, M, C), (L, 1, C)
               lnf_g_ref, lnf_b_ref,                # (1, C)
               wout_ref,                            # (C, V)
               o_ref,                               # (B*T, V)
               ctx_ref,                             # scratch (B*T, H*hd) f32
               *, n_layers, n_heads, head_dim, batch, seq):
    f32 = jnp.float32
    T = seq
    HD = n_heads * head_dim

    x = x_ref[...].astype(f32)                      # (B*T, C)

    # Causal mask (True above the diagonal), built once and reused everywhere.
    row = jax.lax.broadcasted_iota(jnp.int32, (T, T), 0)
    col = jax.lax.broadcasted_iota(jnp.int32, (T, T), 1)
    causal = col > row
    neg_inf = jnp.float32(-jnp.inf)
    scale = jnp.float32(1.0 / (head_dim ** 0.5))
    inv_sqrt2 = jnp.float32(0.7071067811865476)

    for l in range(n_layers):                       # static unroll over layers
        # ---------------- attention branch ----------------
        h = _layernorm(x, ln1_g_ref[l], ln1_b_ref[l])
        qkv = jnp.dot(h, wqkv_ref[l], preferred_element_type=f32)   # (B*T, 3*HD)
        q = qkv[:, 0 * HD:1 * HD] * scale            # scale folded into q once
        k = qkv[:, 1 * HD:2 * HD]
        v = qkv[:, 2 * HD:3 * HD]

        for b in range(batch):                       # static: tiny B
            r0, r1 = b * T, (b + 1) * T
            for hh in range(n_heads):                # static: tiny H
                c0, c1 = hh * head_dim, (hh + 1) * head_dim
                qs = q[r0:r1, c0:c1]                 # (T, hd)
                ks = k[r0:r1, c0:c1]
                vs = v[r0:r1, c0:c1]
                s = jnp.dot(qs, ks.T, preferred_element_type=f32)    # (T, T)
                s = jnp.where(causal, neg_inf, s)
                s = s - jnp.max(s, axis=-1, keepdims=True)
                p = jnp.exp(s)
                denom = jnp.sum(p, axis=-1, keepdims=True)
                p = p * pl.reciprocal(denom, approx=True)            # EUP divide
                ctx_ref[r0:r1, c0:c1] = jnp.dot(p, vs,
                                                preferred_element_type=f32)

        attn = jnp.dot(ctx_ref[...], wo_ref[l],
                       preferred_element_type=f32) + bo_ref[l]
        x = x + attn                                  # residual (dropout = identity)

        # ---------------- MLP branch ----------------
        h2 = _layernorm(x, ln2_g_ref[l], ln2_b_ref[l])
        m = jnp.dot(h2, w1_ref[l], preferred_element_type=f32) + b1_ref[l]
        # exact GELU (erf form), same as torch.nn.GELU() default
        m = 0.5 * m * (1.0 + jax.lax.erf(m * inv_sqrt2))
        m = jnp.dot(m, w2_ref[l], preferred_element_type=f32) + b2_ref[l]
        x = x + m                                     # residual (dropout = identity)

    # ---------------- final LayerNorm + LM head ----------------
    hf = _layernorm(x, lnf_g_ref[...], lnf_b_ref[...])
    # Only HBM store: lane-dense (B*T, V) with V = 256 (multiple of 128).
    o_ref[...] = jnp.dot(hf, wout_ref[...],
                         preferred_element_type=f32).astype(o_ref.dtype)


# ----------------------------- wrapper ---------------------------------------
def _full_spec(shape):
    n = len(shape)
    return pl.BlockSpec(shape, lambda i, _n=n: (0,) * _n)


def gpt_forward(token_ids, params, cfg):
    # token_ids: (B, T) int32
    B, T = token_ids.shape
    C, V = cfg["emb_dim"], cfg["vocab_size"]
    H, hd, M, L = cfg["n_heads"], cfg["head_dim"], cfg["mlp_hidd_dim"], cfg["n_layers"]
    HD = H * hd

    # TODO(synk): token/position embedding gather stays in plain JAX (data-dependent
    # HBM gather is glue, not worth an in-kernel DMA gather at this size).
    tok = jnp.take(params["tok_emb"], token_ids, axis=0)        # (B, T, C)
    pos = params["pos_emb"][:T][None, :, :]                      # (1, T, C)
    x = (tok + pos).reshape(B * T, C)                            # drop_emb = identity

    kernel = functools.partial(
        gpt_kernel, n_layers=L, n_heads=H, head_dim=hd, batch=B, seq=T)

    args = (
        x,
        params["ln1_g"], params["ln1_b"],
        params["wqkv"],
        params["wo"], params["bo"],
        params["ln2_g"], params["ln2_b"],
        params["w1"], params["b1"],
        params["w2"], params["b2"],
        params["ln_f_g"], params["ln_f_b"],
        params["w_out"],
    )
    in_specs = [_full_spec(a.shape) for a in args]

    fn = pl.pallas_call(
        kernel,
        out_shape=jax.ShapeDtypeStruct((B * T, V), jnp.float32),
        grid=(1,),                                   # whole batch in one step
        in_specs=in_specs,
        out_specs=_full_spec((B * T, V)),
        scratch_shapes=[pltpu.VMEM((B * T, HD), jnp.float32)],   # ctx scratch
        compiler_params=pltpu.CompilerParams(
            dimension_semantics=("arbitrary",)),
    )
    logits = fn(*args)
    return logits.reshape(B, T, V)


# ----------------------------- parameters -------------------------------------
def init_params(cfg, key):
    C, H, hd = cfg["emb_dim"], cfg["n_heads"], cfg["head_dim"]
    M, V, L = cfg["mlp_hidd_dim"], cfg["vocab_size"], cfg["n_layers"]
    HD = H * hd

    def nrm(k, shape, std=0.02):
        return (std * jax.random.normal(k, shape)).astype(jnp.float32)

    keys = iter(jax.random.split(key, 16))
    params = dict(
        tok_emb=nrm(next(keys), (V, C)),
        pos_emb=nrm(next(keys), (cfg["context_length"], C)),
        # per-layer parameters stacked along a leading layer axis
        ln1_g=jnp.ones((L, 1, C), jnp.float32),
        ln1_b=jnp.zeros((L, 1, C), jnp.float32),
        wqkv=nrm(next(keys), (L, C, 3 * HD)),        # fused [Wq | Wk | Wv]
        wo=nrm(next(keys), (L, HD, C)),
        bo=jnp.zeros((L, 1, C), jnp.float32),
        ln2_g=jnp.ones((L, 1, C), jnp.float32),
        ln2_b=jnp.zeros((L, 1, C), jnp.float32),
        w1=nrm(next(keys), (L, C, M)),
        b1=jnp.zeros((L, 1, M), jnp.float32),
        w2=nrm(next(keys), (L, M, C)),
        b2=jnp.zeros((L, 1, C), jnp.float32),
        # final norm + LM head
        ln_f_g=jnp.ones((1, C), jnp.float32),
        ln_f_b=jnp.zeros((1, C), jnp.float32),
        w_out=nrm(next(keys), (C, V)),
    )
    return params


# ----------------------------- main -------------------------------------------
if __name__ == "__main__":
    key = jax.random.PRNGKey(0)
    pkey, dkey = jax.random.split(key)
    params = init_params(CFG, pkey)

    B, T = 2, CFG["context_length"]
    token_ids = jax.random.randint(dkey, (B, T), 0, CFG["vocab_size"], dtype=jnp.int32)

    logits = gpt_forward(token_ids, params, CFG)
    logits = jax.block_until_ready(logits)
    assert logits.shape == (B, T, CFG["vocab_size"])
    assert bool(jnp.all(jnp.isfinite(logits)))
    print("KERNEL_OK")
</pallas_src>

<mosaic_0001>
module attributes {stable_mosaic.version = 11 : i64} {
  func.func @gpt_kernel(%arg0: i32, %arg1: memref<16x32xf32, #tpu.memory_space<vmem>>, %arg2: memref<2x1x32xf32, #tpu.memory_space<vmem>>, %arg3: memref<2x1x32xf32, #tpu.memory_space<vmem>>, %arg4: memref<2x32x96xf32, #tpu.memory_space<vmem>>, %arg5: memref<2x32x32xf32, #tpu.memory_space<vmem>>, %arg6: memref<2x1x32xf32, #tpu.memory_space<vmem>>, %arg7: memref<2x1x32xf32, #tpu.memory_space<vmem>>, %arg8: memref<2x1x32xf32, #tpu.memory_space<vmem>>, %arg9: memref<2x32x64xf32, #tpu.memory_space<vmem>>, %arg10: memref<2x1x64xf32, #tpu.memory_space<vmem>>, %arg11: memref<2x64x32xf32, #tpu.memory_space<vmem>>, %arg12: memref<2x1x32xf32, #tpu.memory_space<vmem>>, %arg13: memref<1x32xf32, #tpu.memory_space<vmem>>, %arg14: memref<1x32xf32, #tpu.memory_space<vmem>>, %arg15: memref<32x256xf32, #tpu.memory_space<vmem>>, %arg16: memref<16x256xf32, #tpu.memory_space<vmem>>, %arg17: memref<16x32xf32, #tpu.memory_space<vmem>>) attributes {dimension_semantics = [#tpu.dimension_semantics<arbitrary>], iteration_bounds = array<i64: 1>, scalar_prefetch = 0 : i64, scratch_operands = 1 : i64, tpu.core_type = #tpu.core_type<tc>, window_params = [{pipeline_mode = #tpu.pipeline_mode<synchronous>, transform_indices = @transform_0, window_bounds = array<i64: 16, 32>}, {pipeline_mode = #tpu.pipeline_mode<synchronous>, transform_indices = @transform_1, window_bounds = array<i64: 2, 1, 32>}, {pipeline_mode = #tpu.pipeline_mode<synchronous>, transform_indices = @transform_2, window_bounds = array<i64: 2, 1, 32>}, {pipeline_mode = #tpu.pipeline_mode<synchronous>, transform_indices = @transform_3, window_bounds = array<i64: 2, 32, 96>}, {pipeline_mode = #tpu.pipeline_mode<synchronous>, transform_indices = @transform_4, window_bounds = array<i64: 2, 32, 32>}, {pipeline_mode = #tpu.pipeline_mode<synchronous>, transform_indices = @transform_5, window_bounds = array<i64: 2, 1, 32>}, {pipeline_mode = #tpu.pipeline_mode<synchronous>, transform_indices = @transform_6, window_bounds = array<i64: 2, 1, 32>}, {pipeline_mode = #tpu.pipeline_mode<synchronous>, transform_indices = @transform_7, window_bounds = array<i64: 2, 1, 32>}, {pipeline_mode = #tpu.pipeline_mode<synchronous>, transform_indices = @transform_8, window_bounds = array<i64: 2, 32, 64>}, {pipeline_mode = #tpu.pipeline_mode<synchronous>, transform_indices = @transform_9, window_bounds = array<i64: 2, 1, 64>}, {pipeline_mode = #tpu.pipeline_mode<synchronous>, transform_indices = @transform_10, window_bounds = array<i64: 2, 64, 32>}, {pipeline_mode = #tpu.pipeline_mode<synchronous>, transform_indices = @transform_11, window_bounds = array<i64: 2, 1, 32>}, {pipeline_mode = #tpu.pipeline_mode<synchronous>, transform_indices = @transform_12, window_bounds = array<i64: 1, 32>}, {pipeline_mode = #tpu.pipeline_mode<synchronous>, transform_indices = @transform_13, window_bounds = array<i64: 1, 32>}, {pipeline_mode = #tpu.pipeline_mode<synchronous>, transform_indices = @transform_14, window_bounds = array<i64: 32, 256>}, {pipeline_mode = #tpu.pipeline_mode<synchronous>, transform_indices = @transform_15, window_bounds = array<i64: 16, 256>}]} {
    %c0 = arith.constant 0 : index
    %c0_0 = arith.constant 0 : index
    %0 = vector.load %arg1[%c0, %c0_0] : memref<16x32xf32, #tpu.memory_space<vmem>>, vector<16x32xf32>
    %1 = tpu.iota {dimensions = array<i32: 0>} : vector<8x8xi32>
    %2 = tpu.iota {dimensions = array<i32: 1>} : vector<8x8xi32>
    %3 = arith.cmpi sgt, %2, %1 : vector<8x8xi32>
    %c0_1 = arith.constant 0 : index
    %c0_2 = arith.constant 0 : index
    %c0_3 = arith.constant 0 : index
    %4 = vector.load %arg2[%c0_1, %c0_2, %c0_3] : memref<2x1x32xf32, #tpu.memory_space<vmem>>, vector<1x1x32xf32>
    %5 = vector.shape_cast %4 : vector<1x1x32xf32> to vector<1x32xf32>
    %c0_4 = arith.constant 0 : index
    %c0_5 = arith.constant 0 : index
    %c0_6 = arith.constant 0 : index
    %6 = vector.load %arg3[%c0_4, %c0_5, %c0_6] : memref<2x1x32xf32, #tpu.memory_space<vmem>>, vector<1x1x32xf32>
    %7 = vector.shape_cast %6 : vector<1x1x32xf32> to vector<1x32xf32>
    %cst = arith.constant dense<0.000000e+00> : vector<16xf32>
    %8 = vector.multi_reduction <add>, %0, %cst [1] : vector<16x32xf32> to vector<16xf32>
    %9 = vector.shape_cast %8 : vector<16xf32> to vector<16x1xf32>
    %cst_7 = arith.constant 3.200000e+01 : f32
    %10 = vector.broadcast %cst_7 : f32 to vector<16x1xf32>
    %11 = arith.divf %9, %10 : vector<16x1xf32>
    %12 = vector.broadcast %11 : vector<16x1xf32> to vector<16x32xf32>
    %13 = arith.subf %0, %12 : vector<16x32xf32>
    %14 = arith.mulf %13, %13 : vector<16x32xf32>
    %cst_8 = arith.constant dense<0.000000e+00> : vector<16xf32>
    %15 = vector.multi_reduction <add>, %14, %cst_8 [1] : vector<16x32xf32> to vector<16xf32>
    %16 = vector.shape_cast %15 : vector<16xf32> to vector<16x1xf32>
    %cst_9 = arith.constant 3.200000e+01 : f32
    %17 = vector.broadcast %cst_9 : f32 to vector<16x1xf32>
    %18 = arith.divf %16, %17 : vector<16x1xf32>
    %19 = vector.broadcast %11 : vector<16x1xf32> to vector<16x32xf32>
    %20 = arith.subf %0, %19 : vector<16x32xf32>
    %cst_10 = arith.constant 9.99999974E-6 : f32
    %21 = vector.broadcast %cst_10 : f32 to vector<16x1xf32>
    %22 = arith.addf %18, %21 : vector<16x1xf32>
    %23 = math.rsqrt %22 : vector<16x1xf32>
    %24 = vector.broadcast %23 : vector<16x1xf32> to vector<16x32xf32>
    %25 = arith.mulf %20, %24 : vector<16x32xf32>
    %26 = vector.broadcast %5 : vector<1x32xf32> to vector<16x32xf32>
    %27 = arith.mulf %26, %25 : vector<16x32xf32>
    %28 = vector.broadcast %7 : vector<1x32xf32> to vector<16x32xf32>
    %29 = arith.addf %27, %28 : vector<16x32xf32>
    %c0_11 = arith.constant 0 : index
    %c0_12 = arith.constant 0 : index
    %c0_13 = arith.constant 0 : index
    %30 = vector.load %arg4[%c0_11, %c0_12, %c0_13] : memref<2x32x96xf32, #tpu.memory_space<vmem>>, vector<1x32x96xf32>
    %31 = vector.shape_cast %30 : vector<1x32x96xf32> to vector<32x96xf32>
    %cst_14 = arith.constant dense<0.000000e+00> : vector<16x96xf32>
    %32 = tpu.matmul %29, %31, %cst_14 {dimension_numbers = #tpu.dot_dimension_numbers<[1], [0], [0], [1], [0, 0, 1, 1], [], []>} : vector<16x32xf32>, vector<32x96xf32>, vector<16x96xf32> -> vector<16x96xf32>
    %33 = vector.extract_strided_slice %32 {offsets = [0, 0], sizes = [16, 32], strides = [1, 1]} : vector<16x96xf32> to vector<16x32xf32>
    %cst_15 = arith.constant 2.500000e-01 : f32
    %34 = vector.broadcast %cst_15 : f32 to vector<16x32xf32>
    %35 = arith.mulf %33, %34 : vector<16x32xf32>
    %36 = vector.extract_strided_slice %32 {offsets = [0, 32], sizes = [16, 32], strides = [1, 1]} : vector<16x96xf32> to vector<16x32xf32>
    %37 = vector.extract_strided_slice %32 {offsets = [0, 64], sizes = [16, 32], strides = [1, 1]} : vector<16x96xf32> to vector<16x32xf32>
    %38 = vector.extract_strided_slice %35 {offsets = [0, 0], sizes = [8, 16], strides = [1, 1]} : vector<16x32xf32> to vector<8x16xf32>
    %39 = vector.extract_strided_slice %36 {offsets = [0, 0], sizes = [8, 16], strides = [1, 1]} : vector<16x32xf32> to vector<8x16xf32>
    %40 = vector.extract_strided_slice %37 {offsets = [0, 0], sizes = [8, 16], strides = [1, 1]} : vector<16x32xf32> to vector<8x16xf32>
    %41 = tpu.transpose %39, [1, 0] : vector<8x16xf32> -> vector<16x8xf32>
    %cst_16 = arith.constant dense<0.000000e+00> : vector<8x8xf32>
    %42 = tpu.matmul %38, %41, %cst_16 {dimension_numbers = #tpu.dot_dimension_numbers<[1], [0], [0], [1], [0, 0, 1, 1], [], []>} : vector<8x16xf32>, vector<16x8xf32>, vector<8x8xf32> -> vector<8x8xf32>
    %cst_17 = arith.constant 0xFF800000 : f32
    %43 = vector.broadcast %cst_17 : f32 to vector<8x8xf32>
    %44 = arith.select %3, %43, %42 : vector<8x8xi1>, vector<8x8xf32>
    %cst_18 = arith.constant dense<0xFF800000> : vector<8xf32>
    %45 = vector.multi_reduction <maximumf>, %44, %cst_18 [1] : vector<8x8xf32> to vector<8xf32>
    %46 = vector.shape_cast %45 : vector<8xf32> to vector<8x1xf32>
    %47 = vector.broadcast %46 : vector<8x1xf32> to vector<8x8xf32>
    %48 = arith.subf %44, %47 : vector<8x8xf32>
    %49 = math.exp %48 : vector<8x8xf32>
    %cst_19 = arith.constant dense<0.000000e+00> : vector<8xf32>
    %50 = vector.multi_reduction <add>, %49, %cst_19 [1] : vector<8x8xf32> to vector<8xf32>
    %51 = vector.shape_cast %50 : vector<8xf32> to vector<8x1xf32>
    %52 = tpu.reciprocal %51 {approx = true} : vector<8x1xf32> -> vector<8x1xf32>
    %53 = vector.broadcast %52 : vector<8x1xf32> to vector<8x8xf32>
    %54 = arith.mulf %49, %53 : vector<8x8xf32>
    %cst_20 = arith.constant dense<0.000000e+00> : vector<8x16xf32>
    %55 = tpu.matmul %54, %40, %cst_20 {dimension_numbers = #tpu.dot_dimension_numbers<[1], [0], [0], [1], [0, 0, 1, 1], [], []>} : vector<8x8xf32>, vector<8x16xf32>, vector<8x16xf32> -> vector<8x16xf32>
    %c0_21 = arith.constant 0 : index
    %c0_22 = arith.constant 0 : index
    %56 = vector.load %arg17[%c0_21, %c0_22] : memref<16x32xf32, #tpu.memory_space<vmem>>, vector<8x16xf32>
    tpu.vector_store %arg17[%c0_21, %c0_22], %55 {strides = array<i32>} : memref<16x32xf32, #tpu.memory_space<vmem>>, vector<8x16xf32>,
    %57 = vector.extract_strided_slice %35 {offsets = [0, 16], sizes = [8, 16], strides = [1, 1]} : vector<16x32xf32> to vector<8x16xf32>
    %58 = vector.extract_strided_slice %36 {offsets = [0, 16], sizes = [8, 16], strides = [1, 1]} : vector<16x32xf32> to vector<8x16xf32>
    %59 = vector.extract_strided_slice %37 {offsets = [0, 16], sizes = [8, 16], strides = [1, 1]} : vector<16x32xf32> to vector<8x16xf32>
    %60 = tpu.transpose %58, [1, 0] : vector<8x16xf32> -> vector<16x8xf32>
    %cst_23 = arith.constant dense<0.000000e+00> : vector<8x8xf32>
    %61 = tpu.matmul %57, %60, %cst_23 {dimension_numbers = #tpu.dot_dimension_numbers<[1], [0], [0], [1], [0, 0, 1, 1], [], []>} : vector<8x16xf32>, vector<16x8xf32>, vector<8x8xf32> -> vector<8x8xf32>
    %cst_24 = arith.constant 0xFF800000 : f32
    %62 = vector.broadcast %cst_24 : f32 to vector<8x8xf32>
    %63 = arith.select %3, %62, %61 : vector<8x8xi1>, vector<8x8xf32>
    %cst_25 = arith.constant dense<0xFF800000> : vector<8xf32>
    %64 = vector.multi_reduction <maximumf>, %63, %cst_25 [1] : vector<8x8xf32> to vector<8xf32>
    %65 = vector.shape_cast %64 : vector<8xf32> to vector<8x1xf32>
    %66 = vector.broadcast %65 : vector<8x1xf32> to vector<8x8xf32>
    %67 = arith.subf %63, %66 : vector<8x8xf32>
    %68 = math.exp %67 : vector<8x8xf32>
    %cst_26 = arith.constant dense<0.000000e+00> : vector<8xf32>
    %69 = vector.multi_reduction <add>, %68, %cst_26 [1] : vector<8x8xf32> to vector<8xf32>
    %70 = vector.shape_cast %69 : vector<8xf32> to vector<8x1xf32>
    %71 = tpu.reciprocal %70 {approx = true} : vector<8x1xf32> -> vector<8x1xf32>
    %72 = vector.broadcast %71 : vector<8x1xf32> to vector<8x8xf32>
    %73 = arith.mulf %68, %72 : vector<8x8xf32>
    %cst_27 = arith.constant dense<0.000000e+00> : vector<8x16xf32>
    %74 = tpu.matmul %73, %59, %cst_27 {dimension_numbers = #tpu.dot_dimension_numbers<[1], [0], [0], [1], [0, 0, 1, 1], [], []>} : vector<8x8xf32>, vector<8x16xf32>, vector<8x16xf32> -> vector<8x16xf32>
    %c0_28 = arith.constant 0 : index
    %c16 = arith.constant 16 : index
    %75 = vector.load %arg17[%c0_28, %c16] : memref<16x32xf32, #tpu.memory_space<vmem>>, vector<8x16xf32>
    tpu.vector_store %arg17[%c0_28, %c16], %74 {strides = array<i32>} : memref<16x32xf32, #tpu.memory_space<vmem>>, vector<8x16xf32>,
    %76 = vector.extract_strided_slice %35 {offsets = [8, 0], sizes = [8, 16], strides = [1, 1]} : vector<16x32xf32> to vector<8x16xf32>
    %77 = vector.extract_strided_slice %36 {offsets = [8, 0], sizes = [8, 16], strides = [1, 1]} : vector<16x32xf32> to vector<8x16xf32>
    %78 = vector.extract_strided_slice %37 {offsets = [8, 0], sizes = [8, 16], strides = [1, 1]} : vector<16x32xf32> to vector<8x16xf32>
    %79 = tpu.transpose %77, [1, 0] : vector<8x16xf32> -> vector<16x8xf32>
    %cst_29 = arith.constant dense<0.000000e+00> : vector<8x8xf32>
    %80 = tpu.matmul %76, %79, %cst_29 {dimension_numbers = #tpu.dot_dimension_numbers<[1], [0], [0], [1], [0, 0, 1, 1], [], []>} : vector<8x16xf32>, vector<16x8xf32>, vector<8x8xf32> -> vector<8x8xf32>
    %cst_30 = arith.constant 0xFF800000 : f32
    %81 = vector.broadcast %cst_30 : f32 to vector<8x8xf32>
    %82 = arith.select %3, %81, %80 : vector<8x8xi1>, vector<8x8xf32>
    %cst_31 = arith.constant dense<0xFF800000> : vector<8xf32>
    %83 = vector.multi_reduction <maximumf>, %82, %cst_31 [1] : vector<8x8xf32> to vector<8xf32>
    %84 = vector.shape_cast %83 : vector<8xf32> to vector<8x1xf32>
    %85 = vector.broadcast %84 : vector<8x1xf32> to vector<8x8xf32>
    %86 = arith.subf %82, %85 : vector<8x8xf32>
    %87 = math.exp %86 : vector<8x8xf32>
    %cst_32 = arith.constant dense<0.000000e+00> : vector<8xf32>
    %88 = vector.multi_reduction <add>, %87, %cst_32 [1] : vector<8x8xf32> to vector<8xf32>
    %89 = vector.shape_cast %88 : vector<8xf32> to vector<8x1xf32>
    %90 = tpu.reciprocal %89 {approx = true} : vector<8x1xf32> -> vector<8x1xf32>
    %91 = vector.broadcast %90 : vector<8x1xf32> to vector<8x8xf32>
    %92 = arith.mulf %87, %91 : vector<8x8xf32>
    %cst_33 = arith.constant dense<0.000000e+00> : vector<8x16xf32>
    %93 = tpu.matmul %92, %78, %cst_33 {dimension_numbers = #tpu.dot_dimension_numbers<[1], [0], [0], [1], [0, 0, 1, 1], [], []>} : vector<8x8xf32>, vector<8x16xf32>, vector<8x16xf32> -> vector<8x16xf32>
    %c8 = arith.constant 8 : index
    %c0_34 = arith.constant 0 : index
    %94 = vector.load %arg17[%c8, %c0_34] : memref<16x32xf32, #tpu.memory_space<vmem>>, vector<8x16xf32>
    tpu.vector_store %arg17[%c8, %c0_34], %93 {strides = array<i32>} : memref<16x32xf32, #tpu.memory_space<vmem>>, vector<8x16xf32>,
    %95 = vector.extract_strided_slice %35 {offsets = [8, 16], sizes = [8, 16], strides = [1, 1]} : vector<16x32xf32> to vector<8x16xf32>
    %96 = vector.extract_strided_slice %36 {offsets = [8, 16], sizes = [8, 16], strides = [1, 1]} : vector<16x32xf32> to vector<8x16xf32>
    %97 = vector.extract_strided_slice %37 {offsets = [8, 16], sizes = [8, 16], strides = [1, 1]} : vector<16x32xf32> to vector<8x16xf32>
    %98 = tpu.transpose %96, [1, 0] : vector<8x16xf32> -> vector<16x8xf32>
    %cst_35 = arith.constant dense<0.000000e+00> : vector<8x8xf32>
    %99 = tpu.matmul %95, %98, %cst_35 {dimension_numbers = #tpu.dot_dimension_numbers<[1], [0], [0], [1], [0, 0, 1, 1], [], []>} : vector<8x16xf32>, vector<16x8xf32>, vector<8x8xf32> -> vector<8x8xf32>
    %cst_36 = arith.constant 0xFF800000 : f32
    %100 = vector.broadcast %cst_36 : f32 to vector<8x8xf32>
    %101 = arith.select %3, %100, %99 : vector<8x8xi1>, vector<8x8xf32>
    %cst_37 = arith.constant dense<0xFF800000> : vector<8xf32>
    %102 = vector.multi_reduction <maximumf>, %101, %cst_37 [1] : vector<8x8xf32> to vector<8xf32>
    %103 = vector.shape_cast %102 : vector<8xf32> to vector<8x1xf32>
    %104 = vector.broadcast %103 : vector<8x1xf32> to vector<8x8xf32>
    %105 = arith.subf %101, %104 : vector<8x8xf32>
    %106 = math.exp %105 : vector<8x8xf32>
    %cst_38 = arith.constant dense<0.000000e+00> : vector<8xf32>
    %107 = vector.multi_reduction <add>, %106, %cst_38 [1] : vector<8x8xf32> to vector<8xf32>
    %108 = vector.shape_cast %107 : vector<8xf32> to vector<8x1xf32>
    %109 = tpu.reciprocal %108 {approx = true} : vector<8x1xf32> -> vector<8x1xf32>
    %110 = vector.broadcast %109 : vector<8x1xf32> to vector<8x8xf32>
    %111 = arith.mulf %106, %110 : vector<8x8xf32>
    %cst_39 = arith.constant dense<0.000000e+00> : vector<8x16xf32>
    %112 = tpu.matmul %111, %97, %cst_39 {dimension_numbers = #tpu.dot_dimension_numbers<[1], [0], [0], [1], [0, 0, 1, 1], [], []>} : vector<8x8xf32>, vector<8x16xf32>, vector<8x16xf32> -> vector<8x16xf32>
    %c8_40 = arith.constant 8 : index
    %c16_41 = arith.constant 16 : index
    %113 = vector.load %arg17[%c8_40, %c16_41] : memref<16x32xf32, #tpu.memory_space<vmem>>, vector<8x16xf32>
    tpu.vector_store %arg17[%c8_40, %c16_41], %112 {strides = array<i32>} : memref<16x32xf32, #tpu.memory_space<vmem>>, vector<8x16xf32>,
    %c0_42 = arith.constant 0 : index
    %c0_43 = arith.constant 0 : index
    %114 = vector.load %arg17[%c0_42, %c0_43] : memref<16x32xf32, #tpu.memory_space<vmem>>, vector<16x32xf32>
    %c0_44 = arith.constant 0 : index
    %c0_45 = arith.constant 0 : index
    %c0_46 = arith.constant 0 : index
    %115 = vector.load %arg5[%c0_44, %c0_45, %c0_46] : memref<2x32x32xf32, #tpu.memory_space<vmem>>, vector<1x32x32xf32>
    %116 = vector.shape_cast %115 : vector<1x32x32xf32> to vector<32x32xf32>
    %cst_47 = arith.constant dense<0.000000e+00> : vector<16x32xf32>
    %117 = tpu.matmul %114, %116, %cst_47 {dimension_numbers = #tpu.dot_dimension_numbers<[1], [0], [0], [1], [0, 0, 1, 1], [], []>} : vector<16x32xf32>, vector<32x32xf32>, vector<16x32xf32> -> vector<16x32xf32>
    %c0_48 = arith.constant 0 : index
    %c0_49 = arith.constant 0 : index
    %c0_50 = arith.constant 0 : index
    %118 = vector.load %arg6[%c0_48, %c0_49, %c0_50] : memref<2x1x32xf32, #tpu.memory_space<vmem>>, vector<1x1x32xf32>
    %119 = vector.shape_cast %118 : vector<1x1x32xf32> to vector<1x32xf32>
    %120 = vector.broadcast %119 : vector<1x32xf32> to vector<16x32xf32>
    %121 = arith.addf %117, %120 : vector<16x32xf32>
    %122 = arith.addf %0, %121 : vector<16x32xf32>
    %c0_51 = arith.constant 0 : index
    %c0_52 = arith.constant 0 : index
    %c0_53 = arith.constant 0 : index
    %123 = vector.load %arg7[%c0_51, %c0_52, %c0_53] : memref<2x1x32xf32, #tpu.memory_space<vmem>>, vector<1x1x32xf32>
    %124 = vector.shape_cast %123 : vector<1x1x32xf32> to vector<1x32xf32>
    %c0_54 = arith.constant 0 : index
    %c0_55 = arith.constant 0 : index
    %c0_56 = arith.constant 0 : index
    %125 = vector.load %arg8[%c0_54, %c0_55, %c0_56] : memref<2x1x32xf32, #tpu.memory_space<vmem>>, vector<1x1x32xf32>
    %126 = vector.shape_cast %125 : vector<1x1x32xf32> to vector<1x32xf32>
    %cst_57 = arith.constant dense<0.000000e+00> : vector<16xf32>
    %127 = vector.multi_reduction <add>, %122, %cst_57 [1] : vector<16x32xf32> to vector<16xf32>
    %128 = vector.shape_cast %127 : vector<16xf32> to vector<16x1xf32>
    %cst_58 = arith.constant 3.200000e+01 : f32
    %129 = vector.broadcast %cst_58 : f32 to vector<16x1xf32>
    %130 = arith.divf %128, %129 : vector<16x1xf32>
    %131 = vector.broadcast %130 : vector<16x1xf32> to vector<16x32xf32>
    %132 = arith.subf %122, %131 : vector<16x32xf32>
    %133 = arith.mulf %132, %132 : vector<16x32xf32>
    %cst_59 = arith.constant dense<0.000000e+00> : vector<16xf32>
    %134 = vector.multi_reduction <add>, %133, %cst_59 [1] : vector<16x32xf32> to vector<16xf32>
    %135 = vector.shape_cast %134 : vector<16xf32> to vector<16x1xf32>
    %cst_60 = arith.constant 3.200000e+01 : f32
    %136 = vector.broadcast %cst_60 : f32 to vector<16x1xf32>
    %137 = arith.divf %135, %136 : vector<16x1xf32>
    %138 = vector.broadcast %130 : vector<16x1xf32> to vector<16x32xf32>
    %139 = arith.subf %122, %138 : vector<16x32xf32>
    %cst_61 = arith.constant 9.99999974E-6 : f32
    %140 = vector.broadcast %cst_61 : f32 to vector<16x1xf32>
    %141 = arith.addf %137, %140 : vector<16x1xf32>
    %142 = math.rsqrt %141 : vector<16x1xf32>
    %143 = vector.broadcast %142 : vector<16x1xf32> to vector<16x32xf32>
    %144 = arith.mulf %139, %143 : vector<16x32xf32>
    %145 = vector.broadcast %124 : vector<1x32xf32> to vector<16x32xf32>
    %146 = arith.mulf %145, %144 : vector<16x32xf32>
    %147 = vector.broadcast %126 : vector<1x32xf32> to vector<16x32xf32>
    %148 = arith.addf %146, %147 : vector<16x32xf32>
    %c0_62 = arith.constant 0 : index
    %c0_63 = arith.constant 0 : index
    %c0_64 = arith.constant 0 : index
    %149 = vector.load %arg9[%c0_62, %c0_63, %c0_64] : memref<2x32x64xf32, #tpu.memory_space<vmem>>, vector<1x32x64xf32>
    %150 = vector.shape_cast %149 : vector<1x32x64xf32> to vector<32x64xf32>
    %cst_65 = arith.constant dense<0.000000e+00> : vector<16x64xf32>
    %151 = tpu.matmul %148, %150, %cst_65 {dimension_numbers = #tpu.dot_dimension_numbers<[1], [0], [0], [1], [0, 0, 1, 1], [], []>} : vector<16x32xf32>, vector<32x64xf32>, vector<16x64xf32> -> vector<16x64xf32>
    %c0_66 = arith.constant 0 : index
    %c0_67 = arith.constant 0 : index
    %c0_68 = arith.constant 0 : index
    %152 = vector.load %arg10[%c0_66, %c0_67, %c0_68] : memref<2x1x64xf32, #tpu.memory_space<vmem>>, vector<1x1x64xf32>
    %153 = vector.shape_cast %152 : vector<1x1x64xf32> to vector<1x64xf32>
    %154 = vector.broadcast %153 : vector<1x64xf32> to vector<16x64xf32>
    %155 = arith.addf %151, %154 : vector<16x64xf32>
    %cst_69 = arith.constant 5.000000e-01 : f32
    %156 = vector.broadcast %cst_69 : f32 to vector<16x64xf32>
    %157 = arith.mulf %156, %155 : vector<16x64xf32>
    %cst_70 = arith.constant 0.707106769 : f32
    %158 = vector.broadcast %cst_70 : f32 to vector<16x64xf32>
    %159 = arith.mulf %155, %158 : vector<16x64xf32>
    %160 = math.erf %159 : vector<16x64xf32>
    %cst_71 = arith.constant 1.000000e+00 : f32
    %161 = vector.broadcast %cst_71 : f32 to vector<16x64xf32>
    %162 = arith.addf %161, %160 : vector<16x64xf32>
    %163 = arith.mulf %157, %162 : vector<16x64xf32>
    %c0_72 = arith.constant 0 : index
    %c0_73 = arith.constant 0 : index
    %c0_74 = arith.constant 0 : index
    %164 = vector.load %arg11[%c0_72, %c0_73, %c0_74] : memref<2x64x32xf32, #tpu.memory_space<vmem>>, vector<1x64x32xf32>
    %165 = vector.shape_cast %164 : vector<1x64x32xf32> to vector<64x32xf32>
    %cst_75 = arith.constant dense<0.000000e+00> : vector<16x32xf32>
    %166 = tpu.matmul %163, %165, %cst_75 {dimension_numbers = #tpu.dot_dimension_numbers<[1], [0], [0], [1], [0, 0, 1, 1], [], []>} : vector<16x64xf32>, vector<64x32xf32>, vector<16x32xf32> -> vector<16x32xf32>
    %c0_76 = arith.constant 0 : index
    %c0_77 = arith.constant 0 : index
    %c0_78 = arith.constant 0 : index
    %167 = vector.load %arg12[%c0_76, %c0_77, %c0_78] : memref<2x1x32xf32, #tpu.memory_space<vmem>>, vector<1x1x32xf32>
    %168 = vector.shape_cast %167 : vector<1x1x32xf32> to vector<1x32xf32>
    %169 = vector.broadcast %168 : vector<1x32xf32> to vector<16x32xf32>
    %170 = arith.addf %166, %169 : vector<16x32xf32>
    %171 = arith.addf %122, %170 : vector<16x32xf32>
    %c1 = arith.constant 1 : index
    %c0_79 = arith.constant 0 : index
    %c0_80 = arith.constant 0 : index
    %172 = vector.load %arg2[%c1, %c0_79, %c0_80] : memref<2x1x32xf32, #tpu.memory_space<vmem>>, vector<1x1x32xf32>
    %173 = vector.shape_cast %172 : vector<1x1x32xf32> to vector<1x32xf32>
    %c1_81 = arith.constant 1 : index
    %c0_82 = arith.constant 0 : index
    %c0_83 = arith.constant 0 : index
    %174 = vector.load %arg3[%c1_81, %c0_82, %c0_83] : memref<2x1x32xf32, #tpu.memory_space<vmem>>, vector<1x1x32xf32>
    %175 = vector.shape_cast %174 : vector<1x1x32xf32> to vector<1x32xf32>
    %cst_84 = arith.constant dense<0.000000e+00> : vector<16xf32>
    %176 = vector.multi_reduction <add>, %171, %cst_84 [1] : vector<16x32xf32> to vector<16xf32>
    %177 = vector.shape_cast %176 : vector<16xf32> to vector<16x1xf32>
    %cst_85 = arith.constant 3.200000e+01 : f32
    %178 = vector.broadcast %cst_85 : f32 to vector<16x1xf32>
    %179 = arith.divf %177, %178 : vector<16x1xf32>
    %180 = vector.broadcast %179 : vector<16x1xf32> to vector<16x32xf32>
    %181 = arith.subf %171, %180 : vector<16x32xf32>
    %182 = arith.mulf %181, %181 : vector<16x32xf32>
    %cst_86 = arith.constant dense<0.000000e+00> : vector<16xf32>
    %183 = vector.multi_reduction <add>, %182, %cst_86 [1] : vector<16x32xf32> to vector<16xf32>
    %184 = vector.shape_cast %183 : vector<16xf32> to vector<16x1xf32>
    %cst_87 = arith.constant 3.200000e+01 : f32
    %185 = vector.broadcast %cst_87 : f32 to vector<16x1xf32>
    %186 = arith.divf %184, %185 : vector<16x1xf32>
    %187 = vector.broadcast %179 : vector<16x1xf32> to vector<16x32xf32>
    %188 = arith.subf %171, %187 : vector<16x32xf32>
    %cst_88 = arith.constant 9.99999974E-6 : f32
    %189 = vector.broadcast %cst_88 : f32 to vector<16x1xf32>
    %190 = arith.addf %186, %189 : vector<16x1xf32>
    %191 = math.rsqrt %190 : vector<16x1xf32>
    %192 = vector.broadcast %191 : vector<16x1xf32> to vector<16x32xf32>
    %193 = arith.mulf %188, %192 : vector<16x32xf32>
    %194 = vector.broadcast %173 : vector<1x32xf32> to vector<16x32xf32>
    %195 = arith.mulf %194, %193 : vector<16x32xf32>
    %196 = vector.broadcast %175 : vector<1x32xf32> to vector<16x32xf32>
    %197 = arith.addf %195, %196 : vector<16x32xf32>
    %c1_89 = arith.constant 1 : index
    %c0_90 = arith.constant 0 : index
    %c0_91 = arith.constant 0 : index
    %198 = vector.load %arg4[%c1_89, %c0_90, %c0_91] : memref<2x32x96xf32, #tpu.memory_space<vmem>>, vector<1x32x96xf32>
    %199 = vector.shape_cast %198 : vector<1x32x96xf32> to vector<32x96xf32>
    %cst_92 = arith.constant dense<0.000000e+00> : vector<16x96xf32>
    %200 = tpu.matmul %197, %199, %cst_92 {dimension_numbers = #tpu.dot_dimension_numbers<[1], [0], [0], [1], [0, 0, 1, 1], [], []>} : vector<16x32xf32>, vector<32x96xf32>, vector<16x96xf32> -> vector<16x96xf32>
    %201 = vector.extract_strided_slice %200 {offsets = [0, 0], sizes = [16, 32], strides = [1, 1]} : vector<16x96xf32> to vector<16x32xf32>
    %cst_93 = arith.constant 2.500000e-01 : f32
    %202 = vector.broadcast %cst_93 : f32 to vector<16x32xf32>
    %203 = arith.mulf %201, %202 : vector<16x32xf32>
    %204 = vector.extract_strided_slice %200 {offsets = [0, 32], sizes = [16, 32], strides = [1, 1]} : vector<16x96xf32> to vector<16x32xf32>
    %205 = vector.extract_strided_slice %200 {offsets = [0, 64], sizes = [16, 32], strides = [1, 1]} : vector<16x96xf32> to vector<16x32xf32>
    %206 = vector.extract_strided_slice %203 {offsets = [0, 0], sizes = [8, 16], strides = [1, 1]} : vector<16x32xf32> to vector<8x16xf32>
    %207 = vector.extract_strided_slice %204 {offsets = [0, 0], sizes = [8, 16], strides = [1, 1]} : vector<16x32xf32> to vector<8x16xf32>
    %208 = vector.extract_strided_slice %205 {offsets = [0, 0], sizes = [8, 16], strides = [1, 1]} : vector<16x32xf32> to vector<8x16xf32>
    %209 = tpu.transpose %207, [1, 0] : vector<8x16xf32> -> vector<16x8xf32>
    %cst_94 = arith.constant dense<0.000000e+00> : vector<8x8xf32>
    %210 = tpu.matmul %206, %209, %cst_94 {dimension_numbers = #tpu.dot_dimension_numbers<[1], [0], [0], [1], [0, 0, 1, 1], [], []>} : vector<8x16xf32>, vector<16x8xf32>, vector<8x8xf32> -> vector<8x8xf32>
    %cst_95 = arith.constant 0xFF800000 : f32
    %211 = vector.broadcast %cst_95 : f32 to vector<8x8xf32>
    %212 = arith.select %3, %211, %210 : vector<8x8xi1>, vector<8x8xf32>
    %cst_96 = arith.constant dense<0xFF800000> : vector<8xf32>
    %213 = vector.multi_reduction <maximumf>, %212, %cst_96 [1] : vector<8x8xf32> to vector<8xf32>
    %214 = vector.shape_cast %213 : vector<8xf32> to vector<8x1xf32>
    %215 = vector.broadcast %214 : vector<8x1xf32> to vector<8x8xf32>
    %216 = arith.subf %212, %215 : vector<8x8xf32>
    %217 = math.exp %216 : vector<8x8xf32>
    %cst_97 = arith.constant dense<0.000000e+00> : vector<8xf32>
    %218 = vector.multi_reduction <add>, %217, %cst_97 [1] : vector<8x8xf32> to vector<8xf32>
    %219 = vector.shape_cast %218 : vector<8xf32> to vector<8x1xf32>
    %220 = tpu.reciprocal %219 {approx = true} : vector<8x1xf32> -> vector<8x1xf32>
    %221 = vector.broadcast %220 : vector<8x1xf32> to vector<8x8xf32>
    %222 = arith.mulf %217, %221 : vector<8x8xf32>
    %cst_98 = arith.constant dense<0.000000e+00> : vector<8x16xf32>
    %223 = tpu.matmul %222, %208, %cst_98 {dimension_numbers = #tpu.dot_dimension_numbers<[1], [0], [0], [1], [0, 0, 1, 1], [], []>} : vector<8x8xf32>, vector<8x16xf32>, vector<8x16xf32> -> vector<8x16xf32>
    %c0_99 = arith.constant 0 : index
    %c0_100 = arith.constant 0 : index
    %224 = vector.load %arg17[%c0_99, %c0_100] : memref<16x32xf32, #tpu.memory_space<vmem>>, vector<8x16xf32>
    tpu.vector_store %arg17[%c0_99, %c0_100], %223 {strides = array<i32>} : memref<16x32xf32, #tpu.memory_space<vmem>>, vector<8x16xf32>,
    %225 = vector.extract_strided_slice %203 {offsets = [0, 16], sizes = [8, 16], strides = [1, 1]} : vector<16x32xf32> to vector<8x16xf32>
    %226 = vector.extract_strided_slice %204 {offsets = [0, 16], sizes = [8, 16], strides = [1, 1]} : vector<16x32xf32> to vector<8x16xf32>
    %227 = vector.extract_strided_slice %205 {offsets = [0, 16], sizes = [8, 16], strides = [1, 1]} : vector<16x32xf32> to vector<8x16xf32>
    %228 = tpu.transpose %226, [1, 0] : vector<8x16xf32> -> vector<16x8xf32>
    %cst_101 = arith.constant dense<0.000000e+00> : vector<8x8xf32>
    %229 = tpu.matmul %225, %228, %cst_101 {dimension_numbers = #tpu.dot_dimension_numbers<[1], [0], [0], [1], [0, 0, 1, 1], [], []>} : vector<8x16xf32>, vector<16x8xf32>, vector<8x8xf32> -> vector<8x8xf32>
    %cst_102 = arith.constant 0xFF800000 : f32
    %230 = vector.broadcast %cst_102 : f32 to vector<8x8xf32>
    %231 = arith.select %3, %230, %229 : vector<8x8xi1>, vector<8x8xf32>
    %cst_103 = arith.constant dense<0xFF800000> : vector<8xf32>
    %232 = vector.multi_reduction <maximumf>, %231, %cst_103 [1] : vector<8x8xf32> to vector<8xf32>
    %233 = vector.shape_cast %232 : vector<8xf32> to vector<8x1xf32>
    %234 = vector.broadcast %233 : vector<8x1xf32> to vector<8x8xf32>
    %235 = arith.subf %231, %234 : vector<8x8xf32>
    %236 = math.exp %235 : vector<8x8xf32>
    %cst_104 = arith.constant dense<0.000000e+00> : vector<8xf32>
    %237 = vector.multi_reduction <add>, %236, %cst_104 [1] : vector<8x8xf32> to vector<8xf32>
    %238 = vector.shape_cast %237 : vector<8xf32> to vector<8x1xf32>
    %239 = tpu.reciprocal %238 {approx = true} : vector<8x1xf32> -> vector<8x1xf32>
    %240 = vector.broadcast %239 : vector<8x1xf32> to vector<8x8xf32>
    %241 = arith.mulf %236, %240 : vector<8x8xf32>
    %cst_105 = arith.constant dense<0.000000e+00> : vector<8x16xf32>
    %242 = tpu.matmul %241, %227, %cst_105 {dimension_numbers = #tpu.dot_dimension_numbers<[1], [0], [0], [1], [0, 0, 1, 1], [], []>} : vector<8x8xf32>, vector<8x16xf32>, vector<8x16xf32> -> vector<8x16xf32>
    %c0_106 = arith.constant 0 : index
    %c16_107 = arith.constant 16 : index
    %243 = vector.load %arg17[%c0_106, %c16_107] : memref<16x32xf32, #tpu.memory_space<vmem>>, vector<8x16xf32>
    tpu.vector_store %arg17[%c0_106, %c16_107], %242 {strides = array<i32>} : memref<16x32xf32, #tpu.memory_space<vmem>>, vector<8x16xf32>,
    %244 = vector.extract_strided_slice %203 {offsets = [8, 0], sizes = [8, 16], strides = [1, 1]} : vector<16x32xf32> to vector<8x16xf32>
    %245 = vector.extract_strided_slice %204 {offsets = [8, 0], sizes = [8, 16], strides = [1, 1]} : vector<16x32xf32> to vector<8x16xf32>
    %246 = vector.extract_strided_slice %205 {offsets = [8, 0], sizes = [8, 16], strides = [1, 1]} : vector<16x32xf32> to vector<8x16xf32>
    %247 = tpu.transpose %245, [1, 0] : vector<8x16xf32> -> vector<16x8xf32>
    %cst_108 = arith.constant dense<0.000000e+00> : vector<8x8xf32>
    %248 = tpu.matmul %244, %247, %cst_108 {dimension_numbers = #tpu.dot_dimension_numbers<[1], [0], [0], [1], [0, 0, 1, 1], [], []>} : vector<8x16xf32>, vector<16x8xf32>, vector<8x8xf32> -> vector<8x8xf32>
    %cst_109 = arith.constant 0xFF800000 : f32
    %249 = vector.broadcast %cst_109 : f32 to vector<8x8xf32>
    %250 = arith.select %3, %249, %248 : vector<8x8xi1>, vector<8x8xf32>
    %cst_110 = arith.constant dense<0xFF800000> : vector<8xf32>
    %251 = vector.multi_reduction <maximumf>, %250, %cst_110 [1] : vector<8x8xf32> to vector<8xf32>
    %252 = vector.shape_cast %251 : vector<8xf32> to vector<8x1xf32>
    %253 = vector.broadcast %252 : vector<8x1xf32> to vector<8x8xf32>
    %254 = arith.subf %250, %253 : vector<8x8xf32>
    %255 = math.exp %254 : vector<8x8xf32>
    %cst_111 = arith.constant dense<0.000000e+00> : vector<8xf32>
    %256 = vector.multi_reduction <add>, %255, %cst_111 [1] : vector<8x8xf32> to vector<8xf32>
    %257 = vector.shape_cast %256 : vector<8xf32> to vector<8x1xf32>
    %258 = tpu.reciprocal %257 {approx = true} : vector<8x1xf32> -> vector<8x1xf32>
    %259 = vector.broadcast %258 : vector<8x1xf32> to vector<8x8xf32>
    %260 = arith.mulf %255, %259 : vector<8x8xf32>
    %cst_112 = arith.constant dense<0.000000e+00> : vector<8x16xf32>
    %261 = tpu.matmul %260, %246, %cst_112 {dimension_numbers = #tpu.dot_dimension_numbers<[1], [0], [0], [1], [0, 0, 1, 1], [], []>} : vector<8x8xf32>, vector<8x16xf32>, vector<8x16xf32> -> vector<8x16xf32>
    %c8_113 = arith.constant 8 : index
    %c0_114 = arith.constant 0 : index
    %262 = vector.load %arg17[%c8_113, %c0_114] : memref<16x32xf32, #tpu.memory_space<vmem>>, vector<8x16xf32>
    tpu.vector_store %arg17[%c8_113, %c0_114], %261 {strides = array<i32>} : memref<16x32xf32, #tpu.memory_space<vmem>>, vector<8x16xf32>,
    %263 = vector.extract_strided_slice %203 {offsets = [8, 16], sizes = [8, 16], strides = [1, 1]} : vector<16x32xf32> to vector<8x16xf32>
    %264 = vector.extract_strided_slice %204 {offsets = [8, 16], sizes = [8, 16], strides = [1, 1]} : vector<16x32xf32> to vector<8x16xf32>
    %265 = vector.extract_strided_slice %205 {offsets = [8, 16], sizes = [8, 16], strides = [1, 1]} : vector<16x32xf32> to vector<8x16xf32>
    %266 = tpu.transpose %264, [1, 0] : vector<8x16xf32> -> vector<16x8xf32>
    %cst_115 = arith.constant dense<0.000000e+00> : vector<8x8xf32>
    %267 = tpu.matmul %263, %266, %cst_115 {dimension_numbers = #tpu.dot_dimension_numbers<[1], [0], [0], [1], [0, 0, 1, 1], [], []>} : vector<8x16xf32>, vector<16x8xf32>, vector<8x8xf32> -> vector<8x8xf32>
    %cst_116 = arith.constant 0xFF800000 : f32
    %268 = vector.broadcast %cst_116 : f32 to vector<8x8xf32>
    %269 = arith.select %3, %268, %267 : vector<8x8xi1>, vector<8x8xf32>
    %cst_117 = arith.constant dense<0xFF800000> : vector<8xf32>
    %270 = vector.multi_reduction <maximumf>, %269, %cst_117 [1] : vector<8x8xf32> to vector<8xf32>
    %271 = vector.shape_cast %270 : vector<8xf32> to vector<8x1xf32>
    %272 = vector.broadcast %271 : vector<8x1xf32> to vector<8x8xf32>
    %273 = arith.subf %269, %272 : vector<8x8xf32>
    %274 = math.exp %273 : vector<8x8xf32>
    %cst_118 = arith.constant dense<0.000000e+00> : vector<8xf32>
    %275 = vector.multi_reduction <add>, %274, %cst_118 [1] : vector<8x8xf32> to vector<8xf32>
    %276 = vector.shape_cast %275 : vector<8xf32> to vector<8x1xf32>
    %277 = tpu.reciprocal %276 {approx = true} : vector<8x1xf32> -> vector<8x1xf32>
    %278 = vector.broadcast %277 : vector<8x1xf32> to vector<8x8xf32>
    %279 = arith.mulf %274, %278 : vector<8x8xf32>
    %cst_119 = arith.constant dense<0.000000e+00> : vector<8x16xf32>
    %280 = tpu.matmul %279, %265, %cst_119 {dimension_numbers = #tpu.dot_dimension_numbers<[1], [0], [0], [1], [0, 0, 1, 1], [], []>} : vector<8x8xf32>, vector<8x16xf32>, vector<8x16xf32> -> vector<8x16xf32>
    %c8_120 = arith.constant 8 : index
    %c16_121 = arith.constant 16 : index
    %281 = vector.load %arg17[%c8_120, %c16_121] : memref<16x32xf32, #tpu.memory_space<vmem>>, vector<8x16xf32>
    tpu.vector_store %arg17[%c8_120, %c16_121], %280 {strides = array<i32>} : memref<16x32xf32, #tpu.memory_space<vmem>>, vector<8x16xf32>,
    %c0_122 = arith.constant 0 : index
    %c0_123 = arith.constant 0 : index
    %282 = vector.load %arg17[%c0_122, %c0_123] : memref<16x32xf32, #tpu.memory_space<vmem>>, vector<16x32xf32>
    %c1_124 = arith.constant 1 : index
    %c0_125 = arith.constant 0 : index
    %c0_126 = arith.constant 0 : index
    %283 = vector.load %arg5[%c1_124, %c0_125, %c0_126] : memref<2x32x32xf32, #tpu.memory_space<vmem>>, vector<1x32x32xf32>
    %284 = vector.shape_cast %283 : vector<1x32x32xf32> to vector<32x32xf32>
    %cst_127 = arith.constant dense<0.000000e+00> : vector<16x32xf32>
    %285 = tpu.matmul %282, %284, %cst_127 {dimension_numbers = #tpu.dot_dimension_numbers<[1], [0], [0], [1], [0, 0, 1, 1], [], []>} : vector<16x32xf32>, vector<32x32xf32>, vector<16x32xf32> -> vector<16x32xf32>
    %c1_128 = arith.constant 1 : index
    %c0_129 = arith.constant 0 : index
    %c0_130 = arith.constant 0 : index
    %286 = vector.load %arg6[%c1_128, %c0_129, %c0_130] : memref<2x1x32xf32, #tpu.memory_space<vmem>>, vector<1x1x32xf32>
    %287 = vector.shape_cast %286 : vector<1x1x32xf32> to vector<1x32xf32>
    %288 = vector.broadcast %287 : vector<1x32xf32> to vector<16x32xf32>
    %289 = arith.addf %285, %288 : vector<16x32xf32>
    %290 = arith.addf %171, %289 : vector<16x32xf32>
    %c1_131 = arith.constant 1 : index
    %c0_132 = arith.constant 0 : index
    %c0_133 = arith.constant 0 : index
    %291 = vector.load %arg7[%c1_131, %c0_132, %c0_133] : memref<2x1x32xf32, #tpu.memory_space<vmem>>, vector<1x1x32xf32>
    %292 = vector.shape_cast %291 : vector<1x1x32xf32> to vector<1x32xf32>
    %c1_134 = arith.constant 1 : index
    %c0_135 = arith.constant 0 : index
    %c0_136 = arith.constant 0 : index
    %293 = vector.load %arg8[%c1_134, %c0_135, %c0_136] : memref<2x1x32xf32, #tpu.memory_space<vmem>>, vector<1x1x32xf32>
    %294 = vector.shape_cast %293 : vector<1x1x32xf32> to vector<1x32xf32>
    %cst_137 = arith.constant dense<0.000000e+00> : vector<16xf32>
    %295 = vector.multi_reduction <add>, %290, %cst_137 [1] : vector<16x32xf32> to vector<16xf32>
    %296 = vector.shape_cast %295 : vector<16xf32> to vector<16x1xf32>
    %cst_138 = arith.constant 3.200000e+01 : f32
    %297 = vector.broadcast %cst_138 : f32 to vector<16x1xf32>
    %298 = arith.divf %296, %297 : vector<16x1xf32>
    %299 = vector.broadcast %298 : vector<16x1xf32> to vector<16x32xf32>
    %300 = arith.subf %290, %299 : vector<16x32xf32>
    %301 = arith.mulf %300, %300 : vector<16x32xf32>
    %cst_139 = arith.constant dense<0.000000e+00> : vector<16xf32>
    %302 = vector.multi_reduction <add>, %301, %cst_139 [1] : vector<16x32xf32> to vector<16xf32>
    %303 = vector.shape_cast %302 : vector<16xf32> to vector<16x1xf32>
    %cst_140 = arith.constant 3.200000e+01 : f32
    %304 = vector.broadcast %cst_140 : f32 to vector<16x1xf32>
    %305 = arith.divf %303, %304 : vector<16x1xf32>
    %306 = vector.broadcast %298 : vector<16x1xf32> to vector<16x32xf32>
    %307 = arith.subf %290, %306 : vector<16x32xf32>
    %cst_141 = arith.constant 9.99999974E-6 : f32
    %308 = vector.broadcast %cst_141 : f32 to vector<16x1xf32>
    %309 = arith.addf %305, %308 : vector<16x1xf32>
    %310 = math.rsqrt %309 : vector<16x1xf32>
    %311 = vector.broadcast %310 : vector<16x1xf32> to vector<16x32xf32>
    %312 = arith.mulf %307, %311 : vector<16x32xf32>
    %313 = vector.broadcast %292 : vector<1x32xf32> to vector<16x32xf32>
    %314 = arith.mulf %313, %312 : vector<16x32xf32>
    %315 = vector.broadcast %294 : vector<1x32xf32> to vector<16x32xf32>
    %316 = arith.addf %314, %315 : vector<16x32xf32>
    %c1_142 = arith.constant 1 : index
    %c0_143 = arith.constant 0 : index
    %c0_144 = arith.constant 0 : index
    %317 = vector.load %arg9[%c1_142, %c0_143, %c0_144] : memref<2x32x64xf32, #tpu.memory_space<vmem>>, vector<1x32x64xf32>
    %318 = vector.shape_cast %317 : vector<1x32x64xf32> to vector<32x64xf32>
    %cst_145 = arith.constant dense<0.000000e+00> : vector<16x64xf32>
    %319 = tpu.matmul %316, %318, %cst_145 {dimension_numbers = #tpu.dot_dimension_numbers<[1], [0], [0], [1], [0, 0, 1, 1], [], []>} : vector<16x32xf32>, vector<32x64xf32>, vector<16x64xf32> -> vector<16x64xf32>
    %c1_146 = arith.constant 1 : index
    %c0_147 = arith.constant 0 : index
    %c0_148 = arith.constant 0 : index
    %320 = vector.load %arg10[%c1_146, %c0_147, %c0_148] : memref<2x1x64xf32, #tpu.memory_space<vmem>>, vector<1x1x64xf32>
    %321 = vector.shape_cast %320 : vector<1x1x64xf32> to vector<1x64xf32>
    %322 = vector.broadcast %321 : vector<1x64xf32> to vector<16x64xf32>
    %323 = arith.addf %319, %322 : vector<16x64xf32>
    %cst_149 = arith.constant 5.000000e-01 : f32
    %324 = vector.broadcast %cst_149 : f32 to vector<16x64xf32>
    %325 = arith.mulf %324, %323 : vector<16x64xf32>
    %cst_150 = arith.constant 0.707106769 : f32
    %326 = vector.broadcast %cst_150 : f32 to vector<16x64xf32>
    %327 = arith.mulf %323, %326 : vector<16x64xf32>
    %328 = math.erf %327 : vector<16x64xf32>
    %cst_151 = arith.constant 1.000000e+00 : f32
    %329 = vector.broadcast %cst_151 : f32 to vector<16x64xf32>
    %330 = arith.addf %329, %328 : vector<16x64xf32>
    %331 = arith.mulf %325, %330 : vector<16x64xf32>
    %c1_152 = arith.constant 1 : index
    %c0_153 = arith.constant 0 : index
    %c0_154 = arith.constant 0 : index
    %332 = vector.load %arg11[%c1_152, %c0_153, %c0_154] : memref<2x64x32xf32, #tpu.memory_space<vmem>>, vector<1x64x32xf32>
    %333 = vector.shape_cast %332 : vector<1x64x32xf32> to vector<64x32xf32>
    %cst_155 = arith.constant dense<0.000000e+00> : vector<16x32xf32>
    %334 = tpu.matmul %331, %333, %cst_155 {dimension_numbers = #tpu.dot_dimension_numbers<[1], [0], [0], [1], [0, 0, 1, 1], [], []>} : vector<16x64xf32>, vector<64x32xf32>, vector<16x32xf32> -> vector<16x32xf32>
    %c1_156 = arith.constant 1 : index
    %c0_157 = arith.constant 0 : index
    %c0_158 = arith.constant 0 : index
    %335 = vector.load %arg12[%c1_156, %c0_157, %c0_158] : memref<2x1x32xf32, #tpu.memory_space<vmem>>, vector<1x1x32xf32>
    %336 = vector.shape_cast %335 : vector<1x1x32xf32> to vector<1x32xf32>
    %337 = vector.broadcast %336 : vector<1x32xf32> to vector<16x32xf32>
    %338 = arith.addf %334, %337 : vector<16x32xf32>
    %339 = arith.addf %290, %338 : vector<16x32xf32>
    %c0_159 = arith.constant 0 : index
    %c0_160 = arith.constant 0 : index
    %340 = vector.load %arg13[%c0_159, %c0_160] : memref<1x32xf32, #tpu.memory_space<vmem>>, vector<1x32xf32>
    %c0_161 = arith.constant 0 : index
    %c0_162 = arith.constant 0 : index
    %341 = vector.load %arg14[%c0_161, %c0_162] : memref<1x32xf32, #tpu.memory_space<vmem>>, vector<1x32xf32>
    %cst_163 = arith.constant dense<0.000000e+00> : vector<16xf32>
    %342 = vector.multi_reduction <add>, %339, %cst_163 [1] : vector<16x32xf32> to vector<16xf32>
    %343 = vector.shape_cast %342 : vector<16xf32> to vector<16x1xf32>
    %cst_164 = arith.constant 3.200000e+01 : f32
    %344 = vector.broadcast %cst_164 : f32 to vector<16x1xf32>
    %345 = arith.divf %343, %344 : vector<16x1xf32>
    %346 = vector.broadcast %345 : vector<16x1xf32> to vector<16x32xf32>
    %347 = arith.subf %339, %346 : vector<16x32xf32>
    %348 = arith.mulf %347, %347 : vector<16x32xf32>
    %cst_165 = arith.constant dense<0.000000e+00> : vector<16xf32>
    %349 = vector.multi_reduction <add>, %348, %cst_165 [1] : vector<16x32xf32> to vector<16xf32>
    %350 = vector.shape_cast %349 : vector<16xf32> to vector<16x1xf32>
    %cst_166 = arith.constant 3.200000e+01 : f32
    %351 = vector.broadcast %cst_166 : f32 to vector<16x1xf32>
    %352 = arith.divf %350, %351 : vector<16x1xf32>
    %353 = vector.broadcast %345 : vector<16x1xf32> to vector<16x32xf32>
    %354 = arith.subf %339, %353 : vector<16x32xf32>
    %cst_167 = arith.constant 9.99999974E-6 : f32
    %355 = vector.broadcast %cst_167 : f32 to vector<16x1xf32>
    %356 = arith.addf %352, %355 : vector<16x1xf32>
    %357 = math.rsqrt %356 : vector<16x1xf32>
    %358 = vector.broadcast %357 : vector<16x1xf32> to vector<16x32xf32>
    %359 = arith.mulf %354, %358 : vector<16x32xf32>
    %360 = vector.broadcast %340 : vector<1x32xf32> to vector<16x32xf32>
    %361 = arith.mulf %360, %359 : vector<16x32xf32>
    %362 = vector.broadcast %341 : vector<1x32xf32> to vector<16x32xf32>
    %363 = arith.addf %361, %362 : vector<16x32xf32>
    %c0_168 = arith.constant 0 : index
    %c0_169 = arith.constant 0 : index
    %364 = vector.load %arg15[%c0_168, %c0_169] : memref<32x256xf32, #tpu.memory_space<vmem>>, vector<32x256xf32>
    %cst_170 = arith.constant dense<0.000000e+00> : vector<16x256xf32>
    %365 = tpu.matmul %363, %364, %cst_170 {dimension_numbers = #tpu.dot_dimension_numbers<[1], [0], [0], [1], [0, 0, 1, 1], [], []>} : vector<16x32xf32>, vector<32x256xf32>, vector<16x256xf32> -> vector<16x256xf32>
    %c0_171 = arith.constant 0 : index
    %c0_172 = arith.constant 0 : index
    %366 = vector.load %arg16[%c0_171, %c0_172] : memref<16x256xf32, #tpu.memory_space<vmem>>, vector<16x256xf32>
    tpu.vector_store %arg16[%c0_171, %c0_172], %365 {strides = array<i32>} : memref<16x256xf32, #tpu.memory_space<vmem>>, vector<16x256xf32>,
    return
  }
  func.func @transform_0(%arg0: i32) -> (i32, i32) {
    %c0_i32 = arith.constant 0 : i32
    %c0_i32_0 = arith.constant 0 : i32
    %c0_i32_1 = arith.constant 0 : i32
    return %c0_i32, %c0_i32_0 : i32, i32
  }
  func.func @transform_1(%arg0: i32) -> (i32, i32, i32) {
    %c0_i32 = arith.constant 0 : i32
    %c0_i32_0 = arith.constant 0 : i32
    %c0_i32_1 = arith.constant 0 : i32
    %c0_i32_2 = arith.constant 0 : i32
    return %c0_i32, %c0_i32_0, %c0_i32_1 : i32, i32, i32
  }
  func.func @transform_2(%arg0: i32) -> (i32, i32, i32) {
    %c0_i32 = arith.constant 0 : i32
    %c0_i32_0 = arith.constant 0 : i32
    %c0_i32_1 = arith.constant 0 : i32
    %c0_i32_2 = arith.constant 0 : i32
    return %c0_i32, %c0_i32_0, %c0_i32_1 : i32, i32, i32
  }
  func.func @transform_3(%arg0: i32) -> (i32, i32, i32) {
    %c0_i32 = arith.constant 0 : i32
    %c0_i32_0 = arith.constant 0 : i32
    %c0_i32_1 = arith.constant 0 : i32
    %c0_i32_2 = arith.constant 0 : i32
    return %c0_i32, %c0_i32_0, %c0_i32_1 : i32, i32, i32
  }
  func.func @transform_4(%arg0: i32) -> (i32, i32, i32) {
    %c0_i32 = arith.constant 0 : i32
    %c0_i32_0 = arith.constant 0 : i32
    %c0_i32_1 = arith.constant 0 : i32
    %c0_i32_2 = arith.constant 0 : i32
    return %c0_i32, %c0_i32_0, %c0_i32_1 : i32, i32, i32
  }
  func.func @transform_5(%arg0: i32) -> (i32, i32, i32) {
    %c0_i32 = arith.constant 0 : i32
    %c0_i32_0 = arith.constant 0 : i32
    %c0_i32_1 = arith.constant 0 : i32
    %c0_i32_2 = arith.constant 0 : i32
    return %c0_i32, %c0_i32_0, %c0_i32_1 : i32, i32, i32
  }
  func.func @transform_6(%arg0: i32) -> (i32, i32, i32) {
    %c0_i32 = arith.constant 0 : i32
    %c0_i32_0 = arith.constant 0 : i32
    %c0_i32_1 = arith.constant 0 : i32
    %c0_i32_2 = arith.constant 0 : i32
    return %c0_i32, %c0_i32_0, %c0_i32_1 : i32, i32, i32
  }
  func.func @transform_7(%arg0: i32) -> (i32, i32, i32) {
    %c0_i32 = arith.constant 0 : i32
    %c0_i32_0 = arith.constant 0 : i32
    %c0_i32_1 = arith.constant 0 : i32
    %c0_i32_2 = arith.constant 0 : i32
    return %c0_i32, %c0_i32_0, %c0_i32_1 : i32, i32, i32
  }
  func.func @transform_8(%arg0: i32) -> (i32, i32, i32) {
    %c0_i32 = arith.constant 0 : i32
    %c0_i32_0 = arith.constant 0 : i32
    %c0_i32_1 = arith.constant 0 : i32
    %c0_i32_2 = arith.constant 0 : i32
    return %c0_i32, %c0_i32_0, %c0_i32_1 : i32, i32, i32
  }
  func.func @transform_9(%arg0: i32) -> (i32, i32, i32) {
    %c0_i32 = arith.constant 0 : i32
    %c0_i32_0 = arith.constant 0 : i32
    %c0_i32_1 = arith.constant 0 : i32
    %c0_i32_2 = arith.constant 0 : i32
    return %c0_i32, %c0_i32_0, %c0_i32_1 : i32, i32, i32
  }
  func.func @transform_10(%arg0: i32) -> (i32, i32, i32) {
    %c0_i32 = arith.constant 0 : i32
    %c0_i32_0 = arith.constant 0 : i32
    %c0_i32_1 = arith.constant 0 : i32
    %c0_i32_2 = arith.constant 0 : i32
    return %c0_i32, %c0_i32_0, %c0_i32_1 : i32, i32, i32
  }
  func.func @transform_11(%arg0: i32) -> (i32, i32, i32) {
    %c0_i32 = arith.constant 0 : i32
    %c0_i32_0 = arith.constant 0 : i32
    %c0_i32_1 = arith.constant 0 : i32
    %c0_i32_2 = arith.constant 0 : i32
    return %c0_i32, %c0_i32_0, %c0_i32_1 : i32, i32, i32
  }
  func.func @transform_12(%arg0: i32) -> (i32, i32) {
    %c0_i32 = arith.constant 0 : i32
    %c0_i32_0 = arith.constant 0 : i32
    %c0_i32_1 = arith.constant 0 : i32
    return %c0_i32, %c0_i32_0 : i32, i32
  }
  func.func @transform_13(%arg0: i32) -> (i32, i32) {
    %c0_i32 = arith.constant 0 : i32
    %c0_i32_0 = arith.constant 0 : i32
    %c0_i32_1 = arith.constant 0 : i32
    return %c0_i32, %c0_i32_0 : i32, i32
  }
  func.func @transform_14(%arg0: i32) -> (i32, i32) {
    %c0_i32 = arith.constant 0 : i32
    %c0_i32_0 = arith.constant 0 : i32
    %c0_i32_1 = arith.constant 0 : i32
    return %c0_i32, %c0_i32_0 : i32, i32
  }
  func.func @transform_15(%arg0: i32) -> (i32, i32) {
    %c0_i32 = arith.constant 0 : i32
    %c0_i32_0 = arith.constant 0 : i32
    %c0_i32_1 = arith.constant 0 : i32
    return %c0_i32, %c0_i32_0 : i32, i32
  }
}

</mosaic_0001>

<llo_original>
// kernel: tpu_custom_call.1
$region0: #{tpu_custom_call.1}
  #allocation0 [shape = 'u32[]', space=smem, size = 0x4, offset = 0x4, fixed_abs, tag = 'smem constant byte address 0x4 - core index']
  #allocation1 [shape = 'u32[144,128]{1,0:T(1,128)}', space=vmem, size = 0x12000, scoped, tag = 'internal scratch']
  #allocation2 [shape = 'f32[16,32]{1,0:T(8,128)}', space=vmem, size = 0x2000, scoped, tag = 'scratch operand']
  %s0 = inlined_call_operand.hbm [shape: f32[16,32], index: 0, kind: input, shape index: {}]
  %s1 = inlined_call_operand.hbm [shape: f32[2,1,32], index: 1, kind: input, shape index: {}]
  %s2 = inlined_call_operand.vmem [shape: f32[2,1,32], index: 2, kind: input, shape index: {}]
  %s3 = inlined_call_operand.vmem [shape: f32[2,32,96], index: 3, kind: input, shape index: {}]
  %s4 = inlined_call_operand.vmem [shape: f32[2,32,32], index: 4, kind: input, shape index: {}]
  %s5 = inlined_call_operand.vmem [shape: f32[2,1,32], index: 5, kind: input, shape index: {}]
  %s6 = inlined_call_operand.vmem [shape: f32[2,1,32], index: 6, kind: input, shape index: {}]
  %s7 = inlined_call_operand.vmem [shape: f32[2,1,32], index: 7, kind: input, shape index: {}]
  %s8 = inlined_call_operand.vmem [shape: f32[2,32,64], index: 8, kind: input, shape index: {}]
  %s9 = inlined_call_operand.vmem [shape: f32[2,1,64], index: 9, kind: input, shape index: {}]
  %s10 = inlined_call_operand.vmem [shape: f32[2,64,32], index: 10, kind: input, shape index: {}]
  %s11 = inlined_call_operand.vmem [shape: f32[2,1,32], index: 11, kind: input, shape index: {}]
  %s12 = inlined_call_operand.vmem [shape: f32[1,32], index: 12, kind: input, shape index: {}]
  %s13 = inlined_call_operand.vmem [shape: f32[1,32], index: 13, kind: input, shape index: {}]
  %s14 = inlined_call_operand.hbm [shape: f32[32,256], index: 14, kind: input, shape index: {}]
  %s15 = inlined_call_operand.hbm [shape: f32[16,256], index: 15, kind: output, shape index: {}]
  %s16 = sld [smem:[#allocation0]]
  $region82: #{tpu_custom_call.1} parent=0
    _
  %s18 = ssub.s32 1, %s16
  %s19 = scalar_select 0, %s18, %s16
  $region1: #{tpu_custom_call.1} parent=0
    #allocation3 [shape = 'u8[8192]{0}', space=vmem, size = 0x2000, scoped, tag = 'input window, operand 0, single buffered']
    #allocation4 [shape = 's32[1]{0}', space=sflag, size = 0x4, scoped, tag = 'scoped memory for tpu_custom_call.1']
    #allocation5 [shape = 's32[1]{0}', space=sflag, size = 0x4, scoped, tag = 'scoped memory for tpu_custom_call.1']
    #allocation6 [shape = 'u8[1024]{0}', space=vmem, size = 0x400, scoped, tag = 'input window, operand 1, single buffered']
    #allocation7 [shape = 's32[1]{0}', space=sflag, size = 0x4, scoped, tag = 'scoped memory for tpu_custom_call.1']
    #allocation8 [shape = 'u8[32768]{0}', space=vmem, size = 0x8000, scoped, tag = 'input window, operand 14, single buffered']
    #allocation9 [shape = 'u8[16384]{0}', space=vmem, size = 0x4000, scoped, tag = 'output window, operand 0, single buffered']
    %20 = vsyncpa [#allocation4], 0
    %21 = vsyncpa [#allocation7], 0
    %22 = vsyncpa [#allocation5], 0
    // Predicated region
    $region2: #{tpu_custom_call.1} parent=1 // pred_check
      _
    $region3: #{tpu_custom_call.1} parent=1 // pred_check_branch
      %24 = sbr.rel (0) target = $region5
    $region4: #{tpu_custom_call.1} parent=1 // pred_region
      %s26 = ssub.s32 256, 256
      %27 = vsyncadd [#allocation4], %s26
      %s28 = sshll.u32 [#allocation3], 4
      %s29 = int_to_ptr.vmem [resolvable:$true] %s28
      %34 = dma.hbm_to_vmem [thread:$0]  %s0, 256, %s29, [#allocation4], 128, 128, 8
    $region5: #{tpu_custom_call.1} parent=1 // pred_fallthru
      _
    // Predicated region
    $region6: #{tpu_custom_call.1} parent=1 // pred_check
      _
    $region7: #{tpu_custom_call.1} parent=1 // pred_check_branch
      %36 = sbr.rel (0) target = $region9
    $region8: #{tpu_custom_call.1} parent=1 // pred_region
      %s38 = ssub.s32 32, 32
      %39 = vsyncadd [#allocation7], %s38
      %s40 = sshll.u32 [#allocation6], 4
      %s41 = int_to_ptr.vmem [resolvable:$true] %s40
      %46 = dma.hbm_to_vmem [thread:$0]  %s1, 32, %s41, [#allocation7], 16, 16, 1
    $region9: #{tpu_custom_call.1} parent=1 // pred_fallthru
      _
    // Predicated region
    $region10: #{tpu_custom_call.1} parent=1 // pred_check
      _
    $region11: #{tpu_custom_call.1} parent=1 // pred_check_branch
      %48 = sbr.rel (0) target = $region13
    $region12: #{tpu_custom_call.1} parent=1 // pred_region
      _
    $region13: #{tpu_custom_call.1} parent=1 // pred_fallthru
      _
    // Predicated region
    $region14: #{tpu_custom_call.1} parent=1 // pred_check
      _
    $region15: #{tpu_custom_call.1} parent=1 // pred_check_branch
      %50 = sbr.rel (0) target = $region17
    $region16: #{tpu_custom_call.1} parent=1 // pred_region
      _
    $region17: #{tpu_custom_call.1} parent=1 // pred_fallthru
      _
    // Predicated region
    $region18: #{tpu_custom_call.1} parent=1 // pred_check
      _
    $region19: #{tpu_custom_call.1} parent=1 // pred_check_branch
      %52 = sbr.rel (0) target = $region21
    $region20: #{tpu_custom_call.1} parent=1 // pred_region
      _
    $region21: #{tpu_custom_call.1} parent=1 // pred_fallthru
      _
    // Predicated region
    $region22: #{tpu_custom_call.1} parent=1 // pred_check
      _
    $region23: #{tpu_custom_call.1} parent=1 // pred_check_branch
      %54 = sbr.rel (0) target = $region25
    $region24: #{tpu_custom_call.1} parent=1 // pred_region
      _
    $region25: #{tpu_custom_call.1} parent=1 // pred_fallthru
      _
    // Predicated region
    $region26: #{tpu_custom_call.1} parent=1 // pred_check
      _
    $region27: #{tpu_custom_call.1} parent=1 // pred_check_branch
      %56 = sbr.rel (0) target = $region29
    $region28: #{tpu_custom_call.1} parent=1 // pred_region
      _
    $region29: #{tpu_custom_call.1} parent=1 // pred_fallthru
      _
    // Predicated region
    $region30: #{tpu_custom_call.1} parent=1 // pred_check
      _
    $region31: #{tpu_custom_call.1} parent=1 // pred_check_branch
      %58 = sbr.rel (0) target = $region33
    $region32: #{tpu_custom_call.1} parent=1 // pred_region
      _
    $region33: #{tpu_custom_call.1} parent=1 // pred_fallthru
      _
    // Predicated region
    $region34: #{tpu_custom_call.1} parent=1 // pred_check
      _
    $region35: #{tpu_custom_call.1} parent=1 // pred_check_branch
      %60 = sbr.rel (0) target = $region37
    $region36: #{tpu_custom_call.1} parent=1 // pred_region
      _
    $region37: #{tpu_custom_call.1} parent=1 // pred_fallthru
      _
    // Predicated region
    $region38: #{tpu_custom_call.1} parent=1 // pred_check
      _
    $region39: #{tpu_custom_call.1} parent=1 // pred_check_branch
      %62 = sbr.rel (0) target = $region41
    $region40: #{tpu_custom_call.1} parent=1 // pred_region
      _
    $region41: #{tpu_custom_call.1} parent=1 // pred_fallthru
      _
    // Predicated region
    $region42: #{tpu_custom_call.1} parent=1 // pred_check
      _
    $region43: #{tpu_custom_call.1} parent=1 // pred_check_branch
      %64 = sbr.rel (0) target = $region45
    $region44: #{tpu_custom_call.1} parent=1 // pred_region
      _
    $region45: #{tpu_custom_call.1} parent=1 // pred_fallthru
      _
    // Predicated region
    $region46: #{tpu_custom_call.1} parent=1 // pred_check
      _
    $region47: #{tpu_custom_call.1} parent=1 // pred_check_branch
      %66 = sbr.rel (0) target = $region49
    $region48: #{tpu_custom_call.1} parent=1 // pred_region
      _
    $region49: #{tpu_custom_call.1} parent=1 // pred_fallthru
      _
    // Predicated region
    $region50: #{tpu_custom_call.1} parent=1 // pred_check
      _
    $region51: #{tpu_custom_call.1} parent=1 // pred_check_branch
      %68 = sbr.rel (0) target = $region53
    $region52: #{tpu_custom_call.1} parent=1 // pred_region
      _
    $region53: #{tpu_custom_call.1} parent=1 // pred_fallthru
      _
    // Predicated region
    $region54: #{tpu_custom_call.1} parent=1 // pred_check
      _
    $region55: #{tpu_custom_call.1} parent=1 // pred_check_branch
      %70 = sbr.rel (0) target = $region57
    $region56: #{tpu_custom_call.1} parent=1 // pred_region
      _
    $region57: #{tpu_custom_call.1} parent=1 // pred_fallthru
      _
    // Predicated region
    $region58: #{tpu_custom_call.1} parent=1 // pred_check
      _
    $region59: #{tpu_custom_call.1} parent=1 // pred_check_branch
      %72 = sbr.rel (0) target = $region61
    $region60: #{tpu_custom_call.1} parent=1 // pred_region
      %s74 = ssub.s32 1024, 1024
      %75 = vsyncadd [#allocation7], %s74
      %s76 = sshll.u32 [#allocation8], 4
      %s77 = int_to_ptr.vmem [resolvable:$true] %s76
      %82 = dma.hbm_to_vmem [thread:$0]  %s14, 1024, %s77, [#allocation7], 256, 256, 16
    $region61: #{tpu_custom_call.1} parent=1 // pred_fallthru
      _
    // Predicated region
    $region62: #{tpu_custom_call.1} parent=1 // pred_check
      _
    $region63: #{tpu_custom_call.1} parent=1 // pred_check_branch
      %84 = sbr.rel (0) target = $region65
    $region64: #{tpu_custom_call.1} parent=1 // pred_region
      %85 = dma.done [#allocation4], 256
    $region65: #{tpu_custom_call.1} parent=1 // pred_fallthru
      _
    // Predicated region
    $region66: #{tpu_custom_call.1} parent=1 // pred_check
      _
    $region67: #{tpu_custom_call.1} parent=1 // pred_check_branch
      %87 = sbr.rel (0) target = $region69
    $region68: #{tpu_custom_call.1} parent=1 // pred_region
      %88 = dma.done [#allocation7], 32
    $region69: #{tpu_custom_call.1} parent=1 // pred_fallthru
      _
    // Predicated region
    $region70: #{tpu_custom_call.1} parent=1 // pred_check
      _
    $region71: #{tpu_custom_call.1} parent=1 // pred_check_branch
      %90 = sbr.rel (0) target = $region73
    $region72: #{tpu_custom_call.1} parent=1 // pred_region
      %91 = dma.done [#allocation7], 1024
    $region73: #{tpu_custom_call.1} parent=1 // pred_fallthru
      _
    %v92 = vld [vmem:[#allocation3] sm:$0xff]
    %v93 = vld [vmem:[#allocation3 + $0x8] sm:$0xff]
    %v94 = vlaneseq
    %v95 = vshrl.u32 %v94, 7
    %v96 = vlaneseq
    %v97 = vand.u32 %v96, 127
    %vm98 = vcmp.gt.s32.totalorder %v97, %v95
    %v99 = vld [vmem:[#allocation6] sm:$0x1]
    %v100 = vld [vmem:[%s2] sm:$0x1]
    %vm101 = vcmask 261120
    %v102 = vsel %vm101, %v92, 0.0
    %103 = vadd.xlane.f32.xlu0 %v102
    %v104 = vpop.xlane.xlu0 %103
    %v105 = vsel %vm101, %v93, 0.0
    %106 = vadd.xlane.f32.xlu0 %v105
    %v107 = vpop.xlane.xlu0 %106
    %v108 = vrcp.pop 32.0
    %v109 = vmul.f32 %v104, %v108
    %v110 = vmul.f32 %v107, %v108
    %v111 = vsub.f32 %v92, %v109
    %v112 = vsub.f32 %v93, %v110
    %v113 = vmul.f32 %v111, %v111
    %v114 = vmul.f32 %v112, %v112
    %v115 = vsel %vm101, %v113, 0.0
    %116 = vadd.xlane.f32.xlu0 %v115
    %v117 = vpop.xlane.xlu0 %116
    %v118 = vsel %vm101, %v114, 0.0
    %119 = vadd.xlane.f32.xlu0 %v118
    %v120 = vpop.xlane.xlu0 %119
    %v121 = vmul.f32 %v117, %v108
    %v122 = vmul.f32 %v120, %v108
    %v123 = vadd.f32 %v121, 1e-05
    %v124 = vadd.f32 %v122, 1e-05
    %v125 = vrsqrt.pop %v123
    %v126 = vrsqrt.pop %v124
    %v127 = vmul.f32 %v111, %v125
    %v128 = vmul.f32 %v112, %v126
    %v130 = vlaneseq
    %v131 = vshrl.u32 %v130, 7
    %v132 = vsub.s32 0, %v131
    %v133 = vrot.slane %v99, %v132
    %v135 = vmul.f32 %v133, %v127
    %v136 = vmul.f32 %v133, %v128
    %v138 = vlaneseq
    %v139 = vshrl.u32 %v138, 7
    %v140 = vsub.s32 0, %v139
    %v141 = vrot.slane %v100, %v140
    %v143 = vadd.f32 %v135, %v141
    %v144 = vadd.f32 %v136, %v141
    %v145 = vld [vmem:[%s3] sm:$0xff]
    %v146 = vld [vmem:[%s3 + $0x8] sm:$0xff]
    %v147 = vld [vmem:[%s3 + $0x10] sm:$0xff]
    %v148 = vld [vmem:[%s3 + $0x18] sm:$0xff]
    %v150 = vsel %vm101, %v143, 0
    %v153 = vsel %vm101, %v144, 0
    %155 = vmatprep.subr.mxu0 0.0
    %156 = vmatpush1.msra.mxu0 0.0
    %157 = vmatprep.subr.mxu0 0.0
    %158 = vmatpush1.msra.mxu0 0.0
    %159 = vmatprep.subr.mxu0 0.0
    %160 = vmatpush1.msra.mxu0 0.0
    %161 = vmatprep.subr.mxu0 0.0
    %162 = vmatpush1.msra.mxu0 0.0
    %163 = vmatprep.subr.mxu0 0.0
    %164 = vmatpush1.msra.mxu0 0.0
    %165 = vmatprep.subr.mxu0 0.0
    %166 = vmatpush1.msra.mxu0 0.0
    %167 = vmatprep.subr.mxu0 0.0
    %168 = vmatpush1.msra.mxu0 0.0
    %169 = vmatprep.subr.mxu0 0.0
    %170 = vmatpush1.msra.mxu0 0.0
    %171 = vmatprep.subr.mxu0 0.0
    %172 = vmatpush1.msra.mxu0 0.0
    %173 = vmatprep.subr.mxu0 0.0
    %174 = vmatpush1.msra.mxu0 0.0
    %175 = vmatprep.subr.mxu0 0.0
    %176 = vmatpush1.msra.mxu0 0.0
    %177 = vmatprep.subr.mxu0 0.0
    %178 = vmatpush1.msra.mxu0 0.0
    %179 = vmatprep.subr.mxu0 0.0
    %180 = vmatpush1.msra.mxu0 %v148
    %181 = vmatprep.subr.mxu0 0.0
    %182 = vmatpush1.msra.mxu0 %v147
    %183 = vmatprep.subr.mxu0 0.0
    %184 = vmatpush1.msra.mxu0 %v146
    %185 = vmatprep.subr.mxu0 0.0
    %186 = vmatpush1.msra.mxu0 %v145
    %187 = vmatprep.subr.mxu0 0.0
    %188 = vmatpush2.msra.mxu0 0.0
    %189 = vmatprep.subr.mxu0 0.0
    %190 = vmatpush2.msra.mxu0 0.0
    %191 = vmatprep.subr.mxu0 0.0
    %192 = vmatpush2.msra.mxu0 0.0
    %193 = vmatprep.subr.mxu0 0.0
    %194 = vmatpush2.msra.mxu0 0.0
    %195 = vmatprep.subr.mxu0 0.0
    %196 = vmatpush2.msra.mxu0 0.0
    %197 = vmatprep.subr.mxu0 0.0
    %198 = vmatpush2.msra.mxu0 0.0
    %199 = vmatprep.subr.mxu0 0.0
    %200 = vmatpush2.msra.mxu0 0.0
    %201 = vmatprep.subr.mxu0 0.0
    %202 = vmatpush2.msra.mxu0 0.0
    %203 = vmatprep.subr.mxu0 0.0
    %204 = vmatpush2.msra.mxu0 0.0
    %205 = vmatprep.subr.mxu0 0.0
    %206 = vmatpush2.msra.mxu0 0.0
    %207 = vmatprep.subr.mxu0 0.0
    %208 = vmatpush2.msra.mxu0 0.0
    %209 = vmatprep.subr.mxu0 0.0
    %210 = vmatpush2.msra.mxu0 0.0
    %211 = vmatprep.subr.mxu0 0.0
    %212 = vmatpush2.msra.mxu0 0.0
    %213 = vmatprep.subr.mxu0 0.0
    %214 = vmatpush2.msra.mxu0 0.0
    %215 = vmatprep.subr.mxu0 0.0
    %216 = vmatpush2.msra.mxu0 0.0
    %217 = vmatprep.subr.mxu0 0.0
    %218 = vmatpush2.msra.mxu0 0.0
    %219 = vmatprep.mubr.f32.mxu0 0.0
    %220 = vmatmul.mubr.f32.gmra.mxu0 %v150
    %v221 = vpop.f32.mrf.mxu0
    %v222 = vadd.f32 0.0, %v221
    %v223 = vpop.f32.mrf.mxu0
    %224 = vmatprep.mubr.f32.mxu0 0.0
    %225 = vmatmul.mubr.f32.gmra.mxu0 %v153
    %v226 = vpop.f32.mrf.mxu0
    %v227 = vadd.f32 0.0, %v226
    %v228 = vpop.f32.mrf.mxu0
    %229 = vdwg.mxu0
    %v230 = vmul.f32 %v222, 0.25
    %v231 = vmul.f32 %v227, 0.25
    %233 = vrot.lane.b32.xlu0 %v222, 96
    %v234 = vpop.permute.xlu0 %233
    %vm235 = vcmask 130048
    %v237 = vsel %vm235, %v230, 0
    %v239 = vsel %vm235, %v234, 0
    %241 = vmatprep.subr.mxu0 0.0
    %242 = vmatpush1.xpose.msra.mxu0 0.0
    %243 = vmatprep.subr.mxu0 0.0
    %244 = vmatpush1.xpose.msra.mxu0 0.0
    %245 = vmatprep.subr.mxu0 0.0
    %246 = vmatpush1.xpose.msra.mxu0 0.0
    %247 = vmatprep.subr.mxu0 0.0
    %248 = vmatpush1.xpose.msra.mxu0 0.0
    %249 = vmatprep.subr.mxu0 0.0
    %250 = vmatpush1.xpose.msra.mxu0 0.0
    %251 = vmatprep.subr.mxu0 0.0
    %252 = vmatpush1.xpose.msra.mxu0 0.0
    %253 = vmatprep.subr.mxu0 0.0
    %254 = vmatpush1.xpose.msra.mxu0 0.0
    %255 = vmatprep.subr.mxu0 0.0
    %256 = vmatpush1.xpose.msra.mxu0 0.0
    %257 = vmatprep.subr.mxu0 0.0
    %258 = vmatpush1.xpose.msra.mxu0 0.0
    %259 = vmatprep.subr.mxu0 0.0
    %260 = vmatpush1.xpose.msra.mxu0 0.0
    %261 = vmatprep.subr.mxu0 0.0
    %262 = vmatpush1.xpose.msra.mxu0 0.0
    %263 = vmatprep.subr.mxu0 0.0
    %264 = vmatpush1.xpose.msra.mxu0 0.0
    %265 = vmatprep.subr.mxu0 0.0
    %266 = vmatpush1.xpose.msra.mxu0 0.0
    %267 = vmatprep.subr.mxu0 0.0
    %268 = vmatpush1.xpose.msra.mxu0 0.0
    %269 = vmatprep.subr.mxu0 0.0
    %270 = vmatpush1.xpose.msra.mxu0 0.0
    %271 = vmatprep.subr.mxu0 0.0
    %272 = vmatpush1.xpose.msra.mxu0 %v239
    %273 = vmatprep.subr.mxu0 0.0
    %274 = vmatpush2.xpose.msra.mxu0 0.0
    %275 = vmatprep.subr.mxu0 0.0
    %276 = vmatpush2.xpose.msra.mxu0 0.0
    %277 = vmatprep.subr.mxu0 0.0
    %278 = vmatpush2.xpose.msra.mxu0 0.0
    %279 = vmatprep.subr.mxu0 0.0
    %280 = vmatpush2.xpose.msra.mxu0 0.0
    %281 = vmatprep.subr.mxu0 0.0
    %282 = vmatpush2.xpose.msra.mxu0 0.0
    %283 = vmatprep.subr.mxu0 0.0
    %284 = vmatpush2.xpose.msra.mxu0 0.0
    %285 = vmatprep.subr.mxu0 0.0
    %286 = vmatpush2.xpose.msra.mxu0 0.0
    %287 = vmatprep.subr.mxu0 0.0
    %288 = vmatpush2.xpose.msra.mxu0 0.0
    %289 = vmatprep.subr.mxu0 0.0
    %290 = vmatpush2.xpose.msra.mxu0 0.0
    %291 = vmatprep.subr.mxu0 0.0
    %292 = vmatpush2.xpose.msra.mxu0 0.0
    %293 = vmatprep.subr.mxu0 0.0
    %294 = vmatpush2.xpose.msra.mxu0 0.0
    %295 = vmatprep.subr.mxu0 0.0
    %296 = vmatpush2.xpose.msra.mxu0 0.0
    %297 = vmatprep.subr.mxu0 0.0
    %298 = vmatpush2.xpose.msra.mxu0 0.0
    %299 = vmatprep.subr.mxu0 0.0
    %300 = vmatpush2.xpose.msra.mxu0 0.0
    %301 = vmatprep.subr.mxu0 0.0
    %302 = vmatpush2.xpose.msra.mxu0 0.0
    %303 = vmatprep.subr.mxu0 0.0
    %304 = vmatpush2.xpose.msra.mxu0 0.0
    %305 = vmatprep.mubr.f32.mxu0 0.0
    %306 = vmatmul.mubr.f32.gmra.mxu0 %v237
    %v307 = vpop.f32.mrf.mxu0
    %v308 = vadd.f32 0.0, %v307
    %v309 = vpop.f32.mrf.mxu0
    %310 = vdwg.mxu0
    %v311 = vsel %vm98, -inf, %v308
    %vm312 = vcmask 64512
    %v313 = vsel %vm312, %v311, -inf
    %314 = vmax.xlane.f32.xlu0 %v313
    %v315 = vpop.xlane.xlu0 %314
    %v316 = vsub.f32 %v311, %v315
    %v317 = vmul.f32 %v316, 1.442695
    %v318 = vpow.pop %v317
    %v319 = vsel %vm312, %v318, 0.0
    %320 = vadd.xlane.f32.xlu0 %v319
    %v321 = vpop.xlane.xlu0 %320
    %v322 = vrcp.pop %v321
    %v323 = vmul.f32 %v318, %v322
    %324 = vrot.lane.b32.xlu0 %v222, 64
    %v325 = vpop.permute.xlu0 %324
    %v328 = vsel %vm312, %v323, 0
    %330 = vmatprep.subr.mxu0 0.0
    %331 = vmatpush1.msra.mxu0 0.0
    %332 = vmatprep.subr.mxu0 0.0
    %333 = vmatpush1.msra.mxu0 0.0
    %334 = vmatprep.subr.mxu0 0.0
    %335 = vmatpush1.msra.mxu0 0.0
    %336 = vmatprep.subr.mxu0 0.0
    %337 = vmatpush1.msra.mxu0 0.0
    %338 = vmatprep.subr.mxu0 0.0
    %339 = vmatpush1.msra.mxu0 0.0
    %340 = vmatprep.subr.mxu0 0.0
    %341 = vmatpush1.msra.mxu0 0.0
    %342 = vmatprep.subr.mxu0 0.0
    %343 = vmatpush1.msra.mxu0 0.0
    %344 = vmatprep.subr.mxu0 0.0
    %345 = vmatpush1.msra.mxu0 0.0
    %346 = vmatprep.subr.mxu0 0.0
    %347 = vmatpush1.msra.mxu0 0.0
    %348 = vmatprep.subr.mxu0 0.0
    %349 = vmatpush1.msra.mxu0 0.0
    %350 = vmatprep.subr.mxu0 0.0
    %351 = vmatpush1.msra.mxu0 0.0
    %352 = vmatprep.subr.mxu0 0.0
    %353 = vmatpush1.msra.mxu0 0.0
    %354 = vmatprep.subr.mxu0 0.0
    %355 = vmatpush1.msra.mxu0 0.0
    %356 = vmatprep.subr.mxu0 0.0
    %357 = vmatpush1.msra.mxu0 0.0
    %358 = vmatprep.subr.mxu0 0.0
    %359 = vmatpush1.msra.mxu0 0.0
    %360 = vmatprep.subr.mxu0 0.0
    %361 = vmatpush1.msra.mxu0 %v325
    %362 = vmatprep.subr.mxu0 0.0
    %363 = vmatpush2.msra.mxu0 0.0
    %364 = vmatprep.subr.mxu0 0.0
    %365 = vmatpush2.msra.mxu0 0.0
    %366 = vmatprep.subr.mxu0 0.0
    %367 = vmatpush2.msra.mxu0 0.0
    %368 = vmatprep.subr.mxu0 0.0
    %369 = vmatpush2.msra.mxu0 0.0
    %370 = vmatprep.subr.mxu0 0.0
    %371 = vmatpush2.msra.mxu0 0.0
    %372 = vmatprep.subr.mxu0 0.0
    %373 = vmatpush2.msra.mxu0 0.0
    %374 = vmatprep.subr.mxu0 0.0
    %375 = vmatpush2.msra.mxu0 0.0
    %376 = vmatprep.subr.mxu0 0.0
    %377 = vmatpush2.msra.mxu0 0.0
    %378 = vmatprep.subr.mxu0 0.0
    %379 = vmatpush2.msra.mxu0 0.0
    %380 = vmatprep.subr.mxu0 0.0
    %381 = vmatpush2.msra.mxu0 0.0
    %382 = vmatprep.subr.mxu0 0.0
    %383 = vmatpush2.msra.mxu0 0.0
    %384 = vmatprep.subr.mxu0 0.0
    %385 = vmatpush2.msra.mxu0 0.0
    %386 = vmatprep.subr.mxu0 0.0
    %387 = vmatpush2.msra.mxu0 0.0
    %388 = vmatprep.subr.mxu0 0.0
    %389 = vmatpush2.msra.mxu0 0.0
    %390 = vmatprep.subr.mxu0 0.0
    %391 = vmatpush2.msra.mxu0 0.0
    %392 = vmatprep.subr.mxu0 0.0
    %393 = vmatpush2.msra.mxu0 0.0
    %394 = vmatprep.mubr.f32.mxu0 0.0
    %395 = vmatmul.mubr.f32.gmra.mxu0 %v328
    %v396 = vpop.f32.mrf.mxu0
    %v397 = vadd.f32 0.0, %v396
    %v398 = vpop.f32.mrf.mxu0
    %399 = vdwg.mxu0
    %400 = vst.msk [vmem:[#allocation2] sm:$0xff] %vm235, %v397
    %401 = vrot.lane.b32.xlu0 %v230, 112
    %v402 = vpop.permute.xlu0 %401
    %403 = vrot.lane.b32.xlu0 %v222, 80
    %v404 = vpop.permute.xlu0 %403
    %v405 = vsel %vm235, %v402, 0
    %v407 = vsel %vm235, %v404, 0
    %409 = vmatprep.subr.mxu0 0.0
    %410 = vmatpush1.xpose.msra.mxu0 0.0
    %411 = vmatprep.subr.mxu0 0.0
    %412 = vmatpush1.xpose.msra.mxu0 0.0
    %413 = vmatprep.subr.mxu0 0.0
    %414 = vmatpush1.xpose.msra.mxu0 0.0
    %415 = vmatprep.subr.mxu0 0.0
    %416 = vmatpush1.xpose.msra.mxu0 0.0
    %417 = vmatprep.subr.mxu0 0.0
    %418 = vmatpush1.xpose.msra.mxu0 0.0
    %419 = vmatprep.subr.mxu0 0.0
    %420 = vmatpush1.xpose.msra.mxu0 0.0
    %421 = vmatprep.subr.mxu0 0.0
    %422 = vmatpush1.xpose.msra.mxu0 0.0
    %423 = vmatprep.subr.mxu0 0.0
    %424 = vmatpush1.xpose.msra.mxu0 0.0
    %425 = vmatprep.subr.mxu0 0.0
    %426 = vmatpush1.xpose.msra.mxu0 0.0
    %427 = vmatprep.subr.mxu0 0.0
    %428 = vmatpush1.xpose.msra.mxu0 0.0
    %429 = vmatprep.subr.mxu0 0.0
    %430 = vmatpush1.xpose.msra.mxu0 0.0
    %431 = vmatprep.subr.mxu0 0.0
    %432 = vmatpush1.xpose.msra.mxu0 0.0
    %433 = vmatprep.subr.mxu0 0.0
    %434 = vmatpush1.xpose.msra.mxu0 0.0
    %435 = vmatprep.subr.mxu0 0.0
    %436 = vmatpush1.xpose.msra.mxu0 0.0
    %437 = vmatprep.subr.mxu0 0.0
    %438 = vmatpush1.xpose.msra.mxu0 0.0
    %439 = vmatprep.subr.mxu0 0.0
    %440 = vmatpush1.xpose.msra.mxu0 %v407
    %441 = vmatprep.subr.mxu0 0.0
    %442 = vmatpush2.xpose.msra.mxu0 0.0
    %443 = vmatprep.subr.mxu0 0.0
    %444 = vmatpush2.xpose.msra.mxu0 0.0
    %445 = vmatprep.subr.mxu0 0.0
    %446 = vmatpush2.xpose.msra.mxu0 0.0
    %447 = vmatprep.subr.mxu0 0.0
    %448 = vmatpush2.xpose.msra.mxu0 0.0
    %449 = vmatprep.subr.mxu0 0.0
    %450 = vmatpush2.xpose.msra.mxu0 0.0
    %451 = vmatprep.subr.mxu0 0.0
    %452 = vmatpush2.xpose.msra.mxu0 0.0
    %453 = vmatprep.subr.mxu0 0.0
    %454 = vmatpush2.xpose.msra.mxu0 0.0
    %455 = vmatprep.subr.mxu0 0.0
    %456 = vmatpush2.xpose.msra.mxu0 0.0
    %457 = vmatprep.subr.mxu0 0.0
    %458 = vmatpush2.xpose.msra.mxu0 0.0
    %459 = vmatprep.subr.mxu0 0.0
    %460 = vmatpush2.xpose.msra.mxu0 0.0
    %461 = vmatprep.subr.mxu0 0.0
    %462 = vmatpush2.xpose.msra.mxu0 0.0
    %463 = vmatprep.subr.mxu0 0.0
    %464 = vmatpush2.xpose.msra.mxu0 0.0
    %465 = vmatprep.subr.mxu0 0.0
    %466 = vmatpush2.xpose.msra.mxu0 0.0
    %467 = vmatprep.subr.mxu0 0.0
    %468 = vmatpush2.xpose.msra.mxu0 0.0
    %469 = vmatprep.subr.mxu0 0.0
    %470 = vmatpush2.xpose.msra.mxu0 0.0
    %471 = vmatprep.subr.mxu0 0.0
    %472 = vmatpush2.xpose.msra.mxu0 0.0
    %473 = vmatprep.mubr.f32.mxu0 0.0
    %474 = vmatmul.mubr.f32.gmra.mxu0 %v405
    %v475 = vpop.f32.mrf.mxu0
    %v476 = vadd.f32 0.0, %v475
    %v477 = vpop.f32.mrf.mxu0
    %478 = vdwg.mxu0
    %v479 = vsel %vm98, -inf, %v476
    %v480 = vsel %vm312, %v479, -inf
    %481 = vmax.xlane.f32.xlu0 %v480
    %v482 = vpop.xlane.xlu0 %481
    %v483 = vsub.f32 %v479, %v482
    %v484 = vmul.f32 %v483, 1.442695
    %v485 = vpow.pop %v484
    %v486 = vsel %vm312, %v485, 0.0
    %487 = vadd.xlane.f32.xlu0 %v486
    %v488 = vpop.xlane.xlu0 %487
    %v489 = vrcp.pop %v488
    %v490 = vmul.f32 %v485, %v489
    %491 = vrot.lane.b32.xlu0 %v222, 48
    %v492 = vpop.permute.xlu0 %491
    %v495 = vsel %vm312, %v490, 0
    %497 = vmatprep.subr.mxu0 0.0
    %498 = vmatpush1.msra.mxu0 0.0
    %499 = vmatprep.subr.mxu0 0.0
    %500 = vmatpush1.msra.mxu0 0.0
    %501 = vmatprep.subr.mxu0 0.0
    %502 = vmatpush1.msra.mxu0 0.0
    %503 = vmatprep.subr.mxu0 0.0
    %504 = vmatpush1.msra.mxu0 0.0
    %505 = vmatprep.subr.mxu0 0.0
    %506 = vmatpush1.msra.mxu0 0.0
    %507 = vmatprep.subr.mxu0 0.0
    %508 = vmatpush1.msra.mxu0 0.0
    %509 = vmatprep.subr.mxu0 0.0
    %510 = vmatpush1.msra.mxu0 0.0
    %511 = vmatprep.subr.mxu0 0.0
    %512 = vmatpush1.msra.mxu0 0.0
    %513 = vmatprep.subr.mxu0 0.0
    %514 = vmatpush1.msra.mxu0 0.0
    %515 = vmatprep.subr.mxu0 0.0
    %516 = vmatpush1.msra.mxu0 0.0
    %517 = vmatprep.subr.mxu0 0.0
    %518 = vmatpush1.msra.mxu0 0.0
    %519 = vmatprep.subr.mxu0 0.0
    %520 = vmatpush1.msra.mxu0 0.0
    %521 = vmatprep.subr.mxu0 0.0
    %522 = vmatpush1.msra.mxu0 0.0
    %523 = vmatprep.subr.mxu0 0.0
    %524 = vmatpush1.msra.mxu0 0.0
    %525 = vmatprep.subr.mxu0 0.0
    %526 = vmatpush1.msra.mxu0 0.0
    %527 = vmatprep.subr.mxu0 0.0
    %528 = vmatpush1.msra.mxu0 %v492
    %529 = vmatprep.subr.mxu0 0.0
    %530 = vmatpush2.msra.mxu0 0.0
    %531 = vmatprep.subr.mxu0 0.0
    %532 = vmatpush2.msra.mxu0 0.0
    %533 = vmatprep.subr.mxu0 0.0
    %534 = vmatpush2.msra.mxu0 0.0
    %535 = vmatprep.subr.mxu0 0.0
    %536 = vmatpush2.msra.mxu0 0.0
    %537 = vmatprep.subr.mxu0 0.0
    %538 = vmatpush2.msra.mxu0 0.0
    %539 = vmatprep.subr.mxu0 0.0
    %540 = vmatpush2.msra.mxu0 0.0
    %541 = vmatprep.subr.mxu0 0.0
    %542 = vmatpush2.msra.mxu0 0.0
    %543 = vmatprep.subr.mxu0 0.0
    %544 = vmatpush2.msra.mxu0 0.0
    %545 = vmatprep.subr.mxu0 0.0
    %546 = vmatpush2.msra.mxu0 0.0
    %547 = vmatprep.subr.mxu0 0.0
    %548 = vmatpush2.msra.mxu0 0.0
    %549 = vmatprep.subr.mxu0 0.0
    %550 = vmatpush2.msra.mxu0 0.0
    %551 = vmatprep.subr.mxu0 0.0
    %552 = vmatpush2.msra.mxu0 0.0
    %553 = vmatprep.subr.mxu0 0.0
    %554 = vmatpush2.msra.mxu0 0.0
    %555 = vmatprep.subr.mxu0 0.0
    %556 = vmatpush2.msra.mxu0 0.0
    %557 = vmatprep.subr.mxu0 0.0
    %558 = vmatpush2.msra.mxu0 0.0
    %559 = vmatprep.subr.mxu0 0.0
    %560 = vmatpush2.msra.mxu0 0.0
    %561 = vmatprep.mubr.f32.mxu0 0.0
    %562 = vmatmul.mubr.f32.gmra.mxu0 %v495
    %v563 = vpop.f32.mrf.mxu0
    %v564 = vadd.f32 0.0, %v563
    %v565 = vpop.f32.mrf.mxu0
    %566 = vdwg.mxu0
    %568 = vrot.lane.b32.xlu0 %v564, 16
    %v569 = vpop.permute.xlu0 %568
    %vm571 = vcmask 261248
    %572 = vst.msk [vmem:[#allocation2] sm:$0xff] %vm571, %v569
    %574 = vrot.lane.b32.xlu0 %v227, 96
    %v575 = vpop.permute.xlu0 %574
    %v577 = vsel %vm235, %v231, 0
    %v579 = vsel %vm235, %v575, 0
    %581 = vmatprep.subr.mxu0 0.0
    %582 = vmatpush1.xpose.msra.mxu0 0.0
    %583 = vmatprep.subr.mxu0 0.0
    %584 = vmatpush1.xpose.msra.mxu0 0.0
    %585 = vmatprep.subr.mxu0 0.0
    %586 = vmatpush1.xpose.msra.mxu0 0.0
    %587 = vmatprep.subr.mxu0 0.0
    %588 = vmatpush1.xpose.msra.mxu0 0.0
    %589 = vmatprep.subr.mxu0 0.0
    %590 = vmatpush1.xpose.msra.mxu0 0.0
    %591 = vmatprep.subr.mxu0 0.0
    %592 = vmatpush1.xpose.msra.mxu0 0.0
    %593 = vmatprep.subr.mxu0 0.0
    %594 = vmatpush1.xpose.msra.mxu0 0.0
    %595 = vmatprep.subr.mxu0 0.0
    %596 = vmatpush1.xpose.msra.mxu0 0.0
    %597 = vmatprep.subr.mxu0 0.0
    %598 = vmatpush1.xpose.msra.mxu0 0.0
    %599 = vmatprep.subr.mxu0 0.0
    %600 = vmatpush1.xpose.msra.mxu0 0.0
    %601 = vmatprep.subr.mxu0 0.0
    %602 = vmatpush1.xpose.msra.mxu0 0.0
    %603 = vmatprep.subr.mxu0 0.0
    %604 = vmatpush1.xpose.msra.mxu0 0.0
    %605 = vmatprep.subr.mxu0 0.0
    %606 = vmatpush1.xpose.msra.mxu0 0.0
    %607 = vmatprep.subr.mxu0 0.0
    %608 = vmatpush1.xpose.msra.mxu0 0.0
    %609 = vmatprep.subr.mxu0 0.0
    %610 = vmatpush1.xpose.msra.mxu0 0.0
    %611 = vmatprep.subr.mxu0 0.0
    %612 = vmatpush1.xpose.msra.mxu0 %v579
    %613 = vmatprep.subr.mxu0 0.0
    %614 = vmatpush2.xpose.msra.mxu0 0.0
    %615 = vmatprep.subr.mxu0 0.0
    %616 = vmatpush2.xpose.msra.mxu0 0.0
    %617 = vmatprep.subr.mxu0 0.0
    %618 = vmatpush2.xpose.msra.mxu0 0.0
    %619 = vmatprep.subr.mxu0 0.0
    %620 = vmatpush2.xpose.msra.mxu0 0.0
    %621 = vmatprep.subr.mxu0 0.0
    %622 = vmatpush2.xpose.msra.mxu0 0.0
    %623 = vmatprep.subr.mxu0 0.0
    %624 = vmatpush2.xpose.msra.mxu0 0.0
    %625 = vmatprep.subr.mxu0 0.0
    %626 = vmatpush2.xpose.msra.mxu0 0.0
    %627 = vmatprep.subr.mxu0 0.0
    %628 = vmatpush2.xpose.msra.mxu0 0.0
    %629 = vmatprep.subr.mxu0 0.0
    %630 = vmatpush2.xpose.msra.mxu0 0.0
    %631 = vmatprep.subr.mxu0 0.0
    %632 = vmatpush2.xpose.msra.mxu0 0.0
    %633 = vmatprep.subr.mxu0 0.0
    %634 = vmatpush2.xpose.msra.mxu0 0.0
    %635 = vmatprep.subr.mxu0 0.0
    %636 = vmatpush2.xpose.msra.mxu0 0.0
    %637 = vmatprep.subr.mxu0 0.0
    %638 = vmatpush2.xpose.msra.mxu0 0.0
    %639 = vmatprep.subr.mxu0 0.0
    %640 = vmatpush2.xpose.msra.mxu0 0.0
    %641 = vmatprep.subr.mxu0 0.0
    %642 = vmatpush2.xpose.msra.mxu0 0.0
    %643 = vmatprep.subr.mxu0 0.0
    %644 = vmatpush2.xpose.msra.mxu0 0.0
    %645 = vmatprep.mubr.f32.mxu0 0.0
    %646 = vmatmul.mubr.f32.gmra.mxu0 %v577
    %v647 = vpop.f32.mrf.mxu0
    %v648 = vadd.f32 0.0, %v647
    %v649 = vpop.f32.mrf.mxu0
    %650 = vdwg.mxu0
    %v651 = vsel %vm98, -inf, %v648
    %v652 = vsel %vm312, %v651, -inf
    %653 = vmax.xlane.f32.xlu0 %v652
    %v654 = vpop.xlane.xlu0 %653
    %v655 = vsub.f32 %v651, %v654
    %v656 = vmul.f32 %v655, 1.442695
    %v657 = vpow.pop %v656
    %v658 = vsel %vm312, %v657, 0.0
    %659 = vadd.xlane.f32.xlu0 %v658
    %v660 = vpop.xlane.xlu0 %659
    %v661 = vrcp.pop %v660
    %v662 = vmul.f32 %v657, %v661
    %663 = vrot.lane.b32.xlu0 %v227, 64
    %v664 = vpop.permute.xlu0 %663
    %v667 = vsel %vm312, %v662, 0
    %669 = vmatprep.subr.mxu0 0.0
    %670 = vmatpush1.msra.mxu0 0.0
    %671 = vmatprep.subr.mxu0 0.0
    %672 = vmatpush1.msra.mxu0 0.0
    %673 = vmatprep.subr.mxu0 0.0
    %674 = vmatpush1.msra.mxu0 0.0
    %675 = vmatprep.subr.mxu0 0.0
    %676 = vmatpush1.msra.mxu0 0.0
    %677 = vmatprep.subr.mxu0 0.0
    %678 = vmatpush1.msra.mxu0 0.0
    %679 = vmatprep.subr.mxu0 0.0
    %680 = vmatpush1.msra.mxu0 0.0
    %681 = vmatprep.subr.mxu0 0.0
    %682 = vmatpush1.msra.mxu0 0.0
    %683 = vmatprep.subr.mxu0 0.0
    %684 = vmatpush1.msra.mxu0 0.0
    %685 = vmatprep.subr.mxu0 0.0
    %686 = vmatpush1.msra.mxu0 0.0
    %687 = vmatprep.subr.mxu0 0.0
    %688 = vmatpush1.msra.mxu0 0.0
    %689 = vmatprep.subr.mxu0 0.0
    %690 = vmatpush1.msra.mxu0 0.0
    %691 = vmatprep.subr.mxu0 0.0
    %692 = vmatpush1.msra.mxu0 0.0
    %693 = vmatprep.subr.mxu0 0.0
    %694 = vmatpush1.msra.mxu0 0.0
    %695 = vmatprep.subr.mxu0 0.0
    %696 = vmatpush1.msra.mxu0 0.0
    %697 = vmatprep.subr.mxu0 0.0
    %698 = vmatpush1.msra.mxu0 0.0
    %699 = vmatprep.subr.mxu0 0.0
    %700 = vmatpush1.msra.mxu0 %v664
    %701 = vmatprep.subr.mxu0 0.0
    %702 = vmatpush2.msra.mxu0 0.0
    %703 = vmatprep.subr.mxu0 0.0
    %704 = vmatpush2.msra.mxu0 0.0
    %705 = vmatprep.subr.mxu0 0.0
    %706 = vmatpush2.msra.mxu0 0.0
    %707 = vmatprep.subr.mxu0 0.0
    %708 = vmatpush2.msra.mxu0 0.0
    %709 = vmatprep.subr.mxu0 0.0
    %710 = vmatpush2.msra.mxu0 0.0
    %711 = vmatprep.subr.mxu0 0.0
    %712 = vmatpush2.msra.mxu0 0.0
    %713 = vmatprep.subr.mxu0 0.0
    %714 = vmatpush2.msra.mxu0 0.0
    %715 = vmatprep.subr.mxu0 0.0
    %716 = vmatpush2.msra.mxu0 0.0
    %717 = vmatprep.subr.mxu0 0.0
    %718 = vmatpush2.msra.mxu0 0.0
    %719 = vmatprep.subr.mxu0 0.0
    %720 = vmatpush2.msra.mxu0 0.0
    %721 = vmatprep.subr.mxu0 0.0
    %722 = vmatpush2.msra.mxu0 0.0
    %723 = vmatprep.subr.mxu0 0.0
    %724 = vmatpush2.msra.mxu0 0.0
    %725 = vmatprep.subr.mxu0 0.0
    %726 = vmatpush2.msra.mxu0 0.0
    %727 = vmatprep.subr.mxu0 0.0
    %728 = vmatpush2.msra.mxu0 0.0
    %729 = vmatprep.subr.mxu0 0.0
    %730 = vmatpush2.msra.mxu0 0.0
    %731 = vmatprep.subr.mxu0 0.0
    %732 = vmatpush2.msra.mxu0 0.0
    %733 = vmatprep.mubr.f32.mxu0 0.0
    %734 = vmatmul.mubr.f32.gmra.mxu0 %v667
    %v735 = vpop.f32.mrf.mxu0
    %v736 = vadd.f32 0.0, %v735
    %v737 = vpop.f32.mrf.mxu0
    %738 = vdwg.mxu0
    %739 = vst.msk [vmem:[#allocation2 + $0x8] sm:$0xff] %vm235, %v736
    %740 = vrot.lane.b32.xlu0 %v231, 112
    %v741 = vpop.permute.xlu0 %740
    %742 = vrot.lane.b32.xlu0 %v227, 80
    %v743 = vpop.permute.xlu0 %742
    %v744 = vsel %vm235, %v741, 0
    %v746 = vsel %vm235, %v743, 0
    %748 = vmatprep.subr.mxu0 0.0
    %749 = vmatpush1.xpose.msra.mxu0 0.0
    %750 = vmatprep.subr.mxu0 0.0
    %751 = vmatpush1.xpose.msra.mxu0 0.0
    %752 = vmatprep.subr.mxu0 0.0
    %753 = vmatpush1.xpose.msra.mxu0 0.0
    %754 = vmatprep.subr.mxu0 0.0
    %755 = vmatpush1.xpose.msra.mxu0 0.0
    %756 = vmatprep.subr.mxu0 0.0
    %757 = vmatpush1.xpose.msra.mxu0 0.0
    %758 = vmatprep.subr.mxu0 0.0
    %759 = vmatpush1.xpose.msra.mxu0 0.0
    %760 = vmatprep.subr.mxu0 0.0
    %761 = vmatpush1.xpose.msra.mxu0 0.0
    %762 = vmatprep.subr.mxu0 0.0
    %763 = vmatpush1.xpose.msra.mxu0 0.0
    %764 = vmatprep.subr.mxu0 0.0
    %765 = vmatpush1.xpose.msra.mxu0 0.0
    %766 = vmatprep.subr.mxu0 0.0
    %767 = vmatpush1.xpose.msra.mxu0 0.0
    %768 = vmatprep.subr.mxu0 0.0
    %769 = vmatpush1.xpose.msra.mxu0 0.0
    %770 = vmatprep.subr.mxu0 0.0
    %771 = vmatpush1.xpose.msra.mxu0 0.0
    %772 = vmatprep.subr.mxu0 0.0
    %773 = vmatpush1.xpose.msra.mxu0 0.0
    %774 = vmatprep.subr.mxu0 0.0
    %775 = vmatpush1.xpose.msra.mxu0 0.0
    %776 = vmatprep.subr.mxu0 0.0
    %777 = vmatpush1.xpose.msra.mxu0 0.0
    %778 = vmatprep.subr.mxu0 0.0
    %779 = vmatpush1.xpose.msra.mxu0 %v746
    %780 = vmatprep.subr.mxu0 0.0
    %781 = vmatpush2.xpose.msra.mxu0 0.0
    %782 = vmatprep.subr.mxu0 0.0
    %783 = vmatpush2.xpose.msra.mxu0 0.0
    %784 = vmatprep.subr.mxu0 0.0
    %785 = vmatpush2.xpose.msra.mxu0 0.0
    %786 = vmatprep.subr.mxu0 0.0
    %787 = vmatpush2.xpose.msra.mxu0 0.0
    %788 = vmatprep.subr.mxu0 0.0
    %789 = vmatpush2.xpose.msra.mxu0 0.0
    %790 = vmatprep.subr.mxu0 0.0
    %791 = vmatpush2.xpose.msra.mxu0 0.0
    %792 = vmatprep.subr.mxu0 0.0
    %793 = vmatpush2.xpose.msra.mxu0 0.0
    %794 = vmatprep.subr.mxu0 0.0
    %795 = vmatpush2.xpose.msra.mxu0 0.0
    %796 = vmatprep.subr.mxu0 0.0
    %797 = vmatpush2.xpose.msra.mxu0 0.0
    %798 = vmatprep.subr.mxu0 0.0
    %799 = vmatpush2.xpose.msra.mxu0 0.0
    %800 = vmatprep.subr.mxu0 0.0
    %801 = vmatpush2.xpose.msra.mxu0 0.0
    %802 = vmatprep.subr.mxu0 0.0
    %803 = vmatpush2.xpose.msra.mxu0 0.0
    %804 = vmatprep.subr.mxu0 0.0
    %805 = vmatpush2.xpose.msra.mxu0 0.0
    %806 = vmatprep.subr.mxu0 0.0
    %807 = vmatpush2.xpose.msra.mxu0 0.0
    %808 = vmatprep.subr.mxu0 0.0
    %809 = vmatpush2.xpose.msra.mxu0 0.0
    %810 = vmatprep.subr.mxu0 0.0
    %811 = vmatpush2.xpose.msra.mxu0 0.0
    %812 = vmatprep.mubr.f32.mxu0 0.0
    %813 = vmatmul.mubr.f32.gmra.mxu0 %v744
    %v814 = vpop.f32.mrf.mxu0
    %v815 = vadd.f32 0.0, %v814
    %v816 = vpop.f32.mrf.mxu0
    %817 = vdwg.mxu0
    %v818 = vsel %vm98, -inf, %v815
    %v819 = vsel %vm312, %v818, -inf
    %820 = vmax.xlane.f32.xlu0 %v819
    %v821 = vpop.xlane.xlu0 %820
    %v822 = vsub.f32 %v818, %v821
    %v823 = vmul.f32 %v822, 1.442695
    %v824 = vpow.pop %v823
    %v825 = vsel %vm312, %v824, 0.0
    %826 = vadd.xlane.f32.xlu0 %v825
    %v827 = vpop.xlane.xlu0 %826
    %v828 = vrcp.pop %v827
    %v829 = vmul.f32 %v824, %v828
    %830 = vrot.lane.b32.xlu0 %v227, 48
    %v831 = vpop.permute.xlu0 %830
    %v834 = vsel %vm312, %v829, 0
    %836 = vmatprep.subr.mxu0 0.0
    %837 = vmatpush1.msra.mxu0 0.0
    %838 = vmatprep.subr.mxu0 0.0
    %839 = vmatpush1.msra.mxu0 0.0
    %840 = vmatprep.subr.mxu0 0.0
    %841 = vmatpush1.msra.mxu0 0.0
    %842 = vmatprep.subr.mxu0 0.0
    %843 = vmatpush1.msra.mxu0 0.0
    %844 = vmatprep.subr.mxu0 0.0
    %845 = vmatpush1.msra.mxu0 0.0
    %846 = vmatprep.subr.mxu0 0.0
    %847 = vmatpush1.msra.mxu0 0.0
    %848 = vmatprep.subr.mxu0 0.0
    %849 = vmatpush1.msra.mxu0 0.0
    %850 = vmatprep.subr.mxu0 0.0
    %851 = vmatpush1.msra.mxu0 0.0
    %852 = vmatprep.subr.mxu0 0.0
    %853 = vmatpush1.msra.mxu0 0.0
    %854 = vmatprep.subr.mxu0 0.0
    %855 = vmatpush1.msra.mxu0 0.0
    %856 = vmatprep.subr.mxu0 0.0
    %857 = vmatpush1.msra.mxu0 0.0
    %858 = vmatprep.subr.mxu0 0.0
    %859 = vmatpush1.msra.mxu0 0.0
    %860 = vmatprep.subr.mxu0 0.0
    %861 = vmatpush1.msra.mxu0 0.0
    %862 = vmatprep.subr.mxu0 0.0
    %863 = vmatpush1.msra.mxu0 0.0
    %864 = vmatprep.subr.mxu0 0.0
    %865 = vmatpush1.msra.mxu0 0.0
    %866 = vmatprep.subr.mxu0 0.0
    %867 = vmatpush1.msra.mxu0 %v831
    %868 = vmatprep.subr.mxu0 0.0
    %869 = vmatpush2.msra.mxu0 0.0
    %870 = vmatprep.subr.mxu0 0.0
    %871 = vmatpush2.msra.mxu0 0.0
    %872 = vmatprep.subr.mxu0 0.0
    %873 = vmatpush2.msra.mxu0 0.0
    %874 = vmatprep.subr.mxu0 0.0
    %875 = vmatpush2.msra.mxu0 0.0
    %876 = vmatprep.subr.mxu0 0.0
    %877 = vmatpush2.msra.mxu0 0.0
    %878 = vmatprep.subr.mxu0 0.0
    %879 = vmatpush2.msra.mxu0 0.0
    %880 = vmatprep.subr.mxu0 0.0
    %881 = vmatpush2.msra.mxu0 0.0
    %882 = vmatprep.subr.mxu0 0.0
    %883 = vmatpush2.msra.mxu0 0.0
    %884 = vmatprep.subr.mxu0 0.0
    %885 = vmatpush2.msra.mxu0 0.0
    %886 = vmatprep.subr.mxu0 0.0
    %887 = vmatpush2.msra.mxu0 0.0
    %888 = vmatprep.subr.mxu0 0.0
    %889 = vmatpush2.msra.mxu0 0.0
    %890 = vmatprep.subr.mxu0 0.0
    %891 = vmatpush2.msra.mxu0 0.0
    %892 = vmatprep.subr.mxu0 0.0
    %893 = vmatpush2.msra.mxu0 0.0
    %894 = vmatprep.subr.mxu0 0.0
    %895 = vmatpush2.msra.mxu0 0.0
    %896 = vmatprep.subr.mxu0 0.0
    %897 = vmatpush2.msra.mxu0 0.0
    %898 = vmatprep.subr.mxu0 0.0
    %899 = vmatpush2.msra.mxu0 0.0
    %900 = vmatprep.mubr.f32.mxu0 0.0
    %901 = vmatmul.mubr.f32.gmra.mxu0 %v834
    %v902 = vpop.f32.mrf.mxu0
    %v903 = vadd.f32 0.0, %v902
    %v904 = vpop.f32.mrf.mxu0
    %905 = vdwg.mxu0
    %907 = vrot.lane.b32.xlu0 %v903, 16
    %v908 = vpop.permute.xlu0 %907
    %910 = vst.msk [vmem:[#allocation2 + $0x8] sm:$0xff] %vm571, %v908
    %v911 = vld [vmem:[#allocation2] sm:$0xff]
    %v912 = vld [vmem:[#allocation2 + $0x8] sm:$0xff]
    %v913 = vld [vmem:[%s4] sm:$0xff]
    %v914 = vld [vmem:[%s4 + $0x8] sm:$0xff]
    %v915 = vld [vmem:[%s4 + $0x10] sm:$0xff]
    %v916 = vld [vmem:[%s4 + $0x18] sm:$0xff]
    %v917 = vld [vmem:[%s5] sm:$0x1]
    %v919 = vlaneseq
    %v920 = vshrl.u32 %v919, 7
    %v921 = vsub.s32 0, %v920
    %v922 = vrot.slane %v917, %v921
    %v925 = vsel %vm101, %v911, 0
    %v928 = vsel %vm101, %v912, 0
    %930 = vmatprep.subr.mxu0 0.0
    %931 = vmatpush1.msra.mxu0 0.0
    %932 = vmatprep.subr.mxu0 0.0
    %933 = vmatpush1.msra.mxu0 0.0
    %934 = vmatprep.subr.mxu0 0.0
    %935 = vmatpush1.msra.mxu0 0.0
    %936 = vmatprep.subr.mxu0 0.0
    %937 = vmatpush1.msra.mxu0 0.0
    %938 = vmatprep.subr.mxu0 0.0
    %939 = vmatpush1.msra.mxu0 0.0
    %940 = vmatprep.subr.mxu0 0.0
    %941 = vmatpush1.msra.mxu0 0.0
    %942 = vmatprep.subr.mxu0 0.0
    %943 = vmatpush1.msra.mxu0 0.0
    %944 = vmatprep.subr.mxu0 0.0
    %945 = vmatpush1.msra.mxu0 0.0
    %946 = vmatprep.subr.mxu0 0.0
    %947 = vmatpush1.msra.mxu0 0.0
    %948 = vmatprep.subr.mxu0 0.0
    %949 = vmatpush1.msra.mxu0 0.0
    %950 = vmatprep.subr.mxu0 0.0
    %951 = vmatpush1.msra.mxu0 0.0
    %952 = vmatprep.subr.mxu0 0.0
    %953 = vmatpush1.msra.mxu0 0.0
    %954 = vmatprep.subr.mxu0 0.0
    %955 = vmatpush1.msra.mxu0 %v916
    %956 = vmatprep.subr.mxu0 0.0
    %957 = vmatpush1.msra.mxu0 %v915
    %958 = vmatprep.subr.mxu0 0.0
    %959 = vmatpush1.msra.mxu0 %v914
    %960 = vmatprep.subr.mxu0 0.0
    %961 = vmatpush1.msra.mxu0 %v913
    %962 = vmatprep.subr.mxu0 0.0
    %963 = vmatpush2.msra.mxu0 0.0
    %964 = vmatprep.subr.mxu0 0.0
    %965 = vmatpush2.msra.mxu0 0.0
    %966 = vmatprep.subr.mxu0 0.0
    %967 = vmatpush2.msra.mxu0 0.0
    %968 = vmatprep.subr.mxu0 0.0
    %969 = vmatpush2.msra.mxu0 0.0
    %970 = vmatprep.subr.mxu0 0.0
    %971 = vmatpush2.msra.mxu0 0.0
    %972 = vmatprep.subr.mxu0 0.0
    %973 = vmatpush2.msra.mxu0 0.0
    %974 = vmatprep.subr.mxu0 0.0
    %975 = vmatpush2.msra.mxu0 0.0
    %976 = vmatprep.subr.mxu0 0.0
    %977 = vmatpush2.msra.mxu0 0.0
    %978 = vmatprep.subr.mxu0 0.0
    %979 = vmatpush2.msra.mxu0 0.0
    %980 = vmatprep.subr.mxu0 0.0
    %981 = vmatpush2.msra.mxu0 0.0
    %982 = vmatprep.subr.mxu0 0.0
    %983 = vmatpush2.msra.mxu0 0.0
    %984 = vmatprep.subr.mxu0 0.0
    %985 = vmatpush2.msra.mxu0 0.0
    %986 = vmatprep.subr.mxu0 0.0
    %987 = vmatpush2.msra.mxu0 0.0
    %988 = vmatprep.subr.mxu0 0.0
    %989 = vmatpush2.msra.mxu0 0.0
    %990 = vmatprep.subr.mxu0 0.0
    %991 = vmatpush2.msra.mxu0 0.0
    %992 = vmatprep.subr.mxu0 0.0
    %993 = vmatpush2.msra.mxu0 0.0
    %994 = vmatprep.mubr.f32.mxu0 0.0
    %995 = vmatmul.mubr.f32.gmra.mxu0 %v925
    %v996 = vpop.f32.mrf.mxu0
    %v997 = vadd.f32 %v922, %v996
    %v998 = vpop.f32.mrf.mxu0
    %999 = vmatprep.mubr.f32.mxu0 0.0
    %1000 = vmatmul.mubr.f32.gmra.mxu0 %v928
    %v1001 = vpop.f32.mrf.mxu0
    %v1002 = vadd.f32 %v922, %v1001
    %v1003 = vpop.f32.mrf.mxu0
    %1004 = vdwg.mxu0
    %v1005 = vadd.f32 %v92, %v997
    %v1006 = vadd.f32 %v93, %v1002
    %v1007 = vld [vmem:[%s6] sm:$0x1]
    %v1008 = vld [vmem:[%s7] sm:$0x1]
    %v1009 = vsel %vm101, %v1005, 0.0
    %1010 = vadd.xlane.f32.xlu0 %v1009
    %v1011 = vpop.xlane.xlu0 %1010
    %v1012 = vsel %vm101, %v1006, 0.0
    %1013 = vadd.xlane.f32.xlu0 %v1012
    %v1014 = vpop.xlane.xlu0 %1013
    %v1015 = vmul.f32 %v1011, %v108
    %v1016 = vmul.f32 %v1014, %v108
    %v1017 = vsub.f32 %v1005, %v1015
    %v1018 = vsub.f32 %v1006, %v1016
    %v1019 = vmul.f32 %v1017, %v1017
    %v1020 = vmul.f32 %v1018, %v1018
    %v1021 = vsel %vm101, %v1019, 0.0
    %1022 = vadd.xlane.f32.xlu0 %v1021
    %v1023 = vpop.xlane.xlu0 %1022
    %v1024 = vsel %vm101, %v1020, 0.0
    %1025 = vadd.xlane.f32.xlu0 %v1024
    %v1026 = vpop.xlane.xlu0 %1025
    %v1027 = vmul.f32 %v1023, %v108
    %v1028 = vmul.f32 %v1026, %v108
    %v1029 = vadd.f32 %v1027, 1e-05
    %v1030 = vadd.f32 %v1028, 1e-05
    %v1031 = vrsqrt.pop %v1029
    %v1032 = vrsqrt.pop %v1030
    %v1033 = vmul.f32 %v1017, %v1031
    %v1034 = vmul.f32 %v1018, %v1032
    %v1036 = vlaneseq
    %v1037 = vshrl.u32 %v1036, 7
    %v1038 = vsub.s32 0, %v1037
    %v1039 = vrot.slane %v1007, %v1038
    %v1041 = vmul.f32 %v1039, %v1033
    %v1042 = vmul.f32 %v1039, %v1034
    %v1044 = vlaneseq
    %v1045 = vshrl.u32 %v1044, 7
    %v1046 = vsub.s32 0, %v1045
    %v1047 = vrot.slane %v1008, %v1046
    %v1049 = vadd.f32 %v1041, %v1047
    %v1050 = vadd.f32 %v1042, %v1047
    %v1051 = vld [vmem:[%s8] sm:$0xff]
    %v1052 = vld [vmem:[%s8 + $0x8] sm:$0xff]
    %v1053 = vld [vmem:[%s8 + $0x10] sm:$0xff]
    %v1054 = vld [vmem:[%s8 + $0x18] sm:$0xff]
    %v1055 = vld [vmem:[%s9] sm:$0x1]
    %v1057 = vlaneseq
    %v1058 = vshrl.u32 %v1057, 7
    %v1059 = vsub.s32 0, %v1058
    %v1060 = vrot.slane %v1055, %v1059
    %v1063 = vsel %vm101, %v1049, 0
    %v1066 = vsel %vm101, %v1050, 0
    %1068 = vmatprep.subr.mxu0 0.0
    %1069 = vmatpush1.msra.mxu0 0.0
    %1070 = vmatprep.subr.mxu0 0.0
    %1071 = vmatpush1.msra.mxu0 0.0
    %1072 = vmatprep.subr.mxu0 0.0
    %1073 = vmatpush1.msra.mxu0 0.0
    %1074 = vmatprep.subr.mxu0 0.0
    %1075 = vmatpush1.msra.mxu0 0.0
    %1076 = vmatprep.subr.mxu0 0.0
    %1077 = vmatpush1.msra.mxu0 0.0
    %1078 = vmatprep.subr.mxu0 0.0
    %1079 = vmatpush1.msra.mxu0 0.0
    %1080 = vmatprep.subr.mxu0 0.0
    %1081 = vmatpush1.msra.mxu0 0.0
    %1082 = vmatprep.subr.mxu0 0.0
    %1083 = vmatpush1.msra.mxu0 0.0
    %1084 = vmatprep.subr.mxu0 0.0
    %1085 = vmatpush1.msra.mxu0 0.0
    %1086 = vmatprep.subr.mxu0 0.0
    %1087 = vmatpush1.msra.mxu0 0.0
    %1088 = vmatprep.subr.mxu0 0.0
    %1089 = vmatpush1.msra.mxu0 0.0
    %1090 = vmatprep.subr.mxu0 0.0
    %1091 = vmatpush1.msra.mxu0 0.0
    %1092 = vmatprep.subr.mxu0 0.0
    %1093 = vmatpush1.msra.mxu0 %v1054
    %1094 = vmatprep.subr.mxu0 0.0
    %1095 = vmatpush1.msra.mxu0 %v1053
    %1096 = vmatprep.subr.mxu0 0.0
    %1097 = vmatpush1.msra.mxu0 %v1052
    %1098 = vmatprep.subr.mxu0 0.0
    %1099 = vmatpush1.msra.mxu0 %v1051
    %1100 = vmatprep.subr.mxu0 0.0
    %1101 = vmatpush2.msra.mxu0 0.0
    %1102 = vmatprep.subr.mxu0 0.0
    %1103 = vmatpush2.msra.mxu0 0.0
    %1104 = vmatprep.subr.mxu0 0.0
    %1105 = vmatpush2.msra.mxu0 0.0
    %1106 = vmatprep.subr.mxu0 0.0
    %1107 = vmatpush2.msra.mxu0 0.0
    %1108 = vmatprep.subr.mxu0 0.0
    %1109 = vmatpush2.msra.mxu0 0.0
    %1110 = vmatprep.subr.mxu0 0.0
    %1111 = vmatpush2.msra.mxu0 0.0
    %1112 = vmatprep.subr.mxu0 0.0
    %1113 = vmatpush2.msra.mxu0 0.0
    %1114 = vmatprep.subr.mxu0 0.0
    %1115 = vmatpush2.msra.mxu0 0.0
    %1116 = vmatprep.subr.mxu0 0.0
    %1117 = vmatpush2.msra.mxu0 0.0
    %1118 = vmatprep.subr.mxu0 0.0
    %1119 = vmatpush2.msra.mxu0 0.0
    %1120 = vmatprep.subr.mxu0 0.0
    %1121 = vmatpush2.msra.mxu0 0.0
    %1122 = vmatprep.subr.mxu0 0.0
    %1123 = vmatpush2.msra.mxu0 0.0
    %1124 = vmatprep.subr.mxu0 0.0
    %1125 = vmatpush2.msra.mxu0 0.0
    %1126 = vmatprep.subr.mxu0 0.0
    %1127 = vmatpush2.msra.mxu0 0.0
    %1128 = vmatprep.subr.mxu0 0.0
    %1129 = vmatpush2.msra.mxu0 0.0
    %1130 = vmatprep.subr.mxu0 0.0
    %1131 = vmatpush2.msra.mxu0 0.0
    %1132 = vmatprep.mubr.f32.mxu0 0.0
    %1133 = vmatmul.mubr.f32.gmra.mxu0 %v1063
    %v1134 = vpop.f32.mrf.mxu0
    %v1135 = vadd.f32 %v1060, %v1134
    %v1136 = vpop.f32.mrf.mxu0
    %1137 = vmatprep.mubr.f32.mxu0 0.0
    %1138 = vmatmul.mubr.f32.gmra.mxu0 %v1066
    %v1139 = vpop.f32.mrf.mxu0
    %v1140 = vadd.f32 %v1060, %v1139
    %v1141 = vpop.f32.mrf.mxu0
    %1142 = vdwg.mxu0
    %v1143 = vmul.f32 %v1135, 0.5
    %v1144 = vmul.f32 %v1140, 0.5
    %v1145 = vmul.f32 %v1135, 0.70710677
    %v1146 = vmul.f32 %v1140, 0.70710677
    %v1147 = verf.f32.pop %v1145
    %v1148 = verf.f32.pop %v1146
    %v1149 = vadd.f32 %v1147, 1.0
    %v1150 = vadd.f32 %v1148, 1.0
    %v1151 = vmul.f32 %v1143, %v1149
    %v1152 = vmul.f32 %v1144, %v1150
    %v1153 = vld [vmem:[%s10] sm:$0xff]
    %v1154 = vld [vmem:[%s10 + $0x8] sm:$0xff]
    %v1155 = vld [vmem:[%s10 + $0x10] sm:$0xff]
    %v1156 = vld [vmem:[%s10 + $0x18] sm:$0xff]
    %v1157 = vld [vmem:[%s10 + $0x20] sm:$0xff]
    %v1158 = vld [vmem:[%s10 + $0x28] sm:$0xff]
    %v1159 = vld [vmem:[%s10 + $0x30] sm:$0xff]
    %v1160 = vld [vmem:[%s10 + $0x38] sm:$0xff]
    %v1161 = vld [vmem:[%s11] sm:$0x1]
    %v1163 = vlaneseq
    %v1164 = vshrl.u32 %v1163, 7
    %v1165 = vsub.s32 0, %v1164
    %v1166 = vrot.slane %v1161, %v1165
    %vm1168 = vcmask 523264
    %v1170 = vsel %vm1168, %v1151, 0
    %v1173 = vsel %vm1168, %v1152, 0
    %1175 = vmatprep.subr.mxu0 0.0
    %1176 = vmatpush1.msra.mxu0 0.0
    %1177 = vmatprep.subr.mxu0 0.0
    %1178 = vmatpush1.msra.mxu0 0.0
    %1179 = vmatprep.subr.mxu0 0.0
    %1180 = vmatpush1.msra.mxu0 0.0
    %1181 = vmatprep.subr.mxu0 0.0
    %1182 = vmatpush1.msra.mxu0 0.0
    %1183 = vmatprep.subr.mxu0 0.0
    %1184 = vmatpush1.msra.mxu0 0.0
    %1185 = vmatprep.subr.mxu0 0.0
    %1186 = vmatpush1.msra.mxu0 0.0
    %1187 = vmatprep.subr.mxu0 0.0
    %1188 = vmatpush1.msra.mxu0 0.0
    %1189 = vmatprep.subr.mxu0 0.0
    %1190 = vmatpush1.msra.mxu0 0.0
    %1191 = vmatprep.subr.mxu0 0.0
    %1192 = vmatpush1.msra.mxu0 %v1160
    %1193 = vmatprep.subr.mxu0 0.0
    %1194 = vmatpush1.msra.mxu0 %v1159
    %1195 = vmatprep.subr.mxu0 0.0
    %1196 = vmatpush1.msra.mxu0 %v1158
    %1197 = vmatprep.subr.mxu0 0.0
    %1198 = vmatpush1.msra.mxu0 %v1157
    %1199 = vmatprep.subr.mxu0 0.0
    %1200 = vmatpush1.msra.mxu0 %v1156
    %1201 = vmatprep.subr.mxu0 0.0
    %1202 = vmatpush1.msra.mxu0 %v1155
    %1203 = vmatprep.subr.mxu0 0.0
    %1204 = vmatpush1.msra.mxu0 %v1154
    %1205 = vmatprep.subr.mxu0 0.0
    %1206 = vmatpush1.msra.mxu0 %v1153
    %1207 = vmatprep.subr.mxu0 0.0
    %1208 = vmatpush2.msra.mxu0 0.0
    %1209 = vmatprep.subr.mxu0 0.0
    %1210 = vmatpush2.msra.mxu0 0.0
    %1211 = vmatprep.subr.mxu0 0.0
    %1212 = vmatpush2.msra.mxu0 0.0
    %1213 = vmatprep.subr.mxu0 0.0
    %1214 = vmatpush2.msra.mxu0 0.0
    %1215 = vmatprep.subr.mxu0 0.0
    %1216 = vmatpush2.msra.mxu0 0.0
    %1217 = vmatprep.subr.mxu0 0.0
    %1218 = vmatpush2.msra.mxu0 0.0
    %1219 = vmatprep.subr.mxu0 0.0
    %1220 = vmatpush2.msra.mxu0 0.0
    %1221 = vmatprep.subr.mxu0 0.0
    %1222 = vmatpush2.msra.mxu0 0.0
    %1223 = vmatprep.subr.mxu0 0.0
    %1224 = vmatpush2.msra.mxu0 0.0
    %1225 = vmatprep.subr.mxu0 0.0
    %1226 = vmatpush2.msra.mxu0 0.0
    %1227 = vmatprep.subr.mxu0 0.0
    %1228 = vmatpush2.msra.mxu0 0.0
    %1229 = vmatprep.subr.mxu0 0.0
    %1230 = vmatpush2.msra.mxu0 0.0
    %1231 = vmatprep.subr.mxu0 0.0
    %1232 = vmatpush2.msra.mxu0 0.0
    %1233 = vmatprep.subr.mxu0 0.0
    %1234 = vmatpush2.msra.mxu0 0.0
    %1235 = vmatprep.subr.mxu0 0.0
    %1236 = vmatpush2.msra.mxu0 0.0
    %1237 = vmatprep.subr.mxu0 0.0
    %1238 = vmatpush2.msra.mxu0 0.0
    %1239 = vmatprep.mubr.f32.mxu0 0.0
    %1240 = vmatmul.mubr.f32.gmra.mxu0 %v1170
    %v1241 = vpop.f32.mrf.mxu0
    %v1242 = vadd.f32 %v1166, %v1241
    %v1243 = vpop.f32.mrf.mxu0
    %1244 = vmatprep.mubr.f32.mxu0 0.0
    %1245 = vmatmul.mubr.f32.gmra.mxu0 %v1173
    %v1246 = vpop.f32.mrf.mxu0
    %v1247 = vadd.f32 %v1166, %v1246
    %v1248 = vpop.f32.mrf.mxu0
    %1249 = vdwg.mxu0
    %v1250 = vadd.f32 %v1005, %v1242
    %v1251 = vadd.f32 %v1006, %v1247
    %s1252 = scalar_lea.vmem [#allocation6], 1
    %v1253 = vld [vmem:[%s1252] sm:$0x1]
    %s1254 = scalar_lea.vmem %s2, 1
    %v1255 = vld [vmem:[%s1254] sm:$0x1]
    %v1256 = vsel %vm101, %v1250, 0.0
    %1257 = vadd.xlane.f32.xlu0 %v1256
    %v1258 = vpop.xlane.xlu0 %1257
    %v1259 = vsel %vm101, %v1251, 0.0
    %1260 = vadd.xlane.f32.xlu0 %v1259
    %v1261 = vpop.xlane.xlu0 %1260
    %v1262 = vmul.f32 %v1258, %v108
    %v1263 = vmul.f32 %v1261, %v108
    %v1264 = vsub.f32 %v1250, %v1262
    %v1265 = vsub.f32 %v1251, %v1263
    %v1266 = vmul.f32 %v1264, %v1264
    %v1267 = vmul.f32 %v1265, %v1265
    %v1268 = vsel %vm101, %v1266, 0.0
    %1269 = vadd.xlane.f32.xlu0 %v1268
    %v1270 = vpop.xlane.xlu0 %1269
    %v1271 = vsel %vm101, %v1267, 0.0
    %1272 = vadd.xlane.f32.xlu0 %v1271
    %v1273 = vpop.xlane.xlu0 %1272
    %v1274 = vmul.f32 %v1270, %v108
    %v1275 = vmul.f32 %v1273, %v108
    %v1276 = vadd.f32 %v1274, 1e-05
    %v1277 = vadd.f32 %v1275, 1e-05
    %v1278 = vrsqrt.pop %v1276
    %v1279 = vrsqrt.pop %v1277
    %v1280 = vmul.f32 %v1264, %v1278
    %v1281 = vmul.f32 %v1265, %v1279
    %v1283 = vlaneseq
    %v1284 = vshrl.u32 %v1283, 7
    %v1285 = vsub.s32 0, %v1284
    %v1286 = vrot.slane %v1253, %v1285
    %v1288 = vmul.f32 %v1286, %v1280
    %v1289 = vmul.f32 %v1286, %v1281
    %v1291 = vlaneseq
    %v1292 = vshrl.u32 %v1291, 7
    %v1293 = vsub.s32 0, %v1292
    %v1294 = vrot.slane %v1255, %v1293
    %v1296 = vadd.f32 %v1288, %v1294
    %v1297 = vadd.f32 %v1289, %v1294
    %s1298 = scalar_lea.vmem %s3, 32
    %v1299 = vld [vmem:[%s1298] sm:$0xff]
    %v1300 = vld [vmem:[%s1298 + $0x8] sm:$0xff]
    %v1301 = vld [vmem:[%s1298 + $0x10] sm:$0xff]
    %v1302 = vld [vmem:[%s1298 + $0x18] sm:$0xff]
    %v1304 = vsel %vm101, %v1296, 0
    %v1307 = vsel %vm101, %v1297, 0
    %1309 = vmatprep.subr.mxu0 0.0
    %1310 = vmatpush1.msra.mxu0 0.0
    %1311 = vmatprep.subr.mxu0 0.0
    %1312 = vmatpush1.msra.mxu0 0.0
    %1313 = vmatprep.subr.mxu0 0.0
    %1314 = vmatpush1.msra.mxu0 0.0
    %1315 = vmatprep.subr.mxu0 0.0
    %1316 = vmatpush1.msra.mxu0 0.0
    %1317 = vmatprep.subr.mxu0 0.0
    %1318 = vmatpush1.msra.mxu0 0.0
    %1319 = vmatprep.subr.mxu0 0.0
    %1320 = vmatpush1.msra.mxu0 0.0
    %1321 = vmatprep.subr.mxu0 0.0
    %1322 = vmatpush1.msra.mxu0 0.0
    %1323 = vmatprep.subr.mxu0 0.0
    %1324 = vmatpush1.msra.mxu0 0.0
    %1325 = vmatprep.subr.mxu0 0.0
    %1326 = vmatpush1.msra.mxu0 0.0
    %1327 = vmatprep.subr.mxu0 0.0
    %1328 = vmatpush1.msra.mxu0 0.0
    %1329 = vmatprep.subr.mxu0 0.0
    %1330 = vmatpush1.msra.mxu0 0.0
    %1331 = vmatprep.subr.mxu0 0.0
    %1332 = vmatpush1.msra.mxu0 0.0
    %1333 = vmatprep.subr.mxu0 0.0
    %1334 = vmatpush1.msra.mxu0 %v1302
    %1335 = vmatprep.subr.mxu0 0.0
    %1336 = vmatpush1.msra.mxu0 %v1301
    %1337 = vmatprep.subr.mxu0 0.0
    %1338 = vmatpush1.msra.mxu0 %v1300
    %1339 = vmatprep.subr.mxu0 0.0
    %1340 = vmatpush1.msra.mxu0 %v1299
    %1341 = vmatprep.subr.mxu0 0.0
    %1342 = vmatpush2.msra.mxu0 0.0
    %1343 = vmatprep.subr.mxu0 0.0
    %1344 = vmatpush2.msra.mxu0 0.0
    %1345 = vmatprep.subr.mxu0 0.0
    %1346 = vmatpush2.msra.mxu0 0.0
    %1347 = vmatprep.subr.mxu0 0.0
    %1348 = vmatpush2.msra.mxu0 0.0
    %1349 = vmatprep.subr.mxu0 0.0
    %1350 = vmatpush2.msra.mxu0 0.0
    %1351 = vmatprep.subr.mxu0 0.0
    %1352 = vmatpush2.msra.mxu0 0.0
    %1353 = vmatprep.subr.mxu0 0.0
    %1354 = vmatpush2.msra.mxu0 0.0
    %1355 = vmatprep.subr.mxu0 0.0
    %1356 = vmatpush2.msra.mxu0 0.0
    %1357 = vmatprep.subr.mxu0 0.0
    %1358 = vmatpush2.msra.mxu0 0.0
    %1359 = vmatprep.subr.mxu0 0.0
    %1360 = vmatpush2.msra.mxu0 0.0
    %1361 = vmatprep.subr.mxu0 0.0
    %1362 = vmatpush2.msra.mxu0 0.0
    %1363 = vmatprep.subr.mxu0 0.0
    %1364 = vmatpush2.msra.mxu0 0.0
    %1365 = vmatprep.subr.mxu0 0.0
    %1366 = vmatpush2.msra.mxu0 0.0
    %1367 = vmatprep.subr.mxu0 0.0
    %1368 = vmatpush2.msra.mxu0 0.0
    %1369 = vmatprep.subr.mxu0 0.0
    %1370 = vmatpush2.msra.mxu0 0.0
    %1371 = vmatprep.subr.mxu0 0.0
    %1372 = vmatpush2.msra.mxu0 0.0
    %1373 = vmatprep.mubr.f32.mxu0 0.0
    %1374 = vmatmul.mubr.f32.gmra.mxu0 %v1304
    %v1375 = vpop.f32.mrf.mxu0
    %v1376 = vadd.f32 0.0, %v1375
    %v1377 = vpop.f32.mrf.mxu0
    %1378 = vmatprep.mubr.f32.mxu0 0.0
    %1379 = vmatmul.mubr.f32.gmra.mxu0 %v1307
    %v1380 = vpop.f32.mrf.mxu0
    %v1381 = vadd.f32 0.0, %v1380
    %v1382 = vpop.f32.mrf.mxu0
    %1383 = vdwg.mxu0
    %v1384 = vmul.f32 %v1376, 0.25
    %v1385 = vmul.f32 %v1381, 0.25
    %1387 = vrot.lane.b32.xlu0 %v1376, 96
    %v1388 = vpop.permute.xlu0 %1387
    %v1390 = vsel %vm235, %v1384, 0
    %v1392 = vsel %vm235, %v1388, 0
    %1394 = vmatprep.subr.mxu0 0.0
    %1395 = vmatpush1.xpose.msra.mxu0 0.0
    %1396 = vmatprep.subr.mxu0 0.0
    %1397 = vmatpush1.xpose.msra.mxu0 0.0
    %1398 = vmatprep.subr.mxu0 0.0
    %1399 = vmatpush1.xpose.msra.mxu0 0.0
    %1400 = vmatprep.subr.mxu0 0.0
    %1401 = vmatpush1.xpose.msra.mxu0 0.0
    %1402 = vmatprep.subr.mxu0 0.0
    %1403 = vmatpush1.xpose.msra.mxu0 0.0
    %1404 = vmatprep.subr.mxu0 0.0
    %1405 = vmatpush1.xpose.msra.mxu0 0.0
    %1406 = vmatprep.subr.mxu0 0.0
    %1407 = vmatpush1.xpose.msra.mxu0 0.0
    %1408 = vmatprep.subr.mxu0 0.0
    %1409 = vmatpush1.xpose.msra.mxu0 0.0
    %1410 = vmatprep.subr.mxu0 0.0
    %1411 = vmatpush1.xpose.msra.mxu0 0.0
    %1412 = vmatprep.subr.mxu0 0.0
    %1413 = vmatpush1.xpose.msra.mxu0 0.0
    %1414 = vmatprep.subr.mxu0 0.0
    %1415 = vmatpush1.xpose.msra.mxu0 0.0
    %1416 = vmatprep.subr.mxu0 0.0
    %1417 = vmatpush1.xpose.msra.mxu0 0.0
    %1418 = vmatprep.subr.mxu0 0.0
    %1419 = vmatpush1.xpose.msra.mxu0 0.0
    %1420 = vmatprep.subr.mxu0 0.0
    %1421 = vmatpush1.xpose.msra.mxu0 0.0
    %1422 = vmatprep.subr.mxu0 0.0
    %1423 = vmatpush1.xpose.msra.mxu0 0.0
    %1424 = vmatprep.subr.mxu0 0.0
    %1425 = vmatpush1.xpose.msra.mxu0 %v1392
    %1426 = vmatprep.subr.mxu0 0.0
    %1427 = vmatpush2.xpose.msra.mxu0 0.0
    %1428 = vmatprep.subr.mxu0 0.0
    %1429 = vmatpush2.xpose.msra.mxu0 0.0
    %1430 = vmatprep.subr.mxu0 0.0
    %1431 = vmatpush2.xpose.msra.mxu0 0.0
    %1432 = vmatprep.subr.mxu0 0.0
    %1433 = vmatpush2.xpose.msra.mxu0 0.0
    %1434 = vmatprep.subr.mxu0 0.0
    %1435 = vmatpush2.xpose.msra.mxu0 0.0
    %1436 = vmatprep.subr.mxu0 0.0
    %1437 = vmatpush2.xpose.msra.mxu0 0.0
    %1438 = vmatprep.subr.mxu0 0.0
    %1439 = vmatpush2.xpose.msra.mxu0 0.0
    %1440 = vmatprep.subr.mxu0 0.0
    %1441 = vmatpush2.xpose.msra.mxu0 0.0
    %1442 = vmatprep.subr.mxu0 0.0
    %1443 = vmatpush2.xpose.msra.mxu0 0.0
    %1444 = vmatprep.subr.mxu0 0.0
    %1445 = vmatpush2.xpose.msra.mxu0 0.0
    %1446 = vmatprep.subr.mxu0 0.0
    %1447 = vmatpush2.xpose.msra.mxu0 0.0
    %1448 = vmatprep.subr.mxu0 0.0
    %1449 = vmatpush2.xpose.msra.mxu0 0.0
    %1450 = vmatprep.subr.mxu0 0.0
    %1451 = vmatpush2.xpose.msra.mxu0 0.0
    %1452 = vmatprep.subr.mxu0 0.0
    %1453 = vmatpush2.xpose.msra.mxu0 0.0
    %1454 = vmatprep.subr.mxu0 0.0
    %1455 = vmatpush2.xpose.msra.mxu0 0.0
    %1456 = vmatprep.subr.mxu0 0.0
    %1457 = vmatpush2.xpose.msra.mxu0 0.0
    %1458 = vmatprep.mubr.f32.mxu0 0.0
    %1459 = vmatmul.mubr.f32.gmra.mxu0 %v1390
    %v1460 = vpop.f32.mrf.mxu0
    %v1461 = vadd.f32 0.0, %v1460
    %v1462 = vpop.f32.mrf.mxu0
    %1463 = vdwg.mxu0
    %v1464 = vsel %vm98, -inf, %v1461
    %v1465 = vsel %vm312, %v1464, -inf
    %1466 = vmax.xlane.f32.xlu0 %v1465
    %v1467 = vpop.xlane.xlu0 %1466
    %v1468 = vsub.f32 %v1464, %v1467
    %v1469 = vmul.f32 %v1468, 1.442695
    %v1470 = vpow.pop %v1469
    %v1471 = vsel %vm312, %v1470, 0.0
    %1472 = vadd.xlane.f32.xlu0 %v1471
    %v1473 = vpop.xlane.xlu0 %1472
    %v1474 = vrcp.pop %v1473
    %v1475 = vmul.f32 %v1470, %v1474
    %1476 = vrot.lane.b32.xlu0 %v1376, 64
    %v1477 = vpop.permute.xlu0 %1476
    %v1480 = vsel %vm312, %v1475, 0
    %1482 = vmatprep.subr.mxu0 0.0
    %1483 = vmatpush1.msra.mxu0 0.0
    %1484 = vmatprep.subr.mxu0 0.0
    %1485 = vmatpush1.msra.mxu0 0.0
    %1486 = vmatprep.subr.mxu0 0.0
    %1487 = vmatpush1.msra.mxu0 0.0
    %1488 = vmatprep.subr.mxu0 0.0
    %1489 = vmatpush1.msra.mxu0 0.0
    %1490 = vmatprep.subr.mxu0 0.0
    %1491 = vmatpush1.msra.mxu0 0.0
    %1492 = vmatprep.subr.mxu0 0.0
    %1493 = vmatpush1.msra.mxu0 0.0
    %1494 = vmatprep.subr.mxu0 0.0
    %1495 = vmatpush1.msra.mxu0 0.0
    %1496 = vmatprep.subr.mxu0 0.0
    %1497 = vmatpush1.msra.mxu0 0.0
    %1498 = vmatprep.subr.mxu0 0.0
    %1499 = vmatpush1.msra.mxu0 0.0
    %1500 = vmatprep.subr.mxu0 0.0
    %1501 = vmatpush1.msra.mxu0 0.0
    %1502 = vmatprep.subr.mxu0 0.0
    %1503 = vmatpush1.msra.mxu0 0.0
    %1504 = vmatprep.subr.mxu0 0.0
    %1505 = vmatpush1.msra.mxu0 0.0
    %1506 = vmatprep.subr.mxu0 0.0
    %1507 = vmatpush1.msra.mxu0 0.0
    %1508 = vmatprep.subr.mxu0 0.0
    %1509 = vmatpush1.msra.mxu0 0.0
    %1510 = vmatprep.subr.mxu0 0.0
    %1511 = vmatpush1.msra.mxu0 0.0
    %1512 = vmatprep.subr.mxu0 0.0
    %1513 = vmatpush1.msra.mxu0 %v1477
    %1514 = vmatprep.subr.mxu0 0.0
    %1515 = vmatpush2.msra.mxu0 0.0
    %1516 = vmatprep.subr.mxu0 0.0
    %1517 = vmatpush2.msra.mxu0 0.0
    %1518 = vmatprep.subr.mxu0 0.0
    %1519 = vmatpush2.msra.mxu0 0.0
    %1520 = vmatprep.subr.mxu0 0.0
    %1521 = vmatpush2.msra.mxu0 0.0
    %1522 = vmatprep.subr.mxu0 0.0
    %1523 = vmatpush2.msra.mxu0 0.0
    %1524 = vmatprep.subr.mxu0 0.0
    %1525 = vmatpush2.msra.mxu0 0.0
    %1526 = vmatprep.subr.mxu0 0.0
    %1527 = vmatpush2.msra.mxu0 0.0
    %1528 = vmatprep.subr.mxu0 0.0
    %1529 = vmatpush2.msra.mxu0 0.0
    %1530 = vmatprep.subr.mxu0 0.0
    %1531 = vmatpush2.msra.mxu0 0.0
    %1532 = vmatprep.subr.mxu0 0.0
    %1533 = vmatpush2.msra.mxu0 0.0
    %1534 = vmatprep.subr.mxu0 0.0
    %1535 = vmatpush2.msra.mxu0 0.0
    %1536 = vmatprep.subr.mxu0 0.0
    %1537 = vmatpush2.msra.mxu0 0.0
    %1538 = vmatprep.subr.mxu0 0.0
    %1539 = vmatpush2.msra.mxu0 0.0
    %1540 = vmatprep.subr.mxu0 0.0
    %1541 = vmatpush2.msra.mxu0 0.0
    %1542 = vmatprep.subr.mxu0 0.0
    %1543 = vmatpush2.msra.mxu0 0.0
    %1544 = vmatprep.subr.mxu0 0.0
    %1545 = vmatpush2.msra.mxu0 0.0
    %1546 = vmatprep.mubr.f32.mxu0 0.0
    %1547 = vmatmul.mubr.f32.gmra.mxu0 %v1480
    %v1548 = vpop.f32.mrf.mxu0
    %v1549 = vadd.f32 0.0, %v1548
    %v1550 = vpop.f32.mrf.mxu0
    %1551 = vdwg.mxu0
    %1552 = vst.msk [vmem:[#allocation2] sm:$0xff] %vm235, %v1549
    %1553 = vrot.lane.b32.xlu0 %v1384, 112
    %v1554 = vpop.permute.xlu0 %1553
    %1555 = vrot.lane.b32.xlu0 %v1376, 80
    %v1556 = vpop.permute.xlu0 %1555
    %v1557 = vsel %vm235, %v1554, 0
    %v1559 = vsel %vm235, %v1556, 0
    %1561 = vmatprep.subr.mxu0 0.0
    %1562 = vmatpush1.xpose.msra.mxu0 0.0
    %1563 = vmatprep.subr.mxu0 0.0
    %1564 = vmatpush1.xpose.msra.mxu0 0.0
    %1565 = vmatprep.subr.mxu0 0.0
    %1566 = vmatpush1.xpose.msra.mxu0 0.0
    %1567 = vmatprep.subr.mxu0 0.0
    %1568 = vmatpush1.xpose.msra.mxu0 0.0
    %1569 = vmatprep.subr.mxu0 0.0
    %1570 = vmatpush1.xpose.msra.mxu0 0.0
    %1571 = vmatprep.subr.mxu0 0.0
    %1572 = vmatpush1.xpose.msra.mxu0 0.0
    %1573 = vmatprep.subr.mxu0 0.0
    %1574 = vmatpush1.xpose.msra.mxu0 0.0
    %1575 = vmatprep.subr.mxu0 0.0
    %1576 = vmatpush1.xpose.msra.mxu0 0.0
    %1577 = vmatprep.subr.mxu0 0.0
    %1578 = vmatpush1.xpose.msra.mxu0 0.0
    %1579 = vmatprep.subr.mxu0 0.0
    %1580 = vmatpush1.xpose.msra.mxu0 0.0
    %1581 = vmatprep.subr.mxu0 0.0
    %1582 = vmatpush1.xpose.msra.mxu0 0.0
    %1583 = vmatprep.subr.mxu0 0.0
    %1584 = vmatpush1.xpose.msra.mxu0 0.0
    %1585 = vmatprep.subr.mxu0 0.0
    %1586 = vmatpush1.xpose.msra.mxu0 0.0
    %1587 = vmatprep.subr.mxu0 0.0
    %1588 = vmatpush1.xpose.msra.mxu0 0.0
    %1589 = vmatprep.subr.mxu0 0.0
    %1590 = vmatpush1.xpose.msra.mxu0 0.0
    %1591 = vmatprep.subr.mxu0 0.0
    %1592 = vmatpush1.xpose.msra.mxu0 %v1559
    %1593 = vmatprep.subr.mxu0 0.0
    %1594 = vmatpush2.xpose.msra.mxu0 0.0
    %1595 = vmatprep.subr.mxu0 0.0
    %1596 = vmatpush2.xpose.msra.mxu0 0.0
    %1597 = vmatprep.subr.mxu0 0.0
    %1598 = vmatpush2.xpose.msra.mxu0 0.0
    %1599 = vmatprep.subr.mxu0 0.0
    %1600 = vmatpush2.xpose.msra.mxu0 0.0
    %1601 = vmatprep.subr.mxu0 0.0
    %1602 = vmatpush2.xpose.msra.mxu0 0.0
    %1603 = vmatprep.subr.mxu0 0.0
    %1604 = vmatpush2.xpose.msra.mxu0 0.0
    %1605 = vmatprep.subr.mxu0 0.0
    %1606 = vmatpush2.xpose.msra.mxu0 0.0
    %1607 = vmatprep.subr.mxu0 0.0
    %1608 = vmatpush2.xpose.msra.mxu0 0.0
    %1609 = vmatprep.subr.mxu0 0.0
    %1610 = vmatpush2.xpose.msra.mxu0 0.0
    %1611 = vmatprep.subr.mxu0 0.0
    %1612 = vmatpush2.xpose.msra.mxu0 0.0
    %1613 = vmatprep.subr.mxu0 0.0
    %1614 = vmatpush2.xpose.msra.mxu0 0.0
    %1615 = vmatprep.subr.mxu0 0.0
    %1616 = vmatpush2.xpose.msra.mxu0 0.0
    %1617 = vmatprep.subr.mxu0 0.0
    %1618 = vmatpush2.xpose.msra.mxu0 0.0
    %1619 = vmatprep.subr.mxu0 0.0
    %1620 = vmatpush2.xpose.msra.mxu0 0.0
    %1621 = vmatprep.subr.mxu0 0.0
    %1622 = vmatpush2.xpose.msra.mxu0 0.0
    %1623 = vmatprep.subr.mxu0 0.0
    %1624 = vmatpush2.xpose.msra.mxu0 0.0
    %1625 = vmatprep.mubr.f32.mxu0 0.0
    %1626 = vmatmul.mubr.f32.gmra.mxu0 %v1557
    %v1627 = vpop.f32.mrf.mxu0
    %v1628 = vadd.f32 0.0, %v1627
    %v1629 = vpop.f32.mrf.mxu0
    %1630 = vdwg.mxu0
    %v1631 = vsel %vm98, -inf, %v1628
    %v1632 = vsel %vm312, %v1631, -inf
    %1633 = vmax.xlane.f32.xlu0 %v1632
    %v1634 = vpop.xlane.xlu0 %1633
    %v1635 = vsub.f32 %v1631, %v1634
    %v1636 = vmul.f32 %v1635, 1.442695
    %v1637 = vpow.pop %v1636
    %v1638 = vsel %vm312, %v1637, 0.0
    %1639 = vadd.xlane.f32.xlu0 %v1638
    %v1640 = vpop.xlane.xlu0 %1639
    %v1641 = vrcp.pop %v1640
    %v1642 = vmul.f32 %v1637, %v1641
    %1643 = vrot.lane.b32.xlu0 %v1376, 48
    %v1644 = vpop.permute.xlu0 %1643
    %v1647 = vsel %vm312, %v1642, 0
    %1649 = vmatprep.subr.mxu0 0.0
    %1650 = vmatpush1.msra.mxu0 0.0
    %1651 = vmatprep.subr.mxu0 0.0
    %1652 = vmatpush1.msra.mxu0 0.0
    %1653 = vmatprep.subr.mxu0 0.0
    %1654 = vmatpush1.msra.mxu0 0.0
    %1655 = vmatprep.subr.mxu0 0.0
    %1656 = vmatpush1.msra.mxu0 0.0
    %1657 = vmatprep.subr.mxu0 0.0
    %1658 = vmatpush1.msra.mxu0 0.0
    %1659 = vmatprep.subr.mxu0 0.0
    %1660 = vmatpush1.msra.mxu0 0.0
    %1661 = vmatprep.subr.mxu0 0.0
    %1662 = vmatpush1.msra.mxu0 0.0
    %1663 = vmatprep.subr.mxu0 0.0
    %1664 = vmatpush1.msra.mxu0 0.0
    %1665 = vmatprep.subr.mxu0 0.0
    %1666 = vmatpush1.msra.mxu0 0.0
    %1667 = vmatprep.subr.mxu0 0.0
    %1668 = vmatpush1.msra.mxu0 0.0
    %1669 = vmatprep.subr.mxu0 0.0
    %1670 = vmatpush1.msra.mxu0 0.0
    %1671 = vmatprep.subr.mxu0 0.0
    %1672 = vmatpush1.msra.mxu0 0.0
    %1673 = vmatprep.subr.mxu0 0.0
    %1674 = vmatpush1.msra.mxu0 0.0
    %1675 = vmatprep.subr.mxu0 0.0
    %1676 = vmatpush1.msra.mxu0 0.0
    %1677 = vmatprep.subr.mxu0 0.0
    %1678 = vmatpush1.msra.mxu0 0.0
    %1679 = vmatprep.subr.mxu0 0.0
    %1680 = vmatpush1.msra.mxu0 %v1644
    %1681 = vmatprep.subr.mxu0 0.0
    %1682 = vmatpush2.msra.mxu0 0.0
    %1683 = vmatprep.subr.mxu0 0.0
    %1684 = vmatpush2.msra.mxu0 0.0
    %1685 = vmatprep.subr.mxu0 0.0
    %1686 = vmatpush2.msra.mxu0 0.0
    %1687 = vmatprep.subr.mxu0 0.0
    %1688 = vmatpush2.msra.mxu0 0.0
    %1689 = vmatprep.subr.mxu0 0.0
    %1690 = vmatpush2.msra.mxu0 0.0
    %1691 = vmatprep.subr.mxu0 0.0
    %1692 = vmatpush2.msra.mxu0 0.0
    %1693 = vmatprep.subr.mxu0 0.0
    %1694 = vmatpush2.msra.mxu0 0.0
    %1695 = vmatprep.subr.mxu0 0.0
    %1696 = vmatpush2.msra.mxu0 0.0
    %1697 = vmatprep.subr.mxu0 0.0
    %1698 = vmatpush2.msra.mxu0 0.0
    %1699 = vmatprep.subr.mxu0 0.0
    %1700 = vmatpush2.msra.mxu0 0.0
    %1701 = vmatprep.subr.mxu0 0.0
    %1702 = vmatpush2.msra.mxu0 0.0
    %1703 = vmatprep.subr.mxu0 0.0
    %1704 = vmatpush2.msra.mxu0 0.0
    %1705 = vmatprep.subr.mxu0 0.0
    %1706 = vmatpush2.msra.mxu0 0.0
    %1707 = vmatprep.subr.mxu0 0.0
    %1708 = vmatpush2.msra.mxu0 0.0
    %1709 = vmatprep.subr.mxu0 0.0
    %1710 = vmatpush2.msra.mxu0 0.0
    %1711 = vmatprep.subr.mxu0 0.0
    %1712 = vmatpush2.msra.mxu0 0.0
    %1713 = vmatprep.mubr.f32.mxu0 0.0
    %1714 = vmatmul.mubr.f32.gmra.mxu0 %v1647
    %v1715 = vpop.f32.mrf.mxu0
    %v1716 = vadd.f32 0.0, %v1715
    %v1717 = vpop.f32.mrf.mxu0
    %1718 = vdwg.mxu0
    %1720 = vrot.lane.b32.xlu0 %v1716, 16
    %v1721 = vpop.permute.xlu0 %1720
    %1723 = vst.msk [vmem:[#allocation2] sm:$0xff] %vm571, %v1721
    %1725 = vrot.lane.b32.xlu0 %v1381, 96
    %v1726 = vpop.permute.xlu0 %1725
    %v1728 = vsel %vm235, %v1385, 0
    %v1730 = vsel %vm235, %v1726, 0
    %1732 = vmatprep.subr.mxu0 0.0
    %1733 = vmatpush1.xpose.msra.mxu0 0.0
    %1734 = vmatprep.subr.mxu0 0.0
    %1735 = vmatpush1.xpose.msra.mxu0 0.0
    %1736 = vmatprep.subr.mxu0 0.0
    %1737 = vmatpush1.xpose.msra.mxu0 0.0
    %1738 = vmatprep.subr.mxu0 0.0
    %1739 = vmatpush1.xpose.msra.mxu0 0.0
    %1740 = vmatprep.subr.mxu0 0.0
    %1741 = vmatpush1.xpose.msra.mxu0 0.0
    %1742 = vmatprep.subr.mxu0 0.0
    %1743 = vmatpush1.xpose.msra.mxu0 0.0
    %1744 = vmatprep.subr.mxu0 0.0
    %1745 = vmatpush1.xpose.msra.mxu0 0.0
    %1746 = vmatprep.subr.mxu0 0.0
    %1747 = vmatpush1.xpose.msra.mxu0 0.0
    %1748 = vmatprep.subr.mxu0 0.0
    %1749 = vmatpush1.xpose.msra.mxu0 0.0
    %1750 = vmatprep.subr.mxu0 0.0
    %1751 = vmatpush1.xpose.msra.mxu0 0.0
    %1752 = vmatprep.subr.mxu0 0.0
    %1753 = vmatpush1.xpose.msra.mxu0 0.0
    %1754 = vmatprep.subr.mxu0 0.0
    %1755 = vmatpush1.xpose.msra.mxu0 0.0
    %1756 = vmatprep.subr.mxu0 0.0
    %1757 = vmatpush1.xpose.msra.mxu0 0.0
    %1758 = vmatprep.subr.mxu0 0.0
    %1759 = vmatpush1.xpose.msra.mxu0 0.0
    %1760 = vmatprep.subr.mxu0 0.0
    %1761 = vmatpush1.xpose.msra.mxu0 0.0
    %1762 = vmatprep.subr.mxu0 0.0
    %1763 = vmatpush1.xpose.msra.mxu0 %v1730
    %1764 = vmatprep.subr.mxu0 0.0
    %1765 = vmatpush2.xpose.msra.mxu0 0.0
    %1766 = vmatprep.subr.mxu0 0.0
    %1767 = vmatpush2.xpose.msra.mxu0 0.0
    %1768 = vmatprep.subr.mxu0 0.0
    %1769 = vmatpush2.xpose.msra.mxu0 0.0
    %1770 = vmatprep.subr.mxu0 0.0
    %1771 = vmatpush2.xpose.msra.mxu0 0.0
    %1772 = vmatprep.subr.mxu0 0.0
    %1773 = vmatpush2.xpose.msra.mxu0 0.0
    %1774 = vmatprep.subr.mxu0 0.0
    %1775 = vmatpush2.xpose.msra.mxu0 0.0
    %1776 = vmatprep.subr.mxu0 0.0
    %1777 = vmatpush2.xpose.msra.mxu0 0.0
    %1778 = vmatprep.subr.mxu0 0.0
    %1779 = vmatpush2.xpose.msra.mxu0 0.0
    %1780 = vmatprep.subr.mxu0 0.0
    %1781 = vmatpush2.xpose.msra.mxu0 0.0
    %1782 = vmatprep.subr.mxu0 0.0
    %1783 = vmatpush2.xpose.msra.mxu0 0.0
    %1784 = vmatprep.subr.mxu0 0.0
    %1785 = vmatpush2.xpose.msra.mxu0 0.0
    %1786 = vmatprep.subr.mxu0 0.0
    %1787 = vmatpush2.xpose.msra.mxu0 0.0
    %1788 = vmatprep.subr.mxu0 0.0
    %1789 = vmatpush2.xpose.msra.mxu0 0.0
    %1790 = vmatprep.subr.mxu0 0.0
    %1791 = vmatpush2.xpose.msra.mxu0 0.0
    %1792 = vmatprep.subr.mxu0 0.0
    %1793 = vmatpush2.xpose.msra.mxu0 0.0
    %1794 = vmatprep.subr.mxu0 0.0
    %1795 = vmatpush2.xpose.msra.mxu0 0.0
    %1796 = vmatprep.mubr.f32.mxu0 0.0
    %1797 = vmatmul.mubr.f32.gmra.mxu0 %v1728
    %v1798 = vpop.f32.mrf.mxu0
    %v1799 = vadd.f32 0.0, %v1798
    %v1800 = vpop.f32.mrf.mxu0
    %1801 = vdwg.mxu0
    %v1802 = vsel %vm98, -inf, %v1799
    %v1803 = vsel %vm312, %v1802, -inf
    %1804 = vmax.xlane.f32.xlu0 %v1803
    %v1805 = vpop.xlane.xlu0 %1804
    %v1806 = vsub.f32 %v1802, %v1805
    %v1807 = vmul.f32 %v1806, 1.442695
    %v1808 = vpow.pop %v1807
    %v1809 = vsel %vm312, %v1808, 0.0
    %1810 = vadd.xlane.f32.xlu0 %v1809
    %v1811 = vpop.xlane.xlu0 %1810
    %v1812 = vrcp.pop %v1811
    %v1813 = vmul.f32 %v1808, %v1812
    %1814 = vrot.lane.b32.xlu0 %v1381, 64
    %v1815 = vpop.permute.xlu0 %1814
    %v1818 = vsel %vm312, %v1813, 0
    %1820 = vmatprep.subr.mxu0 0.0
    %1821 = vmatpush1.msra.mxu0 0.0
    %1822 = vmatprep.subr.mxu0 0.0
    %1823 = vmatpush1.msra.mxu0 0.0
    %1824 = vmatprep.subr.mxu0 0.0
    %1825 = vmatpush1.msra.mxu0 0.0
    %1826 = vmatprep.subr.mxu0 0.0
    %1827 = vmatpush1.msra.mxu0 0.0
    %1828 = vmatprep.subr.mxu0 0.0
    %1829 = vmatpush1.msra.mxu0 0.0
    %1830 = vmatprep.subr.mxu0 0.0
    %1831 = vmatpush1.msra.mxu0 0.0
    %1832 = vmatprep.subr.mxu0 0.0
    %1833 = vmatpush1.msra.mxu0 0.0
    %1834 = vmatprep.subr.mxu0 0.0
    %1835 = vmatpush1.msra.mxu0 0.0
    %1836 = vmatprep.subr.mxu0 0.0
    %1837 = vmatpush1.msra.mxu0 0.0
    %1838 = vmatprep.subr.mxu0 0.0
    %1839 = vmatpush1.msra.mxu0 0.0
    %1840 = vmatprep.subr.mxu0 0.0
    %1841 = vmatpush1.msra.mxu0 0.0
    %1842 = vmatprep.subr.mxu0 0.0
    %1843 = vmatpush1.msra.mxu0 0.0
    %1844 = vmatprep.subr.mxu0 0.0
    %1845 = vmatpush1.msra.mxu0 0.0
    %1846 = vmatprep.subr.mxu0 0.0
    %1847 = vmatpush1.msra.mxu0 0.0
    %1848 = vmatprep.subr.mxu0 0.0
    %1849 = vmatpush1.msra.mxu0 0.0
    %1850 = vmatprep.subr.mxu0 0.0
    %1851 = vmatpush1.msra.mxu0 %v1815
    %1852 = vmatprep.subr.mxu0 0.0
    %1853 = vmatpush2.msra.mxu0 0.0
    %1854 = vmatprep.subr.mxu0 0.0
    %1855 = vmatpush2.msra.mxu0 0.0
    %1856 = vmatprep.subr.mxu0 0.0
    %1857 = vmatpush2.msra.mxu0 0.0
    %1858 = vmatprep.subr.mxu0 0.0
    %1859 = vmatpush2.msra.mxu0 0.0
    %1860 = vmatprep.subr.mxu0 0.0
    %1861 = vmatpush2.msra.mxu0 0.0
    %1862 = vmatprep.subr.mxu0 0.0
    %1863 = vmatpush2.msra.mxu0 0.0
    %1864 = vmatprep.subr.mxu0 0.0
    %1865 = vmatpush2.msra.mxu0 0.0
    %1866 = vmatprep.subr.mxu0 0.0
    %1867 = vmatpush2.msra.mxu0 0.0
    %1868 = vmatprep.subr.mxu0 0.0
    %1869 = vmatpush2.msra.mxu0 0.0
    %1870 = vmatprep.subr.mxu0 0.0
    %1871 = vmatpush2.msra.mxu0 0.0
    %1872 = vmatprep.subr.mxu0 0.0
    %1873 = vmatpush2.msra.mxu0 0.0
    %1874 = vmatprep.subr.mxu0 0.0
    %1875 = vmatpush2.msra.mxu0 0.0
    %1876 = vmatprep.subr.mxu0 0.0
    %1877 = vmatpush2.msra.mxu0 0.0
    %1878 = vmatprep.subr.mxu0 0.0
    %1879 = vmatpush2.msra.mxu0 0.0
    %1880 = vmatprep.subr.mxu0 0.0
    %1881 = vmatpush2.msra.mxu0 0.0
    %1882 = vmatprep.subr.mxu0 0.0
    %1883 = vmatpush2.msra.mxu0 0.0
    %1884 = vmatprep.mubr.f32.mxu0 0.0
    %1885 = vmatmul.mubr.f32.gmra.mxu0 %v1818
    %v1886 = vpop.f32.mrf.mxu0
    %v1887 = vadd.f32 0.0, %v1886
    %v1888 = vpop.f32.mrf.mxu0
    %1889 = vdwg.mxu0
    %1890 = vst.msk [vmem:[#allocation2 + $0x8] sm:$0xff] %vm235, %v1887
    %1891 = vrot.lane.b32.xlu0 %v1385, 112
    %v1892 = vpop.permute.xlu0 %1891
    %1893 = vrot.lane.b32.xlu0 %v1381, 80
    %v1894 = vpop.permute.xlu0 %1893
    %v1895 = vsel %vm235, %v1892, 0
    %v1897 = vsel %vm235, %v1894, 0
    %1899 = vmatprep.subr.mxu0 0.0
    %1900 = vmatpush1.xpose.msra.mxu0 0.0
    %1901 = vmatprep.subr.mxu0 0.0
    %1902 = vmatpush1.xpose.msra.mxu0 0.0
    %1903 = vmatprep.subr.mxu0 0.0
    %1904 = vmatpush1.xpose.msra.mxu0 0.0
    %1905 = vmatprep.subr.mxu0 0.0
    %1906 = vmatpush1.xpose.msra.mxu0 0.0
    %1907 = vmatprep.subr.mxu0 0.0
    %1908 = vmatpush1.xpose.msra.mxu0 0.0
    %1909 = vmatprep.subr.mxu0 0.0
    %1910 = vmatpush1.xpose.msra.mxu0 0.0
    %1911 = vmatprep.subr.mxu0 0.0
    %1912 = vmatpush1.xpose.msra.mxu0 0.0
    %1913 = vmatprep.subr.mxu0 0.0
    %1914 = vmatpush1.xpose.msra.mxu0 0.0
    %1915 = vmatprep.subr.mxu0 0.0
    %1916 = vmatpush1.xpose.msra.mxu0 0.0
    %1917 = vmatprep.subr.mxu0 0.0
    %1918 = vmatpush1.xpose.msra.mxu0 0.0
    %1919 = vmatprep.subr.mxu0 0.0
    %1920 = vmatpush1.xpose.msra.mxu0 0.0
    %1921 = vmatprep.subr.mxu0 0.0
    %1922 = vmatpush1.xpose.msra.mxu0 0.0
    %1923 = vmatprep.subr.mxu0 0.0
    %1924 = vmatpush1.xpose.msra.mxu0 0.0
    %1925 = vmatprep.subr.mxu0 0.0
    %1926 = vmatpush1.xpose.msra.mxu0 0.0
    %1927 = vmatprep.subr.mxu0 0.0
    %1928 = vmatpush1.xpose.msra.mxu0 0.0
    %1929 = vmatprep.subr.mxu0 0.0
    %1930 = vmatpush1.xpose.msra.mxu0 %v1897
    %1931 = vmatprep.subr.mxu0 0.0
    %1932 = vmatpush2.xpose.msra.mxu0 0.0
    %1933 = vmatprep.subr.mxu0 0.0
    %1934 = vmatpush2.xpose.msra.mxu0 0.0
    %1935 = vmatprep.subr.mxu0 0.0
    %1936 = vmatpush2.xpose.msra.mxu0 0.0
    %1937 = vmatprep.subr.mxu0 0.0
    %1938 = vmatpush2.xpose.msra.mxu0 0.0
    %1939 = vmatprep.subr.mxu0 0.0
    %1940 = vmatpush2.xpose.msra.mxu0 0.0
    %1941 = vmatprep.subr.mxu0 0.0
    %1942 = vmatpush2.xpose.msra.mxu0 0.0
    %1943 = vmatprep.subr.mxu0 0.0
    %1944 = vmatpush2.xpose.msra.mxu0 0.0
    %1945 = vmatprep.subr.mxu0 0.0
    %1946 = vmatpush2.xpose.msra.mxu0 0.0
    %1947 = vmatprep.subr.mxu0 0.0
    %1948 = vmatpush2.xpose.msra.mxu0 0.0
    %1949 = vmatprep.subr.mxu0 0.0
    %1950 = vmatpush2.xpose.msra.mxu0 0.0
    %1951 = vmatprep.subr.mxu0 0.0
    %1952 = vmatpush2.xpose.msra.mxu0 0.0
    %1953 = vmatprep.subr.mxu0 0.0
    %1954 = vmatpush2.xpose.msra.mxu0 0.0
    %1955 = vmatprep.subr.mxu0 0.0
    %1956 = vmatpush2.xpose.msra.mxu0 0.0
    %1957 = vmatprep.subr.mxu0 0.0
    %1958 = vmatpush2.xpose.msra.mxu0 0.0
    %1959 = vmatprep.subr.mxu0 0.0
    %1960 = vmatpush2.xpose.msra.mxu0 0.0
    %1961 = vmatprep.subr.mxu0 0.0
    %1962 = vmatpush2.xpose.msra.mxu0 0.0
    %1963 = vmatprep.mubr.f32.mxu0 0.0
    %1964 = vmatmul.mubr.f32.gmra.mxu0 %v1895
    %v1965 = vpop.f32.mrf.mxu0
    %v1966 = vadd.f32 0.0, %v1965
    %v1967 = vpop.f32.mrf.mxu0
    %1968 = vdwg.mxu0
    %v1969 = vsel %vm98, -inf, %v1966
    %v1970 = vsel %vm312, %v1969, -inf
    %1971 = vmax.xlane.f32.xlu0 %v1970
    %v1972 = vpop.xlane.xlu0 %1971
    %v1973 = vsub.f32 %v1969, %v1972
    %v1974 = vmul.f32 %v1973, 1.442695
    %v1975 = vpow.pop %v1974
    %v1976 = vsel %vm312, %v1975, 0.0
    %1977 = vadd.xlane.f32.xlu0 %v1976
    %v1978 = vpop.xlane.xlu0 %1977
    %v1979 = vrcp.pop %v1978
    %v1980 = vmul.f32 %v1975, %v1979
    %1981 = vrot.lane.b32.xlu0 %v1381, 48
    %v1982 = vpop.permute.xlu0 %1981
    %v1985 = vsel %vm312, %v1980, 0
    %1987 = vmatprep.subr.mxu0 0.0
    %1988 = vmatpush1.msra.mxu0 0.0
    %1989 = vmatprep.subr.mxu0 0.0
    %1990 = vmatpush1.msra.mxu0 0.0
    %1991 = vmatprep.subr.mxu0 0.0
    %1992 = vmatpush1.msra.mxu0 0.0
    %1993 = vmatprep.subr.mxu0 0.0
    %1994 = vmatpush1.msra.mxu0 0.0
    %1995 = vmatprep.subr.mxu0 0.0
    %1996 = vmatpush1.msra.mxu0 0.0
    %1997 = vmatprep.subr.mxu0 0.0
    %1998 = vmatpush1.msra.mxu0 0.0
    %1999 = vmatprep.subr.mxu0 0.0
    %2000 = vmatpush1.msra.mxu0 0.0
    %2001 = vmatprep.subr.mxu0 0.0
    %2002 = vmatpush1.msra.mxu0 0.0
    %2003 = vmatprep.subr.mxu0 0.0
    %2004 = vmatpush1.msra.mxu0 0.0
    %2005 = vmatprep.subr.mxu0 0.0
    %2006 = vmatpush1.msra.mxu0 0.0
    %2007 = vmatprep.subr.mxu0 0.0
    %2008 = vmatpush1.msra.mxu0 0.0
    %2009 = vmatprep.subr.mxu0 0.0
    %2010 = vmatpush1.msra.mxu0 0.0
    %2011 = vmatprep.subr.mxu0 0.0
    %2012 = vmatpush1.msra.mxu0 0.0
    %2013 = vmatprep.subr.mxu0 0.0
    %2014 = vmatpush1.msra.mxu0 0.0
    %2015 = vmatprep.subr.mxu0 0.0
    %2016 = vmatpush1.msra.mxu0 0.0
    %2017 = vmatprep.subr.mxu0 0.0
    %2018 = vmatpush1.msra.mxu0 %v1982
    %2019 = vmatprep.subr.mxu0 0.0
    %2020 = vmatpush2.msra.mxu0 0.0
    %2021 = vmatprep.subr.mxu0 0.0
    %2022 = vmatpush2.msra.mxu0 0.0
    %2023 = vmatprep.subr.mxu0 0.0
    %2024 = vmatpush2.msra.mxu0 0.0
    %2025 = vmatprep.subr.mxu0 0.0
    %2026 = vmatpush2.msra.mxu0 0.0
    %2027 = vmatprep.subr.mxu0 0.0
    %2028 = vmatpush2.msra.mxu0 0.0
    %2029 = vmatprep.subr.mxu0 0.0
    %2030 = vmatpush2.msra.mxu0 0.0
    %2031 = vmatprep.subr.mxu0 0.0
    %2032 = vmatpush2.msra.mxu0 0.0
    %2033 = vmatprep.subr.mxu0 0.0
    %2034 = vmatpush2.msra.mxu0 0.0
    %2035 = vmatprep.subr.mxu0 0.0
    %2036 = vmatpush2.msra.mxu0 0.0
    %2037 = vmatprep.subr.mxu0 0.0
    %2038 = vmatpush2.msra.mxu0 0.0
    %2039 = vmatprep.subr.mxu0 0.0
    %2040 = vmatpush2.msra.mxu0 0.0
    %2041 = vmatprep.subr.mxu0 0.0
    %2042 = vmatpush2.msra.mxu0 0.0
    %2043 = vmatprep.subr.mxu0 0.0
    %2044 = vmatpush2.msra.mxu0 0.0
    %2045 = vmatprep.subr.mxu0 0.0
    %2046 = vmatpush2.msra.mxu0 0.0
    %2047 = vmatprep.subr.mxu0 0.0
    %2048 = vmatpush2.msra.mxu0 0.0
    %2049 = vmatprep.subr.mxu0 0.0
    %2050 = vmatpush2.msra.mxu0 0.0
    %2051 = vmatprep.mubr.f32.mxu0 0.0
    %2052 = vmatmul.mubr.f32.gmra.mxu0 %v1985
    %v2053 = vpop.f32.mrf.mxu0
    %v2054 = vadd.f32 0.0, %v2053
    %v2055 = vpop.f32.mrf.mxu0
    %2056 = vdwg.mxu0
    %2058 = vrot.lane.b32.xlu0 %v2054, 16
    %v2059 = vpop.permute.xlu0 %2058
    %2061 = vst.msk [vmem:[#allocation2 + $0x8] sm:$0xff] %vm571, %v2059
    %v2062 = vld [vmem:[#allocation2] sm:$0xff]
    %v2063 = vld [vmem:[#allocation2 + $0x8] sm:$0xff]
    %s2064 = scalar_lea.vmem %s4, 32
    %v2065 = vld [vmem:[%s2064] sm:$0xff]
    %v2066 = vld [vmem:[%s2064 + $0x8] sm:$0xff]
    %v2067 = vld [vmem:[%s2064 + $0x10] sm:$0xff]
    %v2068 = vld [vmem:[%s2064 + $0x18] sm:$0xff]
    %s2069 = scalar_lea.vmem %s5, 1
    %v2070 = vld [vmem:[%s2069] sm:$0x1]
    %v2072 = vlaneseq
    %v2073 = vshrl.u32 %v2072, 7
    %v2074 = vsub.s32 0, %v2073
    %v2075 = vrot.slane %v2070, %v2074
    %v2078 = vsel %vm101, %v2062, 0
    %v2081 = vsel %vm101, %v2063, 0
    %2083 = vmatprep.subr.mxu0 0.0
    %2084 = vmatpush1.msra.mxu0 0.0
    %2085 = vmatprep.subr.mxu0 0.0
    %2086 = vmatpush1.msra.mxu0 0.0
    %2087 = vmatprep.subr.mxu0 0.0
    %2088 = vmatpush1.msra.mxu0 0.0
    %2089 = vmatprep.subr.mxu0 0.0
    %2090 = vmatpush1.msra.mxu0 0.0
    %2091 = vmatprep.subr.mxu0 0.0
    %2092 = vmatpush1.msra.mxu0 0.0
    %2093 = vmatprep.subr.mxu0 0.0
    %2094 = vmatpush1.msra.mxu0 0.0
    %2095 = vmatprep.subr.mxu0 0.0
    %2096 = vmatpush1.msra.mxu0 0.0
    %2097 = vmatprep.subr.mxu0 0.0
    %2098 = vmatpush1.msra.mxu0 0.0
    %2099 = vmatprep.subr.mxu0 0.0
    %2100 = vmatpush1.msra.mxu0 0.0
    %2101 = vmatprep.subr.mxu0 0.0
    %2102 = vmatpush1.msra.mxu0 0.0
    %2103 = vmatprep.subr.mxu0 0.0
    %2104 = vmatpush1.msra.mxu0 0.0
    %2105 = vmatprep.subr.mxu0 0.0
    %2106 = vmatpush1.msra.mxu0 0.0
    %2107 = vmatprep.subr.mxu0 0.0
    %2108 = vmatpush1.msra.mxu0 %v2068
    %2109 = vmatprep.subr.mxu0 0.0
    %2110 = vmatpush1.msra.mxu0 %v2067
    %2111 = vmatprep.subr.mxu0 0.0
    %2112 = vmatpush1.msra.mxu0 %v2066
    %2113 = vmatprep.subr.mxu0 0.0
    %2114 = vmatpush1.msra.mxu0 %v2065
    %2115 = vmatprep.subr.mxu0 0.0
    %2116 = vmatpush2.msra.mxu0 0.0
    %2117 = vmatprep.subr.mxu0 0.0
    %2118 = vmatpush2.msra.mxu0 0.0
    %2119 = vmatprep.subr.mxu0 0.0
    %2120 = vmatpush2.msra.mxu0 0.0
    %2121 = vmatprep.subr.mxu0 0.0
    %2122 = vmatpush2.msra.mxu0 0.0
    %2123 = vmatprep.subr.mxu0 0.0
    %2124 = vmatpush2.msra.mxu0 0.0
    %2125 = vmatprep.subr.mxu0 0.0
    %2126 = vmatpush2.msra.mxu0 0.0
    %2127 = vmatprep.subr.mxu0 0.0
    %2128 = vmatpush2.msra.mxu0 0.0
    %2129 = vmatprep.subr.mxu0 0.0
    %2130 = vmatpush2.msra.mxu0 0.0
    %2131 = vmatprep.subr.mxu0 0.0
    %2132 = vmatpush2.msra.mxu0 0.0
    %2133 = vmatprep.subr.mxu0 0.0
    %2134 = vmatpush2.msra.mxu0 0.0
    %2135 = vmatprep.subr.mxu0 0.0
    %2136 = vmatpush2.msra.mxu0 0.0
    %2137 = vmatprep.subr.mxu0 0.0
    %2138 = vmatpush2.msra.mxu0 0.0
    %2139 = vmatprep.subr.mxu0 0.0
    %2140 = vmatpush2.msra.mxu0 0.0
    %2141 = vmatprep.subr.mxu0 0.0
    %2142 = vmatpush2.msra.mxu0 0.0
    %2143 = vmatprep.subr.mxu0 0.0
    %2144 = vmatpush2.msra.mxu0 0.0
    %2145 = vmatprep.subr.mxu0 0.0
    %2146 = vmatpush2.msra.mxu0 0.0
    %2147 = vmatprep.mubr.f32.mxu0 0.0
    %2148 = vmatmul.mubr.f32.gmra.mxu0 %v2078
    %v2149 = vpop.f32.mrf.mxu0
    %v2150 = vadd.f32 %v2075, %v2149
    %v2151 = vpop.f32.mrf.mxu0
    %2152 = vmatprep.mubr.f32.mxu0 0.0
    %2153 = vmatmul.mubr.f32.gmra.mxu0 %v2081
    %v2154 = vpop.f32.mrf.mxu0
    %v2155 = vadd.f32 %v2075, %v2154
    %v2156 = vpop.f32.mrf.mxu0
    %2157 = vdwg.mxu0
    %v2158 = vadd.f32 %v1250, %v2150
    %v2159 = vadd.f32 %v1251, %v2155
    %s2160 = scalar_lea.vmem %s6, 1
    %v2161 = vld [vmem:[%s2160] sm:$0x1]
    %s2162 = scalar_lea.vmem %s7, 1
    %v2163 = vld [vmem:[%s2162] sm:$0x1]
    %v2164 = vsel %vm101, %v2158, 0.0
    %2165 = vadd.xlane.f32.xlu0 %v2164
    %v2166 = vpop.xlane.xlu0 %2165
    %v2167 = vsel %vm101, %v2159, 0.0
    %2168 = vadd.xlane.f32.xlu0 %v2167
    %v2169 = vpop.xlane.xlu0 %2168
    %v2170 = vmul.f32 %v2166, %v108
    %v2171 = vmul.f32 %v2169, %v108
    %v2172 = vsub.f32 %v2158, %v2170
    %v2173 = vsub.f32 %v2159, %v2171
    %v2174 = vmul.f32 %v2172, %v2172
    %v2175 = vmul.f32 %v2173, %v2173
    %v2176 = vsel %vm101, %v2174, 0.0
    %2177 = vadd.xlane.f32.xlu0 %v2176
    %v2178 = vpop.xlane.xlu0 %2177
    %v2179 = vsel %vm101, %v2175, 0.0
    %2180 = vadd.xlane.f32.xlu0 %v2179
    %v2181 = vpop.xlane.xlu0 %2180
    %v2182 = vmul.f32 %v2178, %v108
    %v2183 = vmul.f32 %v2181, %v108
    %v2184 = vadd.f32 %v2182, 1e-05
    %v2185 = vadd.f32 %v2183, 1e-05
    %v2186 = vrsqrt.pop %v2184
    %v2187 = vrsqrt.pop %v2185
    %v2188 = vmul.f32 %v2172, %v2186
    %v2189 = vmul.f32 %v2173, %v2187
    %v2191 = vlaneseq
    %v2192 = vshrl.u32 %v2191, 7
    %v2193 = vsub.s32 0, %v2192
    %v2194 = vrot.slane %v2161, %v2193
    %v2196 = vmul.f32 %v2194, %v2188
    %v2197 = vmul.f32 %v2194, %v2189
    %v2199 = vlaneseq
    %v2200 = vshrl.u32 %v2199, 7
    %v2201 = vsub.s32 0, %v2200
    %v2202 = vrot.slane %v2163, %v2201
    %v2204 = vadd.f32 %v2196, %v2202
    %v2205 = vadd.f32 %v2197, %v2202
    %s2206 = scalar_lea.vmem %s8, 32
    %v2207 = vld [vmem:[%s2206] sm:$0xff]
    %v2208 = vld [vmem:[%s2206 + $0x8] sm:$0xff]
    %v2209 = vld [vmem:[%s2206 + $0x10] sm:$0xff]
    %v2210 = vld [vmem:[%s2206 + $0x18] sm:$0xff]
    %s2211 = scalar_lea.vmem %s9, 1
    %v2212 = vld [vmem:[%s2211] sm:$0x1]
    %v2214 = vlaneseq
    %v2215 = vshrl.u32 %v2214, 7
    %v2216 = vsub.s32 0, %v2215
    %v2217 = vrot.slane %v2212, %v2216
    %v2220 = vsel %vm101, %v2204, 0
    %v2223 = vsel %vm101, %v2205, 0
    %2225 = vmatprep.subr.mxu0 0.0
    %2226 = vmatpush1.msra.mxu0 0.0
    %2227 = vmatprep.subr.mxu0 0.0
    %2228 = vmatpush1.msra.mxu0 0.0
    %2229 = vmatprep.subr.mxu0 0.0
    %2230 = vmatpush1.msra.mxu0 0.0
    %2231 = vmatprep.subr.mxu0 0.0
    %2232 = vmatpush1.msra.mxu0 0.0
    %2233 = vmatprep.subr.mxu0 0.0
    %2234 = vmatpush1.msra.mxu0 0.0
    %2235 = vmatprep.subr.mxu0 0.0
    %2236 = vmatpush1.msra.mxu0 0.0
    %2237 = vmatprep.subr.mxu0 0.0
    %2238 = vmatpush1.msra.mxu0 0.0
    %2239 = vmatprep.subr.mxu0 0.0
    %2240 = vmatpush1.msra.mxu0 0.0
    %2241 = vmatprep.subr.mxu0 0.0
    %2242 = vmatpush1.msra.mxu0 0.0
    %2243 = vmatprep.subr.mxu0 0.0
    %2244 = vmatpush1.msra.mxu0 0.0
    %2245 = vmatprep.subr.mxu0 0.0
    %2246 = vmatpush1.msra.mxu0 0.0
    %2247 = vmatprep.subr.mxu0 0.0
    %2248 = vmatpush1.msra.mxu0 0.0
    %2249 = vmatprep.subr.mxu0 0.0
    %2250 = vmatpush1.msra.mxu0 %v2210
    %2251 = vmatprep.subr.mxu0 0.0
    %2252 = vmatpush1.msra.mxu0 %v2209
    %2253 = vmatprep.subr.mxu0 0.0
    %2254 = vmatpush1.msra.mxu0 %v2208
    %2255 = vmatprep.subr.mxu0 0.0
    %2256 = vmatpush1.msra.mxu0 %v2207
    %2257 = vmatprep.subr.mxu0 0.0
    %2258 = vmatpush2.msra.mxu0 0.0
    %2259 = vmatprep.subr.mxu0 0.0
    %2260 = vmatpush2.msra.mxu0 0.0
    %2261 = vmatprep.subr.mxu0 0.0
    %2262 = vmatpush2.msra.mxu0 0.0
    %2263 = vmatprep.subr.mxu0 0.0
    %2264 = vmatpush2.msra.mxu0 0.0
    %2265 = vmatprep.subr.mxu0 0.0
    %2266 = vmatpush2.msra.mxu0 0.0
    %2267 = vmatprep.subr.mxu0 0.0
    %2268 = vmatpush2.msra.mxu0 0.0
    %2269 = vmatprep.subr.mxu0 0.0
    %2270 = vmatpush2.msra.mxu0 0.0
    %2271 = vmatprep.subr.mxu0 0.0
    %2272 = vmatpush2.msra.mxu0 0.0
    %2273 = vmatprep.subr.mxu0 0.0
    %2274 = vmatpush2.msra.mxu0 0.0
    %2275 = vmatprep.subr.mxu0 0.0
    %2276 = vmatpush2.msra.mxu0 0.0
    %2277 = vmatprep.subr.mxu0 0.0
    %2278 = vmatpush2.msra.mxu0 0.0
    %2279 = vmatprep.subr.mxu0 0.0
    %2280 = vmatpush2.msra.mxu0 0.0
    %2281 = vmatprep.subr.mxu0 0.0
    %2282 = vmatpush2.msra.mxu0 0.0
    %2283 = vmatprep.subr.mxu0 0.0
    %2284 = vmatpush2.msra.mxu0 0.0
    %2285 = vmatprep.subr.mxu0 0.0
    %2286 = vmatpush2.msra.mxu0 0.0
    %2287 = vmatprep.subr.mxu0 0.0
    %2288 = vmatpush2.msra.mxu0 0.0
    %2289 = vmatprep.mubr.f32.mxu0 0.0
    %2290 = vmatmul.mubr.f32.gmra.mxu0 %v2220
    %v2291 = vpop.f32.mrf.mxu0
    %v2292 = vadd.f32 %v2217, %v2291
    %v2293 = vpop.f32.mrf.mxu0
    %2294 = vmatprep.mubr.f32.mxu0 0.0
    %2295 = vmatmul.mubr.f32.gmra.mxu0 %v2223
    %v2296 = vpop.f32.mrf.mxu0
    %v2297 = vadd.f32 %v2217, %v2296
    %v2298 = vpop.f32.mrf.mxu0
    %2299 = vdwg.mxu0
    %v2300 = vmul.f32 %v2292, 0.5
    %v2301 = vmul.f32 %v2297, 0.5
    %v2302 = vmul.f32 %v2292, 0.70710677
    %v2303 = vmul.f32 %v2297, 0.70710677
    %v2304 = verf.f32.pop %v2302
    %v2305 = verf.f32.pop %v2303
    %v2306 = vadd.f32 %v2304, 1.0
    %v2307 = vadd.f32 %v2305, 1.0
    %v2308 = vmul.f32 %v2300, %v2306
    %v2309 = vmul.f32 %v2301, %v2307
    %s2310 = scalar_lea.vmem %s10, 64
    %v2311 = vld [vmem:[%s2310] sm:$0xff]
    %v2312 = vld [vmem:[%s2310 + $0x8] sm:$0xff]
    %v2313 = vld [vmem:[%s2310 + $0x10] sm:$0xff]
    %v2314 = vld [vmem:[%s2310 + $0x18] sm:$0xff]
    %v2315 = vld [vmem:[%s2310 + $0x20] sm:$0xff]
    %v2316 = vld [vmem:[%s2310 + $0x28] sm:$0xff]
    %v2317 = vld [vmem:[%s2310 + $0x30] sm:$0xff]
    %v2318 = vld [vmem:[%s2310 + $0x38] sm:$0xff]
    %s2319 = scalar_lea.vmem %s11, 1
    %v2320 = vld [vmem:[%s2319] sm:$0x1]
    %v2322 = vlaneseq
    %v2323 = vshrl.u32 %v2322, 7
    %v2324 = vsub.s32 0, %v2323
    %v2325 = vrot.slane %v2320, %v2324
    %v2328 = vsel %vm1168, %v2308, 0
    %v2331 = vsel %vm1168, %v2309, 0
    %2333 = vmatprep.subr.mxu0 0.0
    %2334 = vmatpush1.msra.mxu0 0.0
    %2335 = vmatprep.subr.mxu0 0.0
    %2336 = vmatpush1.msra.mxu0 0.0
    %2337 = vmatprep.subr.mxu0 0.0
    %2338 = vmatpush1.msra.mxu0 0.0
    %2339 = vmatprep.subr.mxu0 0.0
    %2340 = vmatpush1.msra.mxu0 0.0
    %2341 = vmatprep.subr.mxu0 0.0
    %2342 = vmatpush1.msra.mxu0 0.0
    %2343 = vmatprep.subr.mxu0 0.0
    %2344 = vmatpush1.msra.mxu0 0.0
    %2345 = vmatprep.subr.mxu0 0.0
    %2346 = vmatpush1.msra.mxu0 0.0
    %2347 = vmatprep.subr.mxu0 0.0
    %2348 = vmatpush1.msra.mxu0 0.0
    %2349 = vmatprep.subr.mxu0 0.0
    %2350 = vmatpush1.msra.mxu0 %v2318
    %2351 = vmatprep.subr.mxu0 0.0
    %2352 = vmatpush1.msra.mxu0 %v2317
    %2353 = vmatprep.subr.mxu0 0.0
    %2354 = vmatpush1.msra.mxu0 %v2316
    %2355 = vmatprep.subr.mxu0 0.0
    %2356 = vmatpush1.msra.mxu0 %v2315
    %2357 = vmatprep.subr.mxu0 0.0
    %2358 = vmatpush1.msra.mxu0 %v2314
    %2359 = vmatprep.subr.mxu0 0.0
    %2360 = vmatpush1.msra.mxu0 %v2313
    %2361 = vmatprep.subr.mxu0 0.0
    %2362 = vmatpush1.msra.mxu0 %v2312
    %2363 = vmatprep.subr.mxu0 0.0
    %2364 = vmatpush1.msra.mxu0 %v2311
    %2365 = vmatprep.subr.mxu0 0.0
    %2366 = vmatpush2.msra.mxu0 0.0
    %2367 = vmatprep.subr.mxu0 0.0
    %2368 = vmatpush2.msra.mxu0 0.0
    %2369 = vmatprep.subr.mxu0 0.0
    %2370 = vmatpush2.msra.mxu0 0.0
    %2371 = vmatprep.subr.mxu0 0.0
    %2372 = vmatpush2.msra.mxu0 0.0
    %2373 = vmatprep.subr.mxu0 0.0
    %2374 = vmatpush2.msra.mxu0 0.0
    %2375 = vmatprep.subr.mxu0 0.0
    %2376 = vmatpush2.msra.mxu0 0.0
    %2377 = vmatprep.subr.mxu0 0.0
    %2378 = vmatpush2.msra.mxu0 0.0
    %2379 = vmatprep.subr.mxu0 0.0
    %2380 = vmatpush2.msra.mxu0 0.0
    %2381 = vmatprep.subr.mxu0 0.0
    %2382 = vmatpush2.msra.mxu0 0.0
    %2383 = vmatprep.subr.mxu0 0.0
    %2384 = vmatpush2.msra.mxu0 0.0
    %2385 = vmatprep.subr.mxu0 0.0
    %2386 = vmatpush2.msra.mxu0 0.0
    %2387 = vmatprep.subr.mxu0 0.0
    %2388 = vmatpush2.msra.mxu0 0.0
    %2389 = vmatprep.subr.mxu0 0.0
    %2390 = vmatpush2.msra.mxu0 0.0
    %2391 = vmatprep.subr.mxu0 0.0
    %2392 = vmatpush2.msra.mxu0 0.0
    %2393 = vmatprep.subr.mxu0 0.0
    %2394 = vmatpush2.msra.mxu0 0.0
    %2395 = vmatprep.subr.mxu0 0.0
    %2396 = vmatpush2.msra.mxu0 0.0
    %2397 = vmatprep.mubr.f32.mxu0 0.0
    %2398 = vmatmul.mubr.f32.gmra.mxu0 %v2328
    %v2399 = vpop.f32.mrf.mxu0
    %v2400 = vadd.f32 %v2325, %v2399
    %v2401 = vpop.f32.mrf.mxu0
    %2402 = vmatprep.mubr.f32.mxu0 0.0
    %2403 = vmatmul.mubr.f32.gmra.mxu0 %v2331
    %v2404 = vpop.f32.mrf.mxu0
    %v2405 = vadd.f32 %v2325, %v2404
    %v2406 = vpop.f32.mrf.mxu0
    %2407 = vdwg.mxu0
    %v2408 = vadd.f32 %v2158, %v2400
    %v2409 = vadd.f32 %v2159, %v2405
    %v2410 = vld [vmem:[%s12] sm:$0x1]
    %v2411 = vld [vmem:[%s13] sm:$0x1]
    %v2412 = vsel %vm101, %v2408, 0.0
    %2413 = vadd.xlane.f32.xlu0 %v2412
    %v2414 = vpop.xlane.xlu0 %2413
    %v2415 = vsel %vm101, %v2409, 0.0
    %2416 = vadd.xlane.f32.xlu0 %v2415
    %v2417 = vpop.xlane.xlu0 %2416
    %v2418 = vmul.f32 %v2414, %v108
    %v2419 = vmul.f32 %v2417, %v108
    %v2420 = vsub.f32 %v2408, %v2418
    %v2421 = vsub.f32 %v2409, %v2419
    %v2422 = vmul.f32 %v2420, %v2420
    %v2423 = vmul.f32 %v2421, %v2421
    %v2424 = vsel %vm101, %v2422, 0.0
    %2425 = vadd.xlane.f32.xlu0 %v2424
    %v2426 = vpop.xlane.xlu0 %2425
    %v2427 = vsel %vm101, %v2423, 0.0
    %2428 = vadd.xlane.f32.xlu0 %v2427
    %v2429 = vpop.xlane.xlu0 %2428
    %v2430 = vmul.f32 %v2426, %v108
    %v2431 = vmul.f32 %v2429, %v108
    %v2432 = vadd.f32 %v2430, 1e-05
    %v2433 = vadd.f32 %v2431, 1e-05
    %v2434 = vrsqrt.pop %v2432
    %v2435 = vrsqrt.pop %v2433
    %v2436 = vmul.f32 %v2420, %v2434
    %v2437 = vmul.f32 %v2421, %v2435
    %v2439 = vlaneseq
    %v2440 = vshrl.u32 %v2439, 7
    %v2441 = vsub.s32 0, %v2440
    %v2442 = vrot.slane %v2410, %v2441
    %v2444 = vmul.f32 %v2442, %v2436
    %v2445 = vmul.f32 %v2442, %v2437
    %v2447 = vlaneseq
    %v2448 = vshrl.u32 %v2447, 7
    %v2449 = vsub.s32 0, %v2448
    %v2450 = vrot.slane %v2411, %v2449
    %v2452 = vadd.f32 %v2444, %v2450
    %v2453 = vadd.f32 %v2445, %v2450
    %v2454 = vld [vmem:[#allocation8] sm:$0xff]
    %v2455 = vld [vmem:[#allocation8 + $0x8] sm:$0xff]
    %v2456 = vld [vmem:[#allocation8 + $0x10] sm:$0xff]
    %v2457 = vld [vmem:[#allocation8 + $0x18] sm:$0xff]
    %v2458 = vld [vmem:[#allocation8 + $0x20] sm:$0xff]
    %v2459 = vld [vmem:[#allocation8 + $0x28] sm:$0xff]
    %v2460 = vld [vmem:[#allocation8 + $0x30] sm:$0xff]
    %v2461 = vld [vmem:[#allocation8 + $0x38] sm:$0xff]
    %v2463 = vsel %vm101, %v2452, 0
    %v2466 = vsel %vm101, %v2453, 0
    %2468 = vmatprep.subr.mxu0 0.0
    %2469 = vmatpush1.msra.mxu0 0.0
    %2470 = vmatprep.subr.mxu0 0.0
    %2471 = vmatpush1.msra.mxu0 0.0
    %2472 = vmatprep.subr.mxu0 0.0
    %2473 = vmatpush1.msra.mxu0 0.0
    %2474 = vmatprep.subr.mxu0 0.0
    %2475 = vmatpush1.msra.mxu0 0.0
    %2476 = vmatprep.subr.mxu0 0.0
    %2477 = vmatpush1.msra.mxu0 0.0
    %2478 = vmatprep.subr.mxu0 0.0
    %2479 = vmatpush1.msra.mxu0 0.0
    %2480 = vmatprep.subr.mxu0 0.0
    %2481 = vmatpush1.msra.mxu0 0.0
    %2482 = vmatprep.subr.mxu0 0.0
    %2483 = vmatpush1.msra.mxu0 0.0
    %2484 = vmatprep.subr.mxu0 0.0
    %2485 = vmatpush1.msra.mxu0 0.0
    %2486 = vmatprep.subr.mxu0 0.0
    %2487 = vmatpush1.msra.mxu0 0.0
    %2488 = vmatprep.subr.mxu0 0.0
    %2489 = vmatpush1.msra.mxu0 0.0
    %2490 = vmatprep.subr.mxu0 0.0
    %2491 = vmatpush1.msra.mxu0 0.0
    %2492 = vmatprep.subr.mxu0 %v2461
    %2493 = vmatpush1.msra.mxu0 %v2460
    %2494 = vmatprep.subr.mxu0 %v2459
    %2495 = vmatpush1.msra.mxu0 %v2458
    %2496 = vmatprep.subr.mxu0 %v2457
    %2497 = vmatpush1.msra.mxu0 %v2456
    %2498 = vmatprep.subr.mxu0 %v2455
    %2499 = vmatpush1.msra.mxu0 %v2454
    %2500 = vmatprep.subr.mxu0 0.0
    %2501 = vmatpush2.msra.mxu0 0.0
    %2502 = vmatprep.subr.mxu0 0.0
    %2503 = vmatpush2.msra.mxu0 0.0
    %2504 = vmatprep.subr.mxu0 0.0
    %2505 = vmatpush2.msra.mxu0 0.0
    %2506 = vmatprep.subr.mxu0 0.0
    %2507 = vmatpush2.msra.mxu0 0.0
    %2508 = vmatprep.subr.mxu0 0.0
    %2509 = vmatpush2.msra.mxu0 0.0
    %2510 = vmatprep.subr.mxu0 0.0
    %2511 = vmatpush2.msra.mxu0 0.0
    %2512 = vmatprep.subr.mxu0 0.0
    %2513 = vmatpush2.msra.mxu0 0.0
    %2514 = vmatprep.subr.mxu0 0.0
    %2515 = vmatpush2.msra.mxu0 0.0
    %2516 = vmatprep.subr.mxu0 0.0
    %2517 = vmatpush2.msra.mxu0 0.0
    %2518 = vmatprep.subr.mxu0 0.0
    %2519 = vmatpush2.msra.mxu0 0.0
    %2520 = vmatprep.subr.mxu0 0.0
    %2521 = vmatpush2.msra.mxu0 0.0
    %2522 = vmatprep.subr.mxu0 0.0
    %2523 = vmatpush2.msra.mxu0 0.0
    %2524 = vmatprep.subr.mxu0 0.0
    %2525 = vmatpush2.msra.mxu0 0.0
    %2526 = vmatprep.subr.mxu0 0.0
    %2527 = vmatpush2.msra.mxu0 0.0
    %2528 = vmatprep.subr.mxu0 0.0
    %2529 = vmatpush2.msra.mxu0 0.0
    %2530 = vmatprep.subr.mxu0 0.0
    %2531 = vmatpush2.msra.mxu0 0.0
    %2532 = vmatprep.mubr.f32.mxu0 0.0
    %2533 = vmatmul.mubr.f32.gmra.mxu0 %v2463
    %v2534 = vpop.f32.mrf.mxu0
    %v2535 = vadd.f32 0.0, %v2534
    %v2536 = vpop.f32.mrf.mxu0
    %v2537 = vadd.f32 0.0, %v2536
    %2538 = vmatprep.mubr.f32.mxu0 0.0
    %2539 = vmatmul.mubr.f32.gmra.mxu0 %v2466
    %v2540 = vpop.f32.mrf.mxu0
    %v2541 = vadd.f32 0.0, %v2540
    %v2542 = vpop.f32.mrf.mxu0
    %v2543 = vadd.f32 0.0, %v2542
    %2544 = vdwg.mxu0
    %2545 = vst [vmem:[#allocation9] sm:$0xff] %v2535
    %2546 = vst [vmem:[#allocation9 + $0x8] sm:$0xff] %v2537
    %2547 = vst [vmem:[#allocation9 + $0x10] sm:$0xff] %v2541
    %2548 = vst [vmem:[#allocation9 + $0x18] sm:$0xff] %v2543
    // Predicated region
    $region74: #{tpu_custom_call.1} parent=1 // pred_check
      _
    $region75: #{tpu_custom_call.1} parent=1 // pred_check_branch
      %2550 = sbr.rel (0) target = $region77
    $region76: #{tpu_custom_call.1} parent=1 // pred_region
      %s2552 = ssub.s32 512, 512
      %2553 = vsyncadd [#allocation5], %s2552
      %s2554 = sshll.u32 [#allocation9], 4
      %s2555 = int_to_ptr.vmem [resolvable:$true] %s2554
      %2560 = dma.vmem_to_hbm [thread:$0]  %s2555, 512, %s15, [#allocation5], 256, 256, 16
    $region77: #{tpu_custom_call.1} parent=1 // pred_fallthru
      _
    // Predicated region
    $region78: #{tpu_custom_call.1} parent=1 // pred_check
      _
    $region79: #{tpu_custom_call.1} parent=1 // pred_check_branch
      %2562 = sbr.rel (0) target = $region81
    $region80: #{tpu_custom_call.1} parent=1 // pred_region
      %2563 = dma.done [#allocation5], 512
    $region81: #{tpu_custom_call.1} parent=1 // pred_fallthru
      _
    %2564 = vsyncpa [#allocation4], 1
    %2565 = vsyncpa [#allocation7], 1
    %2566 = vsyncpa [#allocation5], 1

</llo_original>
